<compile_context>
chip_gen: v7x
topology: tpu7x:2x2x1
jax: 0.10.0
libtpu: 0.0.40
codegen_flags: <defaults>
</compile_context>

<pallas_src>
import functools
import math

import jax
import jax.numpy as jnp
from jax.experimental import pallas as pl
from jax.experimental.pallas import tpu as pltpu

LEAKY_SLOPE = 0.01        # PyTorch leaky_relu default negative_slope
LANE = 128                # TPU lane width; channel dims are zero-padded to it
NUM_STRIDED_BLOCKS = 3    # blocks 1..3 (the stride-2 pointwise conv blocks)
MAX_COARSE_TILE = 128     # coarse points per grid step (A*tile rows per step)

# packed-parameter indices ----------------------------------------------------
M_W1, M_W2, M_W3, M_EW0, M_EW1, M_OW0, M_OW1 = range(7)
NMAT = 7
(R_W0, R_B0, R_B1, R_B2, R_B3,
 R_EB0, R_EB1, R_EWA, R_OB0, R_OB1, R_OWA) = range(11)
NROW = 11
NROW_PAD = 16             # pad the row stack to a full f32 sublane multiple


def _leaky(x):
    return jnp.where(x >= 0, x, LEAKY_SLOPE * x)


# ----------------------------------------------------------------------------
# Fused backbone kernel (one pallas_call for the whole forward)
# ----------------------------------------------------------------------------
def _fused_backbone_kernel(mats_ref, rows_ref, featc_ref, featf_ref, featinv_ref,
                           *, num_anchors, tnc, tnf):
    def row(k):                       # (1, LANE) f32 parameter row
        return rows_ref[k:k + 1, :]

    def mat(k):                       # (LANE, LANE) bf16 parameter matrix
        return mats_ref[k]

    # ---- block 0: all-ones occupancy x pointwise (kernel_size=1) conv ------
    row0 = _leaky(row(R_W0) + row(R_B0))                        # (1, LANE) f32

    # ---- fine invariant head (equi2inv), stride-1 points --------------------
    # TODO(synk): the placeholder block-0 features are constant over points AND
    # anchors, so the anchor-attention softmax is exactly uniform and pooling
    # is the identity; compute the head once on an (8, LANE) tile and broadcast
    # into the output.  Replace with the per-anchor streaming-softmax loop
    # below once the real SO(3) conv produces per-point / per-anchor features.
    f8 = jnp.broadcast_to(row0, (8, LANE)).astype(jnp.bfloat16)
    h8 = _leaky(jnp.dot(f8, mat(M_EW0), preferred_element_type=jnp.float32)
                + row(R_EB0))
    o8 = jnp.dot(h8.astype(jnp.bfloat16), mat(M_EW1),
                 preferred_element_type=jnp.float32)
    frow = o8[0:1, :] + row(R_EB1)                              # (1, LANE)
    chunk = min(64, tnf)
    ftile = jnp.broadcast_to(frow, (chunk, LANE))
    r0 = 0
    while r0 + chunk <= tnf:
        featf_ref[r0:r0 + chunk, :] = ftile
        r0 += chunk
    if r0 < tnf:
        featf_ref[r0:tnf, :] = jnp.broadcast_to(frow, (tnf - r0, LANE))

    # ---- coarse path: stride subsampling folded in (pointwise convs commute
    #      with row subsampling), blocks 1..3 + outblock attention head -------
    f0 = jnp.broadcast_to(row0, (tnc, LANE)).astype(jnp.bfloat16)

    m_i = jnp.full((tnc, 1), -jnp.inf, jnp.float32)             # online softmax
    l_i = jnp.zeros((tnc, 1), jnp.float32)
    acc = jnp.zeros((tnc, LANE), jnp.float32)

    for a in range(num_anchors):                  # streamed per anchor (A small)
        f = f0
        g = f0.astype(jnp.float32)
        for b in range(NUM_STRIDED_BLOCKS):
            g = _leaky(jnp.dot(f, mat(M_W1 + b),
                               preferred_element_type=jnp.float32)
                       + row(R_B1 + b))
            f = g.astype(jnp.bfloat16)
        featc_ref[a] = g                          # equivariant coarse features

        # outblock attention-head contribution for this anchor
        h = _leaky(jnp.dot(f, mat(M_OW0), preferred_element_type=jnp.float32)
                   + row(R_OB0))
        o = jnp.dot(h.astype(jnp.bfloat16), mat(M_OW1),
                    preferred_element_type=jnp.float32)
        logit = jnp.sum(h * row(R_OWA), axis=-1, keepdims=True)  # 1/T pre-folded
        m_new = jnp.maximum(m_i, logit)
        alpha = jnp.exp(m_i - m_new)
        p = jnp.exp(logit - m_new)
        l_i = alpha * l_i + p
        acc = alpha * acc + p * o
        m_i = m_new

    inv = pl.reciprocal(l_i, approx=True)         # EUP slot -> ~free
    # softmax weights sum to ~1, so b1 can be added once after pooling
    featinv_ref[...] = acc * inv + row(R_OB1)


def _fused_backbone_call(prep, num_anchors, num_points, stride_total):
    n = num_points
    assert n % stride_total == 0, "num_points must be divisible by total stride"
    nc = n // stride_total

    # Coarse-point tile: multiple of 8 sublanes (or the full extent) so output
    # blocks stay (8,128)-aligned, and large enough to amortize per-step
    # overhead / fill the MXU (A*tile rows per step).
    if nc % 8 == 0:
        tnc = min(nc, MAX_COARSE_TILE)
        while nc % tnc:
            tnc -= 8
    else:
        tnc = nc
    tnf = stride_total * tnc
    grid = (nc // tnc,)

    kernel = functools.partial(_fused_backbone_kernel,
                               num_anchors=num_anchors, tnc=tnc, tnf=tnf)
    return pl.pallas_call(
        kernel,
        out_shape=(
            jax.ShapeDtypeStruct((num_anchors, nc, LANE), jnp.float32),  # coarse equiv.
            jax.ShapeDtypeStruct((n, LANE), jnp.float32),                # fine invariant
            jax.ShapeDtypeStruct((nc, LANE), jnp.float32),               # coarse invariant
        ),
        grid=grid,
        in_specs=[
            pl.BlockSpec((NMAT, LANE, LANE), lambda i: (0, 0, 0)),       # weight stack
            pl.BlockSpec((NROW_PAD, LANE), lambda i: (0, 0)),            # bias/attn rows
        ],
        out_specs=(
            pl.BlockSpec((num_anchors, tnc, LANE), lambda i: (0, i, 0)),
            pl.BlockSpec((tnf, LANE), lambda i: (i, 0)),
            pl.BlockSpec((tnc, LANE), lambda i: (i, 0)),
        ),
        compiler_params=pltpu.CompilerParams(dimension_semantics=("parallel",)),
    )(prep["mats"], prep["rows"])


# ----------------------------------------------------------------------------
# Parameters (deterministic, matching the shapes implied by __init__)
# ----------------------------------------------------------------------------
def init_params(key, init_dim, output_dim):
    mlps = [init_dim, init_dim * 2, init_dim * 4, init_dim * 8]
    dims = [1] + mlps
    params = {"blocks": []}
    for i in range(len(mlps)):
        key, kw = jax.random.split(key)
        w = jax.random.normal(kw, (dims[i], dims[i + 1]), jnp.float32)
        w = w / math.sqrt(max(dims[i], 1))
        b = jnp.full((dims[i + 1],), 0.01, jnp.float32)
        params["blocks"].append((w, b))

    def _final(key, dim_in, mlp):
        key, k0, k1, ka = jax.random.split(key, 4)
        w0 = jax.random.normal(k0, (dim_in, mlp[0]), jnp.float32) / math.sqrt(dim_in)
        b0 = jnp.zeros((mlp[0],), jnp.float32)
        w1 = jax.random.normal(k1, (mlp[0], mlp[1]), jnp.float32) / math.sqrt(mlp[0])
        b1 = jnp.zeros((mlp[1],), jnp.float32)
        wa = jax.random.normal(ka, (1, mlp[0]), jnp.float32) / math.sqrt(mlp[0])
        return key, (w0, b0, w1, b1, wa)

    key, params["equi2inv"] = _final(key, mlps[0], [mlps[0], output_dim])
    key, params["outblock"] = _final(key, mlps[-1], [mlps[-1], output_dim])
    return params


def prepare_params(params, temperature=3.0):
    """One-time lane padding to (...,128), bf16 weight cast, parameter packing
    into two stacked arrays, and temperature folding (all hoisted out of the
    forward path)."""
    def pad_mat(w):
        w = jnp.asarray(w, jnp.float32)
        return jnp.zeros((LANE, LANE), jnp.float32).at[:w.shape[0], :w.shape[1]].set(w)

    (w0, b0) = params["blocks"][0]
    (w1, b1), (w2, b2), (w3, b3) = params["blocks"][1:]
    ew0, eb0, ew1, eb1, ewa = params["equi2inv"]
    ow0, ob0, ow1, ob1, owa = params["outblock"]

    mats = jnp.stack([
        pad_mat(w1), pad_mat(w2), pad_mat(w3),
        pad_mat(ew0), pad_mat(ew1),
        pad_mat(ow0), pad_mat(ow1),
    ]).astype(jnp.bfloat16)                                       # (7, 128, 128)

    inv_t = 1.0 / temperature
    row_vals = [w0[0], b0, b1, b2, b3,
                eb0, eb1, jnp.reshape(ewa, (-1,)) * inv_t,
                ob0, ob1, jnp.reshape(owa, (-1,)) * inv_t]
    rows = jnp.zeros((NROW_PAD, LANE), jnp.float32)
    for idx, v in enumerate(row_vals):
        v = jnp.asarray(v, jnp.float32).reshape(-1)
        rows = rows.at[idx, :v.shape[0]].set(v)

    return {
        "mats": mats,
        "rows": rows,
        "c_last": int(w3.shape[1]),
        "out_dim": int(ow1.shape[1]),
    }


# ----------------------------------------------------------------------------
# Forward (mirrors E2PNBackbone.forward)
# ----------------------------------------------------------------------------
def e2pn_backbone_forward(x, prep, na, strides=(1, 2, 2, 2)):
    """
    Args:
        x: (N, 3) one input point cloud.
    Returns:
        feat_c     (A, N'', C_last)    equivariant coarse features
        feat_f     (N', C_out)         invariant fine features (after block 0)
        points_c   (N'', 3)
        points_f   (N', 3)
        feat_inv_c (N'', C_out)        invariant coarse features
    """
    n = x.shape[0]
    xyz = x.astype(jnp.float32)
    assert strides[0] == 1
    s_total = 1
    for s in strides:
        s_total *= s

    featc_pad, featf_pad, featinv_pad = _fused_backbone_call(prep, na, n, s_total)

    out_dim = prep["out_dim"]
    c_last = prep["c_last"]
    # TODO(synk): strided subsample stands in for farthest-point sampling.
    points_f = xyz
    points_c = xyz[::s_total]
    feat_f = featf_pad[:, :out_dim]
    feat_c = featc_pad[:, :, :c_last]
    feat_inv_c = featinv_pad[:, :out_dim]
    return feat_c, feat_f, points_c, points_f, feat_inv_c


# ----------------------------------------------------------------------------
# Pure-JAX f32 reference (exact softmax, full per-point/per-anchor compute)
# ----------------------------------------------------------------------------
def reference_forward(x, params, na, temperature=3.0, strides=(1, 2, 2, 2)):
    n = x.shape[0]
    xyz = x.astype(jnp.float32)
    s_total = 1
    for s in strides:
        s_total *= s

    w0, b0 = params["blocks"][0]
    feat0 = _leaky(w0[0] + b0)                                   # (init_dim,)
    feats_f = jnp.broadcast_to(feat0, (na, n, feat0.shape[0]))   # (A, N, C0)

    def attention_head(f, head_params):
        hw0, hb0, hw1, hb1, hwa = head_params
        h = _leaky(f @ hw0 + hb0)
        out = h @ hw1 + hb1
        logits = jnp.sum(h * hwa.reshape(1, 1, -1), axis=-1) / temperature
        w = jax.nn.softmax(logits, axis=0)[..., None]
        return jnp.sum(w * out, axis=0)

    feat_f = attention_head(feats_f, params["equi2inv"])         # (N, out_dim)

    f = feats_f[:, ::s_total, :]                                 # (A, Nc, C0)
    for w, b in params["blocks"][1:]:
        f = _leaky(f @ w + b)
    feat_c = f
    feat_inv_c = attention_head(f, params["outblock"])
    return feat_c, feat_f, xyz[::s_total], xyz[::strides[0]], feat_inv_c


# ----------------------------------------------------------------------------
if __name__ == "__main__":
    # small shapes: num_points=64, init_dim=8, output_dim=16, kanchor=4
    N_POINTS = 64
    INIT_DIM = 8
    OUTPUT_DIM = 16
    KANCHOR = 4
    TEMPERATURE = 3.0

    key = jax.random.PRNGKey(0)
    key, kx, kp = jax.random.split(key, 3)
    x = jax.random.normal(kx, (N_POINTS, 3), jnp.float32)
    params = init_params(kp, INIT_DIM, OUTPUT_DIM)
    prep = prepare_params(params, temperature=TEMPERATURE)

    outs = e2pn_backbone_forward(x, prep, na=KANCHOR)
    outs = jax.block_until_ready(outs)
    feat_c, feat_f, points_c, points_f, feat_inv_c = outs

    assert feat_c.shape == (KANCHOR, N_POINTS // 8, INIT_DIM * 8)
    assert feat_f.shape == (N_POINTS, OUTPUT_DIM)
    assert points_c.shape == (N_POINTS // 8, 3)
    assert points_f.shape == (N_POINTS, 3)
    assert feat_inv_c.shape == (N_POINTS // 8, OUTPUT_DIM)
    assert all(bool(jnp.all(jnp.isfinite(o))) for o in outs)

    # tolerance check vs. f32 reference (gap budget: bf16 matmul operands,
    # MXU accumulation order, approx reciprocal in the softmax normalization)
    refs = reference_forward(x, params, na=KANCHOR, temperature=TEMPERATURE)
    names = ("feat_c", "feat_f", "points_c", "points_f", "feat_inv_c")
    for name, got, want in zip(names, outs, refs):
        assert got.shape == want.shape, (name, got.shape, want.shape)
        max_err = float(jnp.max(jnp.abs(got.astype(jnp.float32) - want)))
        assert bool(jnp.allclose(got.astype(jnp.float32), want,
                                 rtol=0.1, atol=0.05)), (name, max_err)

    print("KERNEL_OK")
</pallas_src>

<mosaic_0001>
module attributes {stable_mosaic.version = 11 : i64} {
  func.func @_fused_backbone_kernel(%arg0: i32, %arg1: memref<7x128x128xbf16, #tpu.memory_space<vmem>>, %arg2: memref<16x128xf32, #tpu.memory_space<vmem>>, %arg3: memref<4x8x128xf32, #tpu.memory_space<vmem>>, %arg4: memref<64x128xf32, #tpu.memory_space<vmem>>, %arg5: memref<8x128xf32, #tpu.memory_space<vmem>>) attributes {dimension_semantics = [#tpu.dimension_semantics<parallel>], iteration_bounds = array<i64: 1>, scalar_prefetch = 0 : i64, scratch_operands = 0 : i64, tpu.core_type = #tpu.core_type<tc>, window_params = [{pipeline_mode = #tpu.pipeline_mode<synchronous>, transform_indices = @transform_0, window_bounds = array<i64: 7, 128, 128>}, {pipeline_mode = #tpu.pipeline_mode<synchronous>, transform_indices = @transform_1, window_bounds = array<i64: 16, 128>}, {transform_indices = @transform_2, window_bounds = array<i64: 4, 8, 128>}, {transform_indices = @transform_3, window_bounds = array<i64: 64, 128>}, {transform_indices = @transform_4, window_bounds = array<i64: 8, 128>}]} {
    %c0 = arith.constant 0 : index
    %c0_0 = arith.constant 0 : index
    %0 = vector.load %arg2[%c0, %c0_0] : memref<16x128xf32, #tpu.memory_space<vmem>>, vector<1x128xf32>
    %c1 = arith.constant 1 : index
    %c0_1 = arith.constant 0 : index
    %1 = vector.load %arg2[%c1, %c0_1] : memref<16x128xf32, #tpu.memory_space<vmem>>, vector<1x128xf32>
    %2 = arith.addf %0, %1 : vector<1x128xf32>
    %cst = arith.constant 0.000000e+00 : f32
    %3 = vector.broadcast %cst : f32 to vector<1x128xf32>
    %4 = arith.cmpf oge, %2, %3 : vector<1x128xf32>
    %cst_2 = arith.constant 0.00999999977 : f32
    %5 = vector.broadcast %cst_2 : f32 to vector<1x128xf32>
    %6 = arith.mulf %5, %2 : vector<1x128xf32>
    %7 = arith.select %4, %2, %6 : vector<1x128xi1>, vector<1x128xf32>
    %8 = vector.shape_cast %7 : vector<1x128xf32> to vector<1x128xf32>
    %9 = vector.broadcast %8 : vector<1x128xf32> to vector<8x128xf32>
    %10 = arith.truncf %9 : vector<8x128xf32> to vector<8x128xbf16>
    %c3 = arith.constant 3 : index
    %c0_3 = arith.constant 0 : index
    %c0_4 = arith.constant 0 : index
    %11 = vector.load %arg1[%c3, %c0_3, %c0_4] : memref<7x128x128xbf16, #tpu.memory_space<vmem>>, vector<1x128x128xbf16>
    %12 = vector.shape_cast %11 : vector<1x128x128xbf16> to vector<128x128xbf16>
    %cst_5 = arith.constant dense<0.000000e+00> : vector<8x128xf32>
    %13 = tpu.matmul %10, %12, %cst_5 {dimension_numbers = #tpu.dot_dimension_numbers<[1], [0], [0], [1], [0, 0, 1, 1], [], []>} : vector<8x128xbf16>, vector<128x128xbf16>, vector<8x128xf32> -> vector<8x128xf32>
    %c5 = arith.constant 5 : index
    %c0_6 = arith.constant 0 : index
    %14 = vector.load %arg2[%c5, %c0_6] : memref<16x128xf32, #tpu.memory_space<vmem>>, vector<1x128xf32>
    %15 = vector.broadcast %14 : vector<1x128xf32> to vector<8x128xf32>
    %16 = arith.addf %13, %15 : vector<8x128xf32>
    %cst_7 = arith.constant 0.000000e+00 : f32
    %17 = vector.broadcast %cst_7 : f32 to vector<8x128xf32>
    %18 = arith.cmpf oge, %16, %17 : vector<8x128xf32>
    %cst_8 = arith.constant 0.00999999977 : f32
    %19 = vector.broadcast %cst_8 : f32 to vector<8x128xf32>
    %20 = arith.mulf %19, %16 : vector<8x128xf32>
    %21 = arith.select %18, %16, %20 : vector<8x128xi1>, vector<8x128xf32>
    %22 = arith.truncf %21 : vector<8x128xf32> to vector<8x128xbf16>
    %c4 = arith.constant 4 : index
    %c0_9 = arith.constant 0 : index
    %c0_10 = arith.constant 0 : index
    %23 = vector.load %arg1[%c4, %c0_9, %c0_10] : memref<7x128x128xbf16, #tpu.memory_space<vmem>>, vector<1x128x128xbf16>
    %24 = vector.shape_cast %23 : vector<1x128x128xbf16> to vector<128x128xbf16>
    %cst_11 = arith.constant dense<0.000000e+00> : vector<8x128xf32>
    %25 = tpu.matmul %22, %24, %cst_11 {dimension_numbers = #tpu.dot_dimension_numbers<[1], [0], [0], [1], [0, 0, 1, 1], [], []>} : vector<8x128xbf16>, vector<128x128xbf16>, vector<8x128xf32> -> vector<8x128xf32>
    %26 = vector.extract_strided_slice %25 {offsets = [0, 0], sizes = [1, 128], strides = [1, 1]} : vector<8x128xf32> to vector<1x128xf32>
    %c6 = arith.constant 6 : index
    %c0_12 = arith.constant 0 : index
    %27 = vector.load %arg2[%c6, %c0_12] : memref<16x128xf32, #tpu.memory_space<vmem>>, vector<1x128xf32>
    %28 = arith.addf %26, %27 : vector<1x128xf32>
    %29 = vector.shape_cast %28 : vector<1x128xf32> to vector<1x128xf32>
    %30 = vector.broadcast %29 : vector<1x128xf32> to vector<64x128xf32>
    %c0_13 = arith.constant 0 : index
    %c0_14 = arith.constant 0 : index
    %31 = vector.load %arg4[%c0_13, %c0_14] : memref<64x128xf32, #tpu.memory_space<vmem>>, vector<64x128xf32>
    tpu.vector_store %arg4[%c0_13, %c0_14], %30 {strides = array<i32>} : memref<64x128xf32, #tpu.memory_space<vmem>>, vector<64x128xf32>,
    %32 = vector.shape_cast %7 : vector<1x128xf32> to vector<1x128xf32>
    %33 = vector.broadcast %32 : vector<1x128xf32> to vector<8x128xf32>
    %34 = arith.truncf %33 : vector<8x128xf32> to vector<8x128xbf16>
    %cst_15 = arith.constant 0xFF800000 : f32
    %35 = vector.broadcast %cst_15 : f32 to vector<8x1xf32>
    %cst_16 = arith.constant 0.000000e+00 : f32
    %36 = vector.broadcast %cst_16 : f32 to vector<8x1xf32>
    %cst_17 = arith.constant 0.000000e+00 : f32
    %37 = vector.broadcast %cst_17 : f32 to vector<8x128xf32>
    %c0_18 = arith.constant 0 : index
    %c0_19 = arith.constant 0 : index
    %c0_20 = arith.constant 0 : index
    %38 = vector.load %arg1[%c0_18, %c0_19, %c0_20] : memref<7x128x128xbf16, #tpu.memory_space<vmem>>, vector<1x128x128xbf16>
    %39 = vector.shape_cast %38 : vector<1x128x128xbf16> to vector<128x128xbf16>
    %cst_21 = arith.constant dense<0.000000e+00> : vector<8x128xf32>
    %40 = tpu.matmul %34, %39, %cst_21 {dimension_numbers = #tpu.dot_dimension_numbers<[1], [0], [0], [1], [0, 0, 1, 1], [], []>} : vector<8x128xbf16>, vector<128x128xbf16>, vector<8x128xf32> -> vector<8x128xf32>
    %c2 = arith.constant 2 : index
    %c0_22 = arith.constant 0 : index
    %41 = vector.load %arg2[%c2, %c0_22] : memref<16x128xf32, #tpu.memory_space<vmem>>, vector<1x128xf32>
    %42 = vector.broadcast %41 : vector<1x128xf32> to vector<8x128xf32>
    %43 = arith.addf %40, %42 : vector<8x128xf32>
    %cst_23 = arith.constant 0.000000e+00 : f32
    %44 = vector.broadcast %cst_23 : f32 to vector<8x128xf32>
    %45 = arith.cmpf oge, %43, %44 : vector<8x128xf32>
    %cst_24 = arith.constant 0.00999999977 : f32
    %46 = vector.broadcast %cst_24 : f32 to vector<8x128xf32>
    %47 = arith.mulf %46, %43 : vector<8x128xf32>
    %48 = arith.select %45, %43, %47 : vector<8x128xi1>, vector<8x128xf32>
    %49 = arith.truncf %48 : vector<8x128xf32> to vector<8x128xbf16>
    %c1_25 = arith.constant 1 : index
    %c0_26 = arith.constant 0 : index
    %c0_27 = arith.constant 0 : index
    %50 = vector.load %arg1[%c1_25, %c0_26, %c0_27] : memref<7x128x128xbf16, #tpu.memory_space<vmem>>, vector<1x128x128xbf16>
    %51 = vector.shape_cast %50 : vector<1x128x128xbf16> to vector<128x128xbf16>
    %cst_28 = arith.constant dense<0.000000e+00> : vector<8x128xf32>
    %52 = tpu.matmul %49, %51, %cst_28 {dimension_numbers = #tpu.dot_dimension_numbers<[1], [0], [0], [1], [0, 0, 1, 1], [], []>} : vector<8x128xbf16>, vector<128x128xbf16>, vector<8x128xf32> -> vector<8x128xf32>
    %c3_29 = arith.constant 3 : index
    %c0_30 = arith.constant 0 : index
    %53 = vector.load %arg2[%c3_29, %c0_30] : memref<16x128xf32, #tpu.memory_space<vmem>>, vector<1x128xf32>
    %54 = vector.broadcast %53 : vector<1x128xf32> to vector<8x128xf32>
    %55 = arith.addf %52, %54 : vector<8x128xf32>
    %cst_31 = arith.constant 0.000000e+00 : f32
    %56 = vector.broadcast %cst_31 : f32 to vector<8x128xf32>
    %57 = arith.cmpf oge, %55, %56 : vector<8x128xf32>
    %cst_32 = arith.constant 0.00999999977 : f32
    %58 = vector.broadcast %cst_32 : f32 to vector<8x128xf32>
    %59 = arith.mulf %58, %55 : vector<8x128xf32>
    %60 = arith.select %57, %55, %59 : vector<8x128xi1>, vector<8x128xf32>
    %61 = arith.truncf %60 : vector<8x128xf32> to vector<8x128xbf16>
    %c2_33 = arith.constant 2 : index
    %c0_34 = arith.constant 0 : index
    %c0_35 = arith.constant 0 : index
    %62 = vector.load %arg1[%c2_33, %c0_34, %c0_35] : memref<7x128x128xbf16, #tpu.memory_space<vmem>>, vector<1x128x128xbf16>
    %63 = vector.shape_cast %62 : vector<1x128x128xbf16> to vector<128x128xbf16>
    %cst_36 = arith.constant dense<0.000000e+00> : vector<8x128xf32>
    %64 = tpu.matmul %61, %63, %cst_36 {dimension_numbers = #tpu.dot_dimension_numbers<[1], [0], [0], [1], [0, 0, 1, 1], [], []>} : vector<8x128xbf16>, vector<128x128xbf16>, vector<8x128xf32> -> vector<8x128xf32>
    %c4_37 = arith.constant 4 : index
    %c0_38 = arith.constant 0 : index
    %65 = vector.load %arg2[%c4_37, %c0_38] : memref<16x128xf32, #tpu.memory_space<vmem>>, vector<1x128xf32>
    %66 = vector.broadcast %65 : vector<1x128xf32> to vector<8x128xf32>
    %67 = arith.addf %64, %66 : vector<8x128xf32>
    %cst_39 = arith.constant 0.000000e+00 : f32
    %68 = vector.broadcast %cst_39 : f32 to vector<8x128xf32>
    %69 = arith.cmpf oge, %67, %68 : vector<8x128xf32>
    %cst_40 = arith.constant 0.00999999977 : f32
    %70 = vector.broadcast %cst_40 : f32 to vector<8x128xf32>
    %71 = arith.mulf %70, %67 : vector<8x128xf32>
    %72 = arith.select %69, %67, %71 : vector<8x128xi1>, vector<8x128xf32>
    %73 = arith.truncf %72 : vector<8x128xf32> to vector<8x128xbf16>
    %c0_41 = arith.constant 0 : index
    %c0_42 = arith.constant 0 : index
    %c0_43 = arith.constant 0 : index
    %74 = vector.load %arg3[%c0_41, %c0_42, %c0_43] : memref<4x8x128xf32, #tpu.memory_space<vmem>>, vector<1x8x128xf32>
    %75 = vector.shape_cast %74 : vector<1x8x128xf32> to vector<8x128xf32>
    %76 = vector.shape_cast %72 : vector<8x128xf32> to vector<1x8x128xf32>
    tpu.vector_store %arg3[%c0_41, %c0_42, %c0_43], %76 {strides = array<i32>} : memref<4x8x128xf32, #tpu.memory_space<vmem>>, vector<1x8x128xf32>,
    %c5_44 = arith.constant 5 : index
    %c0_45 = arith.constant 0 : index
    %c0_46 = arith.constant 0 : index
    %77 = vector.load %arg1[%c5_44, %c0_45, %c0_46] : memref<7x128x128xbf16, #tpu.memory_space<vmem>>, vector<1x128x128xbf16>
    %78 = vector.shape_cast %77 : vector<1x128x128xbf16> to vector<128x128xbf16>
    %cst_47 = arith.constant dense<0.000000e+00> : vector<8x128xf32>
    %79 = tpu.matmul %73, %78, %cst_47 {dimension_numbers = #tpu.dot_dimension_numbers<[1], [0], [0], [1], [0, 0, 1, 1], [], []>} : vector<8x128xbf16>, vector<128x128xbf16>, vector<8x128xf32> -> vector<8x128xf32>
    %c8 = arith.constant 8 : index
    %c0_48 = arith.constant 0 : index
    %80 = vector.load %arg2[%c8, %c0_48] : memref<16x128xf32, #tpu.memory_space<vmem>>, vector<1x128xf32>
    %81 = vector.broadcast %80 : vector<1x128xf32> to vector<8x128xf32>
    %82 = arith.addf %79, %81 : vector<8x128xf32>
    %cst_49 = arith.constant 0.000000e+00 : f32
    %83 = vector.broadcast %cst_49 : f32 to vector<8x128xf32>
    %84 = arith.cmpf oge, %82, %83 : vector<8x128xf32>
    %cst_50 = arith.constant 0.00999999977 : f32
    %85 = vector.broadcast %cst_50 : f32 to vector<8x128xf32>
    %86 = arith.mulf %85, %82 : vector<8x128xf32>
    %87 = arith.select %84, %82, %86 : vector<8x128xi1>, vector<8x128xf32>
    %88 = arith.truncf %87 : vector<8x128xf32> to vector<8x128xbf16>
    %c6_51 = arith.constant 6 : index
    %c0_52 = arith.constant 0 : index
    %c0_53 = arith.constant 0 : index
    %89 = vector.load %arg1[%c6_51, %c0_52, %c0_53] : memref<7x128x128xbf16, #tpu.memory_space<vmem>>, vector<1x128x128xbf16>
    %90 = vector.shape_cast %89 : vector<1x128x128xbf16> to vector<128x128xbf16>
    %cst_54 = arith.constant dense<0.000000e+00> : vector<8x128xf32>
    %91 = tpu.matmul %88, %90, %cst_54 {dimension_numbers = #tpu.dot_dimension_numbers<[1], [0], [0], [1], [0, 0, 1, 1], [], []>} : vector<8x128xbf16>, vector<128x128xbf16>, vector<8x128xf32> -> vector<8x128xf32>
    %c10 = arith.constant 10 : index
    %c0_55 = arith.constant 0 : index
    %92 = vector.load %arg2[%c10, %c0_55] : memref<16x128xf32, #tpu.memory_space<vmem>>, vector<1x128xf32>
    %93 = vector.broadcast %92 : vector<1x128xf32> to vector<8x128xf32>
    %94 = arith.mulf %87, %93 : vector<8x128xf32>
    %cst_56 = arith.constant dense<0.000000e+00> : vector<8xf32>
    %95 = vector.multi_reduction <add>, %94, %cst_56 [1] : vector<8x128xf32> to vector<8xf32>
    %96 = vector.shape_cast %95 : vector<8xf32> to vector<8x1xf32>
    %97 = arith.maximumf %35, %96 : vector<8x1xf32>
    %98 = arith.subf %35, %97 : vector<8x1xf32>
    %99 = math.exp %98 : vector<8x1xf32>
    %100 = arith.subf %96, %97 : vector<8x1xf32>
    %101 = math.exp %100 : vector<8x1xf32>
    %102 = arith.mulf %99, %36 : vector<8x1xf32>
    %103 = arith.addf %102, %101 : vector<8x1xf32>
    %104 = vector.broadcast %99 : vector<8x1xf32> to vector<8x128xf32>
    %105 = arith.mulf %104, %37 : vector<8x128xf32>
    %106 = vector.broadcast %101 : vector<8x1xf32> to vector<8x128xf32>
    %107 = arith.mulf %106, %91 : vector<8x128xf32>
    %108 = arith.addf %105, %107 : vector<8x128xf32>
    %c0_57 = arith.constant 0 : index
    %c0_58 = arith.constant 0 : index
    %c0_59 = arith.constant 0 : index
    %109 = vector.load %arg1[%c0_57, %c0_58, %c0_59] : memref<7x128x128xbf16, #tpu.memory_space<vmem>>, vector<1x128x128xbf16>
    %110 = vector.shape_cast %109 : vector<1x128x128xbf16> to vector<128x128xbf16>
    %cst_60 = arith.constant dense<0.000000e+00> : vector<8x128xf32>
    %111 = tpu.matmul %34, %110, %cst_60 {dimension_numbers = #tpu.dot_dimension_numbers<[1], [0], [0], [1], [0, 0, 1, 1], [], []>} : vector<8x128xbf16>, vector<128x128xbf16>, vector<8x128xf32> -> vector<8x128xf32>
    %c2_61 = arith.constant 2 : index
    %c0_62 = arith.constant 0 : index
    %112 = vector.load %arg2[%c2_61, %c0_62] : memref<16x128xf32, #tpu.memory_space<vmem>>, vector<1x128xf32>
    %113 = vector.broadcast %112 : vector<1x128xf32> to vector<8x128xf32>
    %114 = arith.addf %111, %113 : vector<8x128xf32>
    %cst_63 = arith.constant 0.000000e+00 : f32
    %115 = vector.broadcast %cst_63 : f32 to vector<8x128xf32>
    %116 = arith.cmpf oge, %114, %115 : vector<8x128xf32>
    %cst_64 = arith.constant 0.00999999977 : f32
    %117 = vector.broadcast %cst_64 : f32 to vector<8x128xf32>
    %118 = arith.mulf %117, %114 : vector<8x128xf32>
    %119 = arith.select %116, %114, %118 : vector<8x128xi1>, vector<8x128xf32>
    %120 = arith.truncf %119 : vector<8x128xf32> to vector<8x128xbf16>
    %c1_65 = arith.constant 1 : index
    %c0_66 = arith.constant 0 : index
    %c0_67 = arith.constant 0 : index
    %121 = vector.load %arg1[%c1_65, %c0_66, %c0_67] : memref<7x128x128xbf16, #tpu.memory_space<vmem>>, vector<1x128x128xbf16>
    %122 = vector.shape_cast %121 : vector<1x128x128xbf16> to vector<128x128xbf16>
    %cst_68 = arith.constant dense<0.000000e+00> : vector<8x128xf32>
    %123 = tpu.matmul %120, %122, %cst_68 {dimension_numbers = #tpu.dot_dimension_numbers<[1], [0], [0], [1], [0, 0, 1, 1], [], []>} : vector<8x128xbf16>, vector<128x128xbf16>, vector<8x128xf32> -> vector<8x128xf32>
    %c3_69 = arith.constant 3 : index
    %c0_70 = arith.constant 0 : index
    %124 = vector.load %arg2[%c3_69, %c0_70] : memref<16x128xf32, #tpu.memory_space<vmem>>, vector<1x128xf32>
    %125 = vector.broadcast %124 : vector<1x128xf32> to vector<8x128xf32>
    %126 = arith.addf %123, %125 : vector<8x128xf32>
    %cst_71 = arith.constant 0.000000e+00 : f32
    %127 = vector.broadcast %cst_71 : f32 to vector<8x128xf32>
    %128 = arith.cmpf oge, %126, %127 : vector<8x128xf32>
    %cst_72 = arith.constant 0.00999999977 : f32
    %129 = vector.broadcast %cst_72 : f32 to vector<8x128xf32>
    %130 = arith.mulf %129, %126 : vector<8x128xf32>
    %131 = arith.select %128, %126, %130 : vector<8x128xi1>, vector<8x128xf32>
    %132 = arith.truncf %131 : vector<8x128xf32> to vector<8x128xbf16>
    %c2_73 = arith.constant 2 : index
    %c0_74 = arith.constant 0 : index
    %c0_75 = arith.constant 0 : index
    %133 = vector.load %arg1[%c2_73, %c0_74, %c0_75] : memref<7x128x128xbf16, #tpu.memory_space<vmem>>, vector<1x128x128xbf16>
    %134 = vector.shape_cast %133 : vector<1x128x128xbf16> to vector<128x128xbf16>
    %cst_76 = arith.constant dense<0.000000e+00> : vector<8x128xf32>
    %135 = tpu.matmul %132, %134, %cst_76 {dimension_numbers = #tpu.dot_dimension_numbers<[1], [0], [0], [1], [0, 0, 1, 1], [], []>} : vector<8x128xbf16>, vector<128x128xbf16>, vector<8x128xf32> -> vector<8x128xf32>
    %c4_77 = arith.constant 4 : index
    %c0_78 = arith.constant 0 : index
    %136 = vector.load %arg2[%c4_77, %c0_78] : memref<16x128xf32, #tpu.memory_space<vmem>>, vector<1x128xf32>
    %137 = vector.broadcast %136 : vector<1x128xf32> to vector<8x128xf32>
    %138 = arith.addf %135, %137 : vector<8x128xf32>
    %cst_79 = arith.constant 0.000000e+00 : f32
    %139 = vector.broadcast %cst_79 : f32 to vector<8x128xf32>
    %140 = arith.cmpf oge, %138, %139 : vector<8x128xf32>
    %cst_80 = arith.constant 0.00999999977 : f32
    %141 = vector.broadcast %cst_80 : f32 to vector<8x128xf32>
    %142 = arith.mulf %141, %138 : vector<8x128xf32>
    %143 = arith.select %140, %138, %142 : vector<8x128xi1>, vector<8x128xf32>
    %144 = arith.truncf %143 : vector<8x128xf32> to vector<8x128xbf16>
    %c1_81 = arith.constant 1 : index
    %c0_82 = arith.constant 0 : index
    %c0_83 = arith.constant 0 : index
    %145 = vector.load %arg3[%c1_81, %c0_82, %c0_83] : memref<4x8x128xf32, #tpu.memory_space<vmem>>, vector<1x8x128xf32>
    %146 = vector.shape_cast %145 : vector<1x8x128xf32> to vector<8x128xf32>
    %147 = vector.shape_cast %143 : vector<8x128xf32> to vector<1x8x128xf32>
    tpu.vector_store %arg3[%c1_81, %c0_82, %c0_83], %147 {strides = array<i32>} : memref<4x8x128xf32, #tpu.memory_space<vmem>>, vector<1x8x128xf32>,
    %c5_84 = arith.constant 5 : index
    %c0_85 = arith.constant 0 : index
    %c0_86 = arith.constant 0 : index
    %148 = vector.load %arg1[%c5_84, %c0_85, %c0_86] : memref<7x128x128xbf16, #tpu.memory_space<vmem>>, vector<1x128x128xbf16>
    %149 = vector.shape_cast %148 : vector<1x128x128xbf16> to vector<128x128xbf16>
    %cst_87 = arith.constant dense<0.000000e+00> : vector<8x128xf32>
    %150 = tpu.matmul %144, %149, %cst_87 {dimension_numbers = #tpu.dot_dimension_numbers<[1], [0], [0], [1], [0, 0, 1, 1], [], []>} : vector<8x128xbf16>, vector<128x128xbf16>, vector<8x128xf32> -> vector<8x128xf32>
    %c8_88 = arith.constant 8 : index
    %c0_89 = arith.constant 0 : index
    %151 = vector.load %arg2[%c8_88, %c0_89] : memref<16x128xf32, #tpu.memory_space<vmem>>, vector<1x128xf32>
    %152 = vector.broadcast %151 : vector<1x128xf32> to vector<8x128xf32>
    %153 = arith.addf %150, %152 : vector<8x128xf32>
    %cst_90 = arith.constant 0.000000e+00 : f32
    %154 = vector.broadcast %cst_90 : f32 to vector<8x128xf32>
    %155 = arith.cmpf oge, %153, %154 : vector<8x128xf32>
    %cst_91 = arith.constant 0.00999999977 : f32
    %156 = vector.broadcast %cst_91 : f32 to vector<8x128xf32>
    %157 = arith.mulf %156, %153 : vector<8x128xf32>
    %158 = arith.select %155, %153, %157 : vector<8x128xi1>, vector<8x128xf32>
    %159 = arith.truncf %158 : vector<8x128xf32> to vector<8x128xbf16>
    %c6_92 = arith.constant 6 : index
    %c0_93 = arith.constant 0 : index
    %c0_94 = arith.constant 0 : index
    %160 = vector.load %arg1[%c6_92, %c0_93, %c0_94] : memref<7x128x128xbf16, #tpu.memory_space<vmem>>, vector<1x128x128xbf16>
    %161 = vector.shape_cast %160 : vector<1x128x128xbf16> to vector<128x128xbf16>
    %cst_95 = arith.constant dense<0.000000e+00> : vector<8x128xf32>
    %162 = tpu.matmul %159, %161, %cst_95 {dimension_numbers = #tpu.dot_dimension_numbers<[1], [0], [0], [1], [0, 0, 1, 1], [], []>} : vector<8x128xbf16>, vector<128x128xbf16>, vector<8x128xf32> -> vector<8x128xf32>
    %c10_96 = arith.constant 10 : index
    %c0_97 = arith.constant 0 : index
    %163 = vector.load %arg2[%c10_96, %c0_97] : memref<16x128xf32, #tpu.memory_space<vmem>>, vector<1x128xf32>
    %164 = vector.broadcast %163 : vector<1x128xf32> to vector<8x128xf32>
    %165 = arith.mulf %158, %164 : vector<8x128xf32>
    %cst_98 = arith.constant dense<0.000000e+00> : vector<8xf32>
    %166 = vector.multi_reduction <add>, %165, %cst_98 [1] : vector<8x128xf32> to vector<8xf32>
    %167 = vector.shape_cast %166 : vector<8xf32> to vector<8x1xf32>
    %168 = arith.maximumf %97, %167 : vector<8x1xf32>
    %169 = arith.subf %97, %168 : vector<8x1xf32>
    %170 = math.exp %169 : vector<8x1xf32>
    %171 = arith.subf %167, %168 : vector<8x1xf32>
    %172 = math.exp %171 : vector<8x1xf32>
    %173 = arith.mulf %170, %103 : vector<8x1xf32>
    %174 = arith.addf %173, %172 : vector<8x1xf32>
    %175 = vector.broadcast %170 : vector<8x1xf32> to vector<8x128xf32>
    %176 = arith.mulf %175, %108 : vector<8x128xf32>
    %177 = vector.broadcast %172 : vector<8x1xf32> to vector<8x128xf32>
    %178 = arith.mulf %177, %162 : vector<8x128xf32>
    %179 = arith.addf %176, %178 : vector<8x128xf32>
    %c0_99 = arith.constant 0 : index
    %c0_100 = arith.constant 0 : index
    %c0_101 = arith.constant 0 : index
    %180 = vector.load %arg1[%c0_99, %c0_100, %c0_101] : memref<7x128x128xbf16, #tpu.memory_space<vmem>>, vector<1x128x128xbf16>
    %181 = vector.shape_cast %180 : vector<1x128x128xbf16> to vector<128x128xbf16>
    %cst_102 = arith.constant dense<0.000000e+00> : vector<8x128xf32>
    %182 = tpu.matmul %34, %181, %cst_102 {dimension_numbers = #tpu.dot_dimension_numbers<[1], [0], [0], [1], [0, 0, 1, 1], [], []>} : vector<8x128xbf16>, vector<128x128xbf16>, vector<8x128xf32> -> vector<8x128xf32>
    %c2_103 = arith.constant 2 : index
    %c0_104 = arith.constant 0 : index
    %183 = vector.load %arg2[%c2_103, %c0_104] : memref<16x128xf32, #tpu.memory_space<vmem>>, vector<1x128xf32>
    %184 = vector.broadcast %183 : vector<1x128xf32> to vector<8x128xf32>
    %185 = arith.addf %182, %184 : vector<8x128xf32>
    %cst_105 = arith.constant 0.000000e+00 : f32
    %186 = vector.broadcast %cst_105 : f32 to vector<8x128xf32>
    %187 = arith.cmpf oge, %185, %186 : vector<8x128xf32>
    %cst_106 = arith.constant 0.00999999977 : f32
    %188 = vector.broadcast %cst_106 : f32 to vector<8x128xf32>
    %189 = arith.mulf %188, %185 : vector<8x128xf32>
    %190 = arith.select %187, %185, %189 : vector<8x128xi1>, vector<8x128xf32>
    %191 = arith.truncf %190 : vector<8x128xf32> to vector<8x128xbf16>
    %c1_107 = arith.constant 1 : index
    %c0_108 = arith.constant 0 : index
    %c0_109 = arith.constant 0 : index
    %192 = vector.load %arg1[%c1_107, %c0_108, %c0_109] : memref<7x128x128xbf16, #tpu.memory_space<vmem>>, vector<1x128x128xbf16>
    %193 = vector.shape_cast %192 : vector<1x128x128xbf16> to vector<128x128xbf16>
    %cst_110 = arith.constant dense<0.000000e+00> : vector<8x128xf32>
    %194 = tpu.matmul %191, %193, %cst_110 {dimension_numbers = #tpu.dot_dimension_numbers<[1], [0], [0], [1], [0, 0, 1, 1], [], []>} : vector<8x128xbf16>, vector<128x128xbf16>, vector<8x128xf32> -> vector<8x128xf32>
    %c3_111 = arith.constant 3 : index
    %c0_112 = arith.constant 0 : index
    %195 = vector.load %arg2[%c3_111, %c0_112] : memref<16x128xf32, #tpu.memory_space<vmem>>, vector<1x128xf32>
    %196 = vector.broadcast %195 : vector<1x128xf32> to vector<8x128xf32>
    %197 = arith.addf %194, %196 : vector<8x128xf32>
    %cst_113 = arith.constant 0.000000e+00 : f32
    %198 = vector.broadcast %cst_113 : f32 to vector<8x128xf32>
    %199 = arith.cmpf oge, %197, %198 : vector<8x128xf32>
    %cst_114 = arith.constant 0.00999999977 : f32
    %200 = vector.broadcast %cst_114 : f32 to vector<8x128xf32>
    %201 = arith.mulf %200, %197 : vector<8x128xf32>
    %202 = arith.select %199, %197, %201 : vector<8x128xi1>, vector<8x128xf32>
    %203 = arith.truncf %202 : vector<8x128xf32> to vector<8x128xbf16>
    %c2_115 = arith.constant 2 : index
    %c0_116 = arith.constant 0 : index
    %c0_117 = arith.constant 0 : index
    %204 = vector.load %arg1[%c2_115, %c0_116, %c0_117] : memref<7x128x128xbf16, #tpu.memory_space<vmem>>, vector<1x128x128xbf16>
    %205 = vector.shape_cast %204 : vector<1x128x128xbf16> to vector<128x128xbf16>
    %cst_118 = arith.constant dense<0.000000e+00> : vector<8x128xf32>
    %206 = tpu.matmul %203, %205, %cst_118 {dimension_numbers = #tpu.dot_dimension_numbers<[1], [0], [0], [1], [0, 0, 1, 1], [], []>} : vector<8x128xbf16>, vector<128x128xbf16>, vector<8x128xf32> -> vector<8x128xf32>
    %c4_119 = arith.constant 4 : index
    %c0_120 = arith.constant 0 : index
    %207 = vector.load %arg2[%c4_119, %c0_120] : memref<16x128xf32, #tpu.memory_space<vmem>>, vector<1x128xf32>
    %208 = vector.broadcast %207 : vector<1x128xf32> to vector<8x128xf32>
    %209 = arith.addf %206, %208 : vector<8x128xf32>
    %cst_121 = arith.constant 0.000000e+00 : f32
    %210 = vector.broadcast %cst_121 : f32 to vector<8x128xf32>
    %211 = arith.cmpf oge, %209, %210 : vector<8x128xf32>
    %cst_122 = arith.constant 0.00999999977 : f32
    %212 = vector.broadcast %cst_122 : f32 to vector<8x128xf32>
    %213 = arith.mulf %212, %209 : vector<8x128xf32>
    %214 = arith.select %211, %209, %213 : vector<8x128xi1>, vector<8x128xf32>
    %215 = arith.truncf %214 : vector<8x128xf32> to vector<8x128xbf16>
    %c2_123 = arith.constant 2 : index
    %c0_124 = arith.constant 0 : index
    %c0_125 = arith.constant 0 : index
    %216 = vector.load %arg3[%c2_123, %c0_124, %c0_125] : memref<4x8x128xf32, #tpu.memory_space<vmem>>, vector<1x8x128xf32>
    %217 = vector.shape_cast %216 : vector<1x8x128xf32> to vector<8x128xf32>
    %218 = vector.shape_cast %214 : vector<8x128xf32> to vector<1x8x128xf32>
    tpu.vector_store %arg3[%c2_123, %c0_124, %c0_125], %218 {strides = array<i32>} : memref<4x8x128xf32, #tpu.memory_space<vmem>>, vector<1x8x128xf32>,
    %c5_126 = arith.constant 5 : index
    %c0_127 = arith.constant 0 : index
    %c0_128 = arith.constant 0 : index
    %219 = vector.load %arg1[%c5_126, %c0_127, %c0_128] : memref<7x128x128xbf16, #tpu.memory_space<vmem>>, vector<1x128x128xbf16>
    %220 = vector.shape_cast %219 : vector<1x128x128xbf16> to vector<128x128xbf16>
    %cst_129 = arith.constant dense<0.000000e+00> : vector<8x128xf32>
    %221 = tpu.matmul %215, %220, %cst_129 {dimension_numbers = #tpu.dot_dimension_numbers<[1], [0], [0], [1], [0, 0, 1, 1], [], []>} : vector<8x128xbf16>, vector<128x128xbf16>, vector<8x128xf32> -> vector<8x128xf32>
    %c8_130 = arith.constant 8 : index
    %c0_131 = arith.constant 0 : index
    %222 = vector.load %arg2[%c8_130, %c0_131] : memref<16x128xf32, #tpu.memory_space<vmem>>, vector<1x128xf32>
    %223 = vector.broadcast %222 : vector<1x128xf32> to vector<8x128xf32>
    %224 = arith.addf %221, %223 : vector<8x128xf32>
    %cst_132 = arith.constant 0.000000e+00 : f32
    %225 = vector.broadcast %cst_132 : f32 to vector<8x128xf32>
    %226 = arith.cmpf oge, %224, %225 : vector<8x128xf32>
    %cst_133 = arith.constant 0.00999999977 : f32
    %227 = vector.broadcast %cst_133 : f32 to vector<8x128xf32>
    %228 = arith.mulf %227, %224 : vector<8x128xf32>
    %229 = arith.select %226, %224, %228 : vector<8x128xi1>, vector<8x128xf32>
    %230 = arith.truncf %229 : vector<8x128xf32> to vector<8x128xbf16>
    %c6_134 = arith.constant 6 : index
    %c0_135 = arith.constant 0 : index
    %c0_136 = arith.constant 0 : index
    %231 = vector.load %arg1[%c6_134, %c0_135, %c0_136] : memref<7x128x128xbf16, #tpu.memory_space<vmem>>, vector<1x128x128xbf16>
    %232 = vector.shape_cast %231 : vector<1x128x128xbf16> to vector<128x128xbf16>
    %cst_137 = arith.constant dense<0.000000e+00> : vector<8x128xf32>
    %233 = tpu.matmul %230, %232, %cst_137 {dimension_numbers = #tpu.dot_dimension_numbers<[1], [0], [0], [1], [0, 0, 1, 1], [], []>} : vector<8x128xbf16>, vector<128x128xbf16>, vector<8x128xf32> -> vector<8x128xf32>
    %c10_138 = arith.constant 10 : index
    %c0_139 = arith.constant 0 : index
    %234 = vector.load %arg2[%c10_138, %c0_139] : memref<16x128xf32, #tpu.memory_space<vmem>>, vector<1x128xf32>
    %235 = vector.broadcast %234 : vector<1x128xf32> to vector<8x128xf32>
    %236 = arith.mulf %229, %235 : vector<8x128xf32>
    %cst_140 = arith.constant dense<0.000000e+00> : vector<8xf32>
    %237 = vector.multi_reduction <add>, %236, %cst_140 [1] : vector<8x128xf32> to vector<8xf32>
    %238 = vector.shape_cast %237 : vector<8xf32> to vector<8x1xf32>
    %239 = arith.maximumf %168, %238 : vector<8x1xf32>
    %240 = arith.subf %168, %239 : vector<8x1xf32>
    %241 = math.exp %240 : vector<8x1xf32>
    %242 = arith.subf %238, %239 : vector<8x1xf32>
    %243 = math.exp %242 : vector<8x1xf32>
    %244 = arith.mulf %241, %174 : vector<8x1xf32>
    %245 = arith.addf %244, %243 : vector<8x1xf32>
    %246 = vector.broadcast %241 : vector<8x1xf32> to vector<8x128xf32>
    %247 = arith.mulf %246, %179 : vector<8x128xf32>
    %248 = vector.broadcast %243 : vector<8x1xf32> to vector<8x128xf32>
    %249 = arith.mulf %248, %233 : vector<8x128xf32>
    %250 = arith.addf %247, %249 : vector<8x128xf32>
    %c0_141 = arith.constant 0 : index
    %c0_142 = arith.constant 0 : index
    %c0_143 = arith.constant 0 : index
    %251 = vector.load %arg1[%c0_141, %c0_142, %c0_143] : memref<7x128x128xbf16, #tpu.memory_space<vmem>>, vector<1x128x128xbf16>
    %252 = vector.shape_cast %251 : vector<1x128x128xbf16> to vector<128x128xbf16>
    %cst_144 = arith.constant dense<0.000000e+00> : vector<8x128xf32>
    %253 = tpu.matmul %34, %252, %cst_144 {dimension_numbers = #tpu.dot_dimension_numbers<[1], [0], [0], [1], [0, 0, 1, 1], [], []>} : vector<8x128xbf16>, vector<128x128xbf16>, vector<8x128xf32> -> vector<8x128xf32>
    %c2_145 = arith.constant 2 : index
    %c0_146 = arith.constant 0 : index
    %254 = vector.load %arg2[%c2_145, %c0_146] : memref<16x128xf32, #tpu.memory_space<vmem>>, vector<1x128xf32>
    %255 = vector.broadcast %254 : vector<1x128xf32> to vector<8x128xf32>
    %256 = arith.addf %253, %255 : vector<8x128xf32>
    %cst_147 = arith.constant 0.000000e+00 : f32
    %257 = vector.broadcast %cst_147 : f32 to vector<8x128xf32>
    %258 = arith.cmpf oge, %256, %257 : vector<8x128xf32>
    %cst_148 = arith.constant 0.00999999977 : f32
    %259 = vector.broadcast %cst_148 : f32 to vector<8x128xf32>
    %260 = arith.mulf %259, %256 : vector<8x128xf32>
    %261 = arith.select %258, %256, %260 : vector<8x128xi1>, vector<8x128xf32>
    %262 = arith.truncf %261 : vector<8x128xf32> to vector<8x128xbf16>
    %c1_149 = arith.constant 1 : index
    %c0_150 = arith.constant 0 : index
    %c0_151 = arith.constant 0 : index
    %263 = vector.load %arg1[%c1_149, %c0_150, %c0_151] : memref<7x128x128xbf16, #tpu.memory_space<vmem>>, vector<1x128x128xbf16>
    %264 = vector.shape_cast %263 : vector<1x128x128xbf16> to vector<128x128xbf16>
    %cst_152 = arith.constant dense<0.000000e+00> : vector<8x128xf32>
    %265 = tpu.matmul %262, %264, %cst_152 {dimension_numbers = #tpu.dot_dimension_numbers<[1], [0], [0], [1], [0, 0, 1, 1], [], []>} : vector<8x128xbf16>, vector<128x128xbf16>, vector<8x128xf32> -> vector<8x128xf32>
    %c3_153 = arith.constant 3 : index
    %c0_154 = arith.constant 0 : index
    %266 = vector.load %arg2[%c3_153, %c0_154] : memref<16x128xf32, #tpu.memory_space<vmem>>, vector<1x128xf32>
    %267 = vector.broadcast %266 : vector<1x128xf32> to vector<8x128xf32>
    %268 = arith.addf %265, %267 : vector<8x128xf32>
    %cst_155 = arith.constant 0.000000e+00 : f32
    %269 = vector.broadcast %cst_155 : f32 to vector<8x128xf32>
    %270 = arith.cmpf oge, %268, %269 : vector<8x128xf32>
    %cst_156 = arith.constant 0.00999999977 : f32
    %271 = vector.broadcast %cst_156 : f32 to vector<8x128xf32>
    %272 = arith.mulf %271, %268 : vector<8x128xf32>
    %273 = arith.select %270, %268, %272 : vector<8x128xi1>, vector<8x128xf32>
    %274 = arith.truncf %273 : vector<8x128xf32> to vector<8x128xbf16>
    %c2_157 = arith.constant 2 : index
    %c0_158 = arith.constant 0 : index
    %c0_159 = arith.constant 0 : index
    %275 = vector.load %arg1[%c2_157, %c0_158, %c0_159] : memref<7x128x128xbf16, #tpu.memory_space<vmem>>, vector<1x128x128xbf16>
    %276 = vector.shape_cast %275 : vector<1x128x128xbf16> to vector<128x128xbf16>
    %cst_160 = arith.constant dense<0.000000e+00> : vector<8x128xf32>
    %277 = tpu.matmul %274, %276, %cst_160 {dimension_numbers = #tpu.dot_dimension_numbers<[1], [0], [0], [1], [0, 0, 1, 1], [], []>} : vector<8x128xbf16>, vector<128x128xbf16>, vector<8x128xf32> -> vector<8x128xf32>
    %c4_161 = arith.constant 4 : index
    %c0_162 = arith.constant 0 : index
    %278 = vector.load %arg2[%c4_161, %c0_162] : memref<16x128xf32, #tpu.memory_space<vmem>>, vector<1x128xf32>
    %279 = vector.broadcast %278 : vector<1x128xf32> to vector<8x128xf32>
    %280 = arith.addf %277, %279 : vector<8x128xf32>
    %cst_163 = arith.constant 0.000000e+00 : f32
    %281 = vector.broadcast %cst_163 : f32 to vector<8x128xf32>
    %282 = arith.cmpf oge, %280, %281 : vector<8x128xf32>
    %cst_164 = arith.constant 0.00999999977 : f32
    %283 = vector.broadcast %cst_164 : f32 to vector<8x128xf32>
    %284 = arith.mulf %283, %280 : vector<8x128xf32>
    %285 = arith.select %282, %280, %284 : vector<8x128xi1>, vector<8x128xf32>
    %286 = arith.truncf %285 : vector<8x128xf32> to vector<8x128xbf16>
    %c3_165 = arith.constant 3 : index
    %c0_166 = arith.constant 0 : index
    %c0_167 = arith.constant 0 : index
    %287 = vector.load %arg3[%c3_165, %c0_166, %c0_167] : memref<4x8x128xf32, #tpu.memory_space<vmem>>, vector<1x8x128xf32>
    %288 = vector.shape_cast %287 : vector<1x8x128xf32> to vector<8x128xf32>
    %289 = vector.shape_cast %285 : vector<8x128xf32> to vector<1x8x128xf32>
    tpu.vector_store %arg3[%c3_165, %c0_166, %c0_167], %289 {strides = array<i32>} : memref<4x8x128xf32, #tpu.memory_space<vmem>>, vector<1x8x128xf32>,
    %c5_168 = arith.constant 5 : index
    %c0_169 = arith.constant 0 : index
    %c0_170 = arith.constant 0 : index
    %290 = vector.load %arg1[%c5_168, %c0_169, %c0_170] : memref<7x128x128xbf16, #tpu.memory_space<vmem>>, vector<1x128x128xbf16>
    %291 = vector.shape_cast %290 : vector<1x128x128xbf16> to vector<128x128xbf16>
    %cst_171 = arith.constant dense<0.000000e+00> : vector<8x128xf32>
    %292 = tpu.matmul %286, %291, %cst_171 {dimension_numbers = #tpu.dot_dimension_numbers<[1], [0], [0], [1], [0, 0, 1, 1], [], []>} : vector<8x128xbf16>, vector<128x128xbf16>, vector<8x128xf32> -> vector<8x128xf32>
    %c8_172 = arith.constant 8 : index
    %c0_173 = arith.constant 0 : index
    %293 = vector.load %arg2[%c8_172, %c0_173] : memref<16x128xf32, #tpu.memory_space<vmem>>, vector<1x128xf32>
    %294 = vector.broadcast %293 : vector<1x128xf32> to vector<8x128xf32>
    %295 = arith.addf %292, %294 : vector<8x128xf32>
    %cst_174 = arith.constant 0.000000e+00 : f32
    %296 = vector.broadcast %cst_174 : f32 to vector<8x128xf32>
    %297 = arith.cmpf oge, %295, %296 : vector<8x128xf32>
    %cst_175 = arith.constant 0.00999999977 : f32
    %298 = vector.broadcast %cst_175 : f32 to vector<8x128xf32>
    %299 = arith.mulf %298, %295 : vector<8x128xf32>
    %300 = arith.select %297, %295, %299 : vector<8x128xi1>, vector<8x128xf32>
    %301 = arith.truncf %300 : vector<8x128xf32> to vector<8x128xbf16>
    %c6_176 = arith.constant 6 : index
    %c0_177 = arith.constant 0 : index
    %c0_178 = arith.constant 0 : index
    %302 = vector.load %arg1[%c6_176, %c0_177, %c0_178] : memref<7x128x128xbf16, #tpu.memory_space<vmem>>, vector<1x128x128xbf16>
    %303 = vector.shape_cast %302 : vector<1x128x128xbf16> to vector<128x128xbf16>
    %cst_179 = arith.constant dense<0.000000e+00> : vector<8x128xf32>
    %304 = tpu.matmul %301, %303, %cst_179 {dimension_numbers = #tpu.dot_dimension_numbers<[1], [0], [0], [1], [0, 0, 1, 1], [], []>} : vector<8x128xbf16>, vector<128x128xbf16>, vector<8x128xf32> -> vector<8x128xf32>
    %c10_180 = arith.constant 10 : index
    %c0_181 = arith.constant 0 : index
    %305 = vector.load %arg2[%c10_180, %c0_181] : memref<16x128xf32, #tpu.memory_space<vmem>>, vector<1x128xf32>
    %306 = vector.broadcast %305 : vector<1x128xf32> to vector<8x128xf32>
    %307 = arith.mulf %300, %306 : vector<8x128xf32>
    %cst_182 = arith.constant dense<0.000000e+00> : vector<8xf32>
    %308 = vector.multi_reduction <add>, %307, %cst_182 [1] : vector<8x128xf32> to vector<8xf32>
    %309 = vector.shape_cast %308 : vector<8xf32> to vector<8x1xf32>
    %310 = arith.maximumf %239, %309 : vector<8x1xf32>
    %311 = arith.subf %239, %310 : vector<8x1xf32>
    %312 = math.exp %311 : vector<8x1xf32>
    %313 = arith.subf %309, %310 : vector<8x1xf32>
    %314 = math.exp %313 : vector<8x1xf32>
    %315 = arith.mulf %312, %245 : vector<8x1xf32>
    %316 = arith.addf %315, %314 : vector<8x1xf32>
    %317 = vector.broadcast %312 : vector<8x1xf32> to vector<8x128xf32>
    %318 = arith.mulf %317, %250 : vector<8x128xf32>
    %319 = vector.broadcast %314 : vector<8x1xf32> to vector<8x128xf32>
    %320 = arith.mulf %319, %304 : vector<8x128xf32>
    %321 = arith.addf %318, %320 : vector<8x128xf32>
    %322 = tpu.reciprocal %316 {approx = true} : vector<8x1xf32> -> vector<8x1xf32>
    %323 = vector.broadcast %322 : vector<8x1xf32> to vector<8x128xf32>
    %324 = arith.mulf %321, %323 : vector<8x128xf32>
    %c9 = arith.constant 9 : index
    %c0_183 = arith.constant 0 : index
    %325 = vector.load %arg2[%c9, %c0_183] : memref<16x128xf32, #tpu.memory_space<vmem>>, vector<1x128xf32>
    %326 = vector.broadcast %325 : vector<1x128xf32> to vector<8x128xf32>
    %327 = arith.addf %324, %326 : vector<8x128xf32>
    %c0_184 = arith.constant 0 : index
    %c0_185 = arith.constant 0 : index
    %328 = vector.load %arg5[%c0_184, %c0_185] : memref<8x128xf32, #tpu.memory_space<vmem>>, vector<8x128xf32>
    tpu.vector_store %arg5[%c0_184, %c0_185], %327 {strides = array<i32>} : memref<8x128xf32, #tpu.memory_space<vmem>>, vector<8x128xf32>,
    return
  }
  func.func @transform_0(%arg0: i32) -> (i32, i32, i32) {
    %c0_i32 = arith.constant 0 : i32
    %c0_i32_0 = arith.constant 0 : i32
    %c0_i32_1 = arith.constant 0 : i32
    %c0_i32_2 = arith.constant 0 : i32
    return %c0_i32, %c0_i32_0, %c0_i32_1 : i32, i32, i32
  }
  func.func @transform_1(%arg0: i32) -> (i32, i32) {
    %c0_i32 = arith.constant 0 : i32
    %c0_i32_0 = arith.constant 0 : i32
    %c0_i32_1 = arith.constant 0 : i32
    return %c0_i32, %c0_i32_0 : i32, i32
  }
  func.func @transform_2(%arg0: i32) -> (i32, i32, i32) {
    %c0_i32 = arith.constant 0 : i32
    %c0_i32_0 = arith.constant 0 : i32
    %c0_i32_1 = arith.constant 0 : i32
    return %c0_i32, %arg0, %c0_i32_0 : i32, i32, i32
  }
  func.func @transform_3(%arg0: i32) -> (i32, i32) {
    %c0_i32 = arith.constant 0 : i32
    %c0_i32_0 = arith.constant 0 : i32
    return %arg0, %c0_i32 : i32, i32
  }
  func.func @transform_4(%arg0: i32) -> (i32, i32) {
    %c0_i32 = arith.constant 0 : i32
    %c0_i32_0 = arith.constant 0 : i32
    return %arg0, %c0_i32 : i32, i32
  }
}

</mosaic_0001>

<llo_original>
// kernel: tpu_custom_call.1
$region0: #{tpu_custom_call.1}
  #allocation0 [shape = 'u32[]', space=smem, size = 0x4, offset = 0x4, fixed_abs, tag = 'smem constant byte address 0x4 - core index']
  #allocation1 [shape = 'u32[144,128]{1,0:T(1,128)}', space=vmem, size = 0x12000, scoped, tag = 'internal scratch']
  %s0 = inlined_call_operand.hbm [shape: bf16[7,128,128], index: 0, kind: input, shape index: {}]
  %s1 = inlined_call_operand.hbm [shape: f32[16,128], index: 1, kind: input, shape index: {}]
  %s2 = inlined_call_operand.hbm [shape: f32[4,8,128], index: 2, kind: output, shape index: {0}]
  %s3 = inlined_call_operand.hbm [shape: f32[64,128], index: 3, kind: output, shape index: {1}]
  %s4 = inlined_call_operand.hbm [shape: f32[8,128], index: 4, kind: output, shape index: {2}]
  %5 = xla_tuple %s2, %s3, %s4
  %s6 = sld [smem:[#allocation0]]
  $region42: #{tpu_custom_call.1} parent=0
    _
  %s8 = ssub.s32 1, %s6
  %s9 = scalar_select 0, %s8, %s6
  $region1: #{tpu_custom_call.1} parent=0
    #allocation2 [shape = 'u8[229376]{0}', space=vmem, size = 0x38000, scoped, tag = 'input window, operand 0, single buffered']
    #allocation3 [shape = 's32[1]{0}', space=sflag, size = 0x4, scoped, tag = 'scoped memory for tpu_custom_call.1']
    #allocation4 [shape = 's32[1]{0}', space=sflag, size = 0x4, scoped, tag = 'scoped memory for tpu_custom_call.1']
    #allocation5 [shape = 'u8[8192]{0}', space=vmem, size = 0x2000, scoped, tag = 'input window, operand 1, single buffered']
    #allocation6 [shape = 's32[1]{0}', space=sflag, size = 0x4, scoped, tag = 'scoped memory for tpu_custom_call.1']
    #allocation7 [shape = 'u8[16384]{0}', space=vmem, size = 0x4000, scoped, tag = 'output window, operand 0, single buffered']
    #allocation8 [shape = 'u8[32768]{0}', space=vmem, size = 0x8000, scoped, tag = 'output window, operand 1, single buffered']
    #allocation9 [shape = 's32[1]{0}', space=sflag, size = 0x4, scoped, tag = 'scoped memory for tpu_custom_call.1']
    #allocation10 [shape = 'u8[4096]{0}', space=vmem, size = 0x1000, scoped, tag = 'output window, operand 2, single buffered']
    %10 = vsyncpa [#allocation3], 0
    %11 = vsyncpa [#allocation6], 0
    %12 = vsyncpa [#allocation4], 0
    %13 = vsyncpa [#allocation9], 0
    // Predicated region
    $region2: #{tpu_custom_call.1} parent=1 // pred_check
      _
    $region3: #{tpu_custom_call.1} parent=1 // pred_check_branch
      %15 = sbr.rel (0) target = $region5
    $region4: #{tpu_custom_call.1} parent=1 // pred_region
      %s17 = ssub.s32 7168, 7168
      %18 = vsyncadd [#allocation3], %s17
      %s19 = sshll.u32 [#allocation2], 4
      %s20 = int_to_ptr.vmem [resolvable:$true] %s19
      %25 = dma.hbm_to_vmem [thread:$0]  %s0, 7168, %s20, [#allocation3], 64, 64, 4
    $region5: #{tpu_custom_call.1} parent=1 // pred_fallthru
      _
    // Predicated region
    $region6: #{tpu_custom_call.1} parent=1 // pred_check
      _
    $region7: #{tpu_custom_call.1} parent=1 // pred_check_branch
      %27 = sbr.rel (0) target = $region9
    $region8: #{tpu_custom_call.1} parent=1 // pred_region
      %s29 = ssub.s32 256, 256
      %30 = vsyncadd [#allocation6], %s29
      %s31 = sshll.u32 [#allocation5], 4
      %s32 = int_to_ptr.vmem [resolvable:$true] %s31
      %37 = dma.hbm_to_vmem [thread:$0]  %s1, 256, %s32, [#allocation6], 128, 128, 8
    $region9: #{tpu_custom_call.1} parent=1 // pred_fallthru
      _
    // Predicated region
    $region10: #{tpu_custom_call.1} parent=1 // pred_check
      _
    $region11: #{tpu_custom_call.1} parent=1 // pred_check_branch
      %39 = sbr.rel (0) target = $region13
    $region12: #{tpu_custom_call.1} parent=1 // pred_region
      %40 = dma.done [#allocation3], 7168
    $region13: #{tpu_custom_call.1} parent=1 // pred_fallthru
      _
    // Predicated region
    $region14: #{tpu_custom_call.1} parent=1 // pred_check
      _
    $region15: #{tpu_custom_call.1} parent=1 // pred_check_branch
      %42 = sbr.rel (0) target = $region17
    $region16: #{tpu_custom_call.1} parent=1 // pred_region
      %43 = dma.done [#allocation6], 256
    $region17: #{tpu_custom_call.1} parent=1 // pred_fallthru
      _
    %v45 = vld [vmem:[#allocation5] sm:$0x1]
    %v46 = vld [vmem:[#allocation5 + $0x1] sm:$0x1]
    %v47 = vadd.f32 %v45, %v46
    %vm48 = vcmp.ge.f32.partialorder %v47, 0.0
    %v49 = vmul.f32 %v47, 0.01
    %v50 = vsel %vm48, %v47, %v49
    %v51 = vlaneseq
    %v52 = vshrl.u32 %v51, 7
    %v53 = vsub.s32 0, %v52
    %v54 = vrot.slane %v50, %v53
    %v55 = vpack.c.bf16 %v54, %v54
    %s56 = scalar_lea.vmem [#allocation2], 192
    %v57 = vld [vmem:[%s56] sm:$0xf]
    %v58 = vld [vmem:[%s56 + $0x4] sm:$0xf]
    %v59 = vld [vmem:[%s56 + $0x8] sm:$0xf]
    %v60 = vld [vmem:[%s56 + $0xc] sm:$0xf]
    %v61 = vld [vmem:[%s56 + $0x10] sm:$0xf]
    %v62 = vld [vmem:[%s56 + $0x14] sm:$0xf]
    %v63 = vld [vmem:[%s56 + $0x18] sm:$0xf]
    %v64 = vld [vmem:[%s56 + $0x1c] sm:$0xf]
    %v65 = vld [vmem:[%s56 + $0x20] sm:$0xf]
    %v66 = vld [vmem:[%s56 + $0x24] sm:$0xf]
    %v67 = vld [vmem:[%s56 + $0x28] sm:$0xf]
    %v68 = vld [vmem:[%s56 + $0x2c] sm:$0xf]
    %v69 = vld [vmem:[%s56 + $0x30] sm:$0xf]
    %v70 = vld [vmem:[%s56 + $0x34] sm:$0xf]
    %v71 = vld [vmem:[%s56 + $0x38] sm:$0xf]
    %v72 = vld [vmem:[%s56 + $0x3c] sm:$0xf]
    %v73 = vld [vmem:[#allocation5 + $0x5] sm:$0x1]
    %v74 = vlaneseq
    %v75 = vshrl.u32 %v74, 7
    %v76 = vsub.s32 0, %v75
    %v77 = vrot.slane %v73, %v76
    %v94 = vunpack.c.l.b16 %v57
    %v95 = vunpack.c.l.b16 %v58
    %v96 = vunpack.c.l.b16 %v59
    %v97 = vunpack.c.l.b16 %v60
    %v98 = vunpack.c.l.b16 %v61
    %v99 = vunpack.c.l.b16 %v62
    %v100 = vunpack.c.l.b16 %v63
    %v101 = vunpack.c.l.b16 %v64
    %v102 = vunpack.c.l.b16 %v65
    %v103 = vunpack.c.l.b16 %v66
    %v104 = vunpack.c.l.b16 %v67
    %v105 = vunpack.c.l.b16 %v68
    %v106 = vunpack.c.l.b16 %v69
    %v107 = vunpack.c.l.b16 %v70
    %v108 = vunpack.c.l.b16 %v71
    %v109 = vunpack.c.l.b16 %v72
    %v110 = vpack.c.b16 %v95, %v94
    %v111 = vpack.c.b16 %v97, %v96
    %v112 = vpack.c.b16 %v99, %v98
    %v113 = vpack.c.b16 %v101, %v100
    %v114 = vpack.c.b16 %v103, %v102
    %v115 = vpack.c.b16 %v105, %v104
    %v116 = vpack.c.b16 %v107, %v106
    %v117 = vpack.c.b16 %v109, %v108
    %126 = vmatprep.subr.bf16.mxu0 0
    %127 = vmatpush1.bf16.msra.mxu0 %v110
    %128 = vmatprep.subr.bf16.mxu0 0
    %129 = vmatpush1.bf16.msra.mxu0 %v111
    %130 = vmatprep.subr.bf16.mxu0 0
    %131 = vmatpush1.bf16.msra.mxu0 %v112
    %132 = vmatprep.subr.bf16.mxu0 0
    %133 = vmatpush1.bf16.msra.mxu0 %v113
    %134 = vmatprep.subr.bf16.mxu0 0
    %135 = vmatpush1.bf16.msra.mxu0 %v114
    %136 = vmatprep.subr.bf16.mxu0 0
    %137 = vmatpush1.bf16.msra.mxu0 %v115
    %138 = vmatprep.subr.bf16.mxu0 0
    %139 = vmatpush1.bf16.msra.mxu0 %v116
    %140 = vmatprep.subr.bf16.mxu0 0
    %141 = vmatpush1.bf16.msra.mxu0 %v117
    %142 = vmatprep.subr.bf16.mxu0 0
    %143 = vmatpush1.bf16.msra.mxu0 0
    %144 = vmatprep.subr.bf16.mxu0 0
    %145 = vmatpush1.bf16.msra.mxu0 0
    %146 = vmatprep.subr.bf16.mxu0 0
    %147 = vmatpush1.bf16.msra.mxu0 0
    %148 = vmatprep.subr.bf16.mxu0 0
    %149 = vmatpush1.bf16.msra.mxu0 0
    %150 = vmatprep.subr.bf16.mxu0 0
    %151 = vmatpush1.bf16.msra.mxu0 0
    %152 = vmatprep.subr.bf16.mxu0 0
    %153 = vmatpush1.bf16.msra.mxu0 0
    %154 = vmatprep.subr.bf16.mxu0 0
    %155 = vmatpush1.bf16.msra.mxu0 0
    %156 = vmatprep.subr.bf16.mxu0 0
    %157 = vmatpush1.bf16.msra.mxu0 0
    %158 = vmatprep.mubr.bf16.mxu0 0
    %159 = vmatmul.mubr.bf16.gmra.mrb[0].mxu0 %v55
    %v160 = vpop.f32.mrb[0].mxu0
    %v161 = vadd.f32 %v77, %v160
    %v162 = vpop.f32.mrb[0].mxu0
    %v163 = vpop.f32.mrb[0].mxu0
    %v164 = vpop.f32.mrb[0].mxu0
    %165 = vdwg.mxu0
    %vm166 = vcmp.ge.f32.partialorder %v161, 0.0
    %v167 = vmul.f32 %v161, 0.01
    %v168 = vsel %vm166, %v161, %v167
    %v169 = vpack.c.bf16 %v168, %v168
    %s170 = scalar_lea.vmem [#allocation2], 256
    %v171 = vld [vmem:[%s170] sm:$0xf]
    %v172 = vld [vmem:[%s170 + $0x4] sm:$0xf]
    %v173 = vld [vmem:[%s170 + $0x8] sm:$0xf]
    %v174 = vld [vmem:[%s170 + $0xc] sm:$0xf]
    %v175 = vld [vmem:[%s170 + $0x10] sm:$0xf]
    %v176 = vld [vmem:[%s170 + $0x14] sm:$0xf]
    %v177 = vld [vmem:[%s170 + $0x18] sm:$0xf]
    %v178 = vld [vmem:[%s170 + $0x1c] sm:$0xf]
    %v179 = vld [vmem:[%s170 + $0x20] sm:$0xf]
    %v180 = vld [vmem:[%s170 + $0x24] sm:$0xf]
    %v181 = vld [vmem:[%s170 + $0x28] sm:$0xf]
    %v182 = vld [vmem:[%s170 + $0x2c] sm:$0xf]
    %v183 = vld [vmem:[%s170 + $0x30] sm:$0xf]
    %v184 = vld [vmem:[%s170 + $0x34] sm:$0xf]
    %v185 = vld [vmem:[%s170 + $0x38] sm:$0xf]
    %v186 = vld [vmem:[%s170 + $0x3c] sm:$0xf]
    %v203 = vunpack.c.l.b16 %v171
    %v204 = vunpack.c.l.b16 %v172
    %v205 = vunpack.c.l.b16 %v173
    %v206 = vunpack.c.l.b16 %v174
    %v207 = vunpack.c.l.b16 %v175
    %v208 = vunpack.c.l.b16 %v176
    %v209 = vunpack.c.l.b16 %v177
    %v210 = vunpack.c.l.b16 %v178
    %v211 = vunpack.c.l.b16 %v179
    %v212 = vunpack.c.l.b16 %v180
    %v213 = vunpack.c.l.b16 %v181
    %v214 = vunpack.c.l.b16 %v182
    %v215 = vunpack.c.l.b16 %v183
    %v216 = vunpack.c.l.b16 %v184
    %v217 = vunpack.c.l.b16 %v185
    %v218 = vunpack.c.l.b16 %v186
    %v219 = vpack.c.b16 %v204, %v203
    %v220 = vpack.c.b16 %v206, %v205
    %v221 = vpack.c.b16 %v208, %v207
    %v222 = vpack.c.b16 %v210, %v209
    %v223 = vpack.c.b16 %v212, %v211
    %v224 = vpack.c.b16 %v214, %v213
    %v225 = vpack.c.b16 %v216, %v215
    %v226 = vpack.c.b16 %v218, %v217
    %235 = vmatprep.subr.bf16.mxu0 0
    %236 = vmatpush1.bf16.msra.mxu0 %v219
    %237 = vmatprep.subr.bf16.mxu0 0
    %238 = vmatpush1.bf16.msra.mxu0 %v220
    %239 = vmatprep.subr.bf16.mxu0 0
    %240 = vmatpush1.bf16.msra.mxu0 %v221
    %241 = vmatprep.subr.bf16.mxu0 0
    %242 = vmatpush1.bf16.msra.mxu0 %v222
    %243 = vmatprep.subr.bf16.mxu0 0
    %244 = vmatpush1.bf16.msra.mxu0 %v223
    %245 = vmatprep.subr.bf16.mxu0 0
    %246 = vmatpush1.bf16.msra.mxu0 %v224
    %247 = vmatprep.subr.bf16.mxu0 0
    %248 = vmatpush1.bf16.msra.mxu0 %v225
    %249 = vmatprep.subr.bf16.mxu0 0
    %250 = vmatpush1.bf16.msra.mxu0 %v226
    %251 = vmatprep.subr.bf16.mxu0 0
    %252 = vmatpush1.bf16.msra.mxu0 0
    %253 = vmatprep.subr.bf16.mxu0 0
    %254 = vmatpush1.bf16.msra.mxu0 0
    %255 = vmatprep.subr.bf16.mxu0 0
    %256 = vmatpush1.bf16.msra.mxu0 0
    %257 = vmatprep.subr.bf16.mxu0 0
    %258 = vmatpush1.bf16.msra.mxu0 0
    %259 = vmatprep.subr.bf16.mxu0 0
    %260 = vmatpush1.bf16.msra.mxu0 0
    %261 = vmatprep.subr.bf16.mxu0 0
    %262 = vmatpush1.bf16.msra.mxu0 0
    %263 = vmatprep.subr.bf16.mxu0 0
    %264 = vmatpush1.bf16.msra.mxu0 0
    %265 = vmatprep.subr.bf16.mxu0 0
    %266 = vmatpush1.bf16.msra.mxu0 0
    %267 = vmatprep.mubr.bf16.mxu0 0
    %268 = vmatmul.mubr.bf16.gmra.mrb[0].mxu0 %v169
    %v269 = vpop.f32.mrb[0].mxu0
    %v270 = vadd.f32 0.0, %v269
    %v271 = vpop.f32.mrb[0].mxu0
    %v272 = vpop.f32.mrb[0].mxu0
    %v273 = vpop.f32.mrb[0].mxu0
    %274 = vdwg.mxu0
    %v275 = vld [vmem:[#allocation5 + $0x6] sm:$0x1]
    %v276 = vadd.f32 %v270, %v275
    %v277 = vlaneseq
    %v278 = vshrl.u32 %v277, 7
    %v279 = vsub.s32 0, %v278
    %v280 = vrot.slane %v276, %v279
    %281 = vst [vmem:[#allocation8] sm:$0xff] %v280
    %282 = vst [vmem:[#allocation8 + $0x8] sm:$0xff] %v280
    %283 = vst [vmem:[#allocation8 + $0x10] sm:$0xff] %v280
    %284 = vst [vmem:[#allocation8 + $0x18] sm:$0xff] %v280
    %285 = vst [vmem:[#allocation8 + $0x20] sm:$0xff] %v280
    %286 = vst [vmem:[#allocation8 + $0x28] sm:$0xff] %v280
    %287 = vst [vmem:[#allocation8 + $0x30] sm:$0xff] %v280
    %288 = vst [vmem:[#allocation8 + $0x38] sm:$0xff] %v280
    %v289 = vld [vmem:[#allocation2] sm:$0xf]
    %v290 = vld [vmem:[#allocation2 + $0x4] sm:$0xf]
    %v291 = vld [vmem:[#allocation2 + $0x8] sm:$0xf]
    %v292 = vld [vmem:[#allocation2 + $0xc] sm:$0xf]
    %v293 = vld [vmem:[#allocation2 + $0x10] sm:$0xf]
    %v294 = vld [vmem:[#allocation2 + $0x14] sm:$0xf]
    %v295 = vld [vmem:[#allocation2 + $0x18] sm:$0xf]
    %v296 = vld [vmem:[#allocation2 + $0x1c] sm:$0xf]
    %v297 = vld [vmem:[#allocation2 + $0x20] sm:$0xf]
    %v298 = vld [vmem:[#allocation2 + $0x24] sm:$0xf]
    %v299 = vld [vmem:[#allocation2 + $0x28] sm:$0xf]
    %v300 = vld [vmem:[#allocation2 + $0x2c] sm:$0xf]
    %v301 = vld [vmem:[#allocation2 + $0x30] sm:$0xf]
    %v302 = vld [vmem:[#allocation2 + $0x34] sm:$0xf]
    %v303 = vld [vmem:[#allocation2 + $0x38] sm:$0xf]
    %v304 = vld [vmem:[#allocation2 + $0x3c] sm:$0xf]
    %v305 = vld [vmem:[#allocation5 + $0x2] sm:$0x1]
    %v306 = vlaneseq
    %v307 = vshrl.u32 %v306, 7
    %v308 = vsub.s32 0, %v307
    %v309 = vrot.slane %v305, %v308
    %v326 = vunpack.c.l.b16 %v289
    %v327 = vunpack.c.l.b16 %v290
    %v328 = vunpack.c.l.b16 %v291
    %v329 = vunpack.c.l.b16 %v292
    %v330 = vunpack.c.l.b16 %v293
    %v331 = vunpack.c.l.b16 %v294
    %v332 = vunpack.c.l.b16 %v295
    %v333 = vunpack.c.l.b16 %v296
    %v334 = vunpack.c.l.b16 %v297
    %v335 = vunpack.c.l.b16 %v298
    %v336 = vunpack.c.l.b16 %v299
    %v337 = vunpack.c.l.b16 %v300
    %v338 = vunpack.c.l.b16 %v301
    %v339 = vunpack.c.l.b16 %v302
    %v340 = vunpack.c.l.b16 %v303
    %v341 = vunpack.c.l.b16 %v304
    %v342 = vpack.c.b16 %v327, %v326
    %v343 = vpack.c.b16 %v329, %v328
    %v344 = vpack.c.b16 %v331, %v330
    %v345 = vpack.c.b16 %v333, %v332
    %v346 = vpack.c.b16 %v335, %v334
    %v347 = vpack.c.b16 %v337, %v336
    %v348 = vpack.c.b16 %v339, %v338
    %v349 = vpack.c.b16 %v341, %v340
    %358 = vmatprep.subr.bf16.mxu0 0
    %359 = vmatpush1.bf16.msra.mxu0 %v342
    %360 = vmatprep.subr.bf16.mxu0 0
    %361 = vmatpush1.bf16.msra.mxu0 %v343
    %362 = vmatprep.subr.bf16.mxu0 0
    %363 = vmatpush1.bf16.msra.mxu0 %v344
    %364 = vmatprep.subr.bf16.mxu0 0
    %365 = vmatpush1.bf16.msra.mxu0 %v345
    %366 = vmatprep.subr.bf16.mxu0 0
    %367 = vmatpush1.bf16.msra.mxu0 %v346
    %368 = vmatprep.subr.bf16.mxu0 0
    %369 = vmatpush1.bf16.msra.mxu0 %v347
    %370 = vmatprep.subr.bf16.mxu0 0
    %371 = vmatpush1.bf16.msra.mxu0 %v348
    %372 = vmatprep.subr.bf16.mxu0 0
    %373 = vmatpush1.bf16.msra.mxu0 %v349
    %374 = vmatprep.subr.bf16.mxu0 0
    %375 = vmatpush1.bf16.msra.mxu0 0
    %376 = vmatprep.subr.bf16.mxu0 0
    %377 = vmatpush1.bf16.msra.mxu0 0
    %378 = vmatprep.subr.bf16.mxu0 0
    %379 = vmatpush1.bf16.msra.mxu0 0
    %380 = vmatprep.subr.bf16.mxu0 0
    %381 = vmatpush1.bf16.msra.mxu0 0
    %382 = vmatprep.subr.bf16.mxu0 0
    %383 = vmatpush1.bf16.msra.mxu0 0
    %384 = vmatprep.subr.bf16.mxu0 0
    %385 = vmatpush1.bf16.msra.mxu0 0
    %386 = vmatprep.subr.bf16.mxu0 0
    %387 = vmatpush1.bf16.msra.mxu0 0
    %388 = vmatprep.subr.bf16.mxu0 0
    %389 = vmatpush1.bf16.msra.mxu0 0
    %390 = vmatprep.mubr.bf16.mxu0 0
    %391 = vmatmul.mubr.bf16.gmra.mrb[0].mxu0 %v55
    %v392 = vpop.f32.mrb[0].mxu0
    %v393 = vadd.f32 %v309, %v392
    %v394 = vpop.f32.mrb[0].mxu0
    %v395 = vpop.f32.mrb[0].mxu0
    %v396 = vpop.f32.mrb[0].mxu0
    %397 = vdwg.mxu0
    %vm398 = vcmp.ge.f32.partialorder %v393, 0.0
    %v399 = vmul.f32 %v393, 0.01
    %v400 = vsel %vm398, %v393, %v399
    %v401 = vpack.c.bf16 %v400, %v400
    %s402 = scalar_lea.vmem [#allocation2], 64
    %v403 = vld [vmem:[%s402] sm:$0xf]
    %v404 = vld [vmem:[%s402 + $0x4] sm:$0xf]
    %v405 = vld [vmem:[%s402 + $0x8] sm:$0xf]
    %v406 = vld [vmem:[%s402 + $0xc] sm:$0xf]
    %v407 = vld [vmem:[%s402 + $0x10] sm:$0xf]
    %v408 = vld [vmem:[%s402 + $0x14] sm:$0xf]
    %v409 = vld [vmem:[%s402 + $0x18] sm:$0xf]
    %v410 = vld [vmem:[%s402 + $0x1c] sm:$0xf]
    %v411 = vld [vmem:[%s402 + $0x20] sm:$0xf]
    %v412 = vld [vmem:[%s402 + $0x24] sm:$0xf]
    %v413 = vld [vmem:[%s402 + $0x28] sm:$0xf]
    %v414 = vld [vmem:[%s402 + $0x2c] sm:$0xf]
    %v415 = vld [vmem:[%s402 + $0x30] sm:$0xf]
    %v416 = vld [vmem:[%s402 + $0x34] sm:$0xf]
    %v417 = vld [vmem:[%s402 + $0x38] sm:$0xf]
    %v418 = vld [vmem:[%s402 + $0x3c] sm:$0xf]
    %v419 = vld [vmem:[#allocation5 + $0x3] sm:$0x1]
    %v420 = vlaneseq
    %v421 = vshrl.u32 %v420, 7
    %v422 = vsub.s32 0, %v421
    %v423 = vrot.slane %v419, %v422
    %v440 = vunpack.c.l.b16 %v403
    %v441 = vunpack.c.l.b16 %v404
    %v442 = vunpack.c.l.b16 %v405
    %v443 = vunpack.c.l.b16 %v406
    %v444 = vunpack.c.l.b16 %v407
    %v445 = vunpack.c.l.b16 %v408
    %v446 = vunpack.c.l.b16 %v409
    %v447 = vunpack.c.l.b16 %v410
    %v448 = vunpack.c.l.b16 %v411
    %v449 = vunpack.c.l.b16 %v412
    %v450 = vunpack.c.l.b16 %v413
    %v451 = vunpack.c.l.b16 %v414
    %v452 = vunpack.c.l.b16 %v415
    %v453 = vunpack.c.l.b16 %v416
    %v454 = vunpack.c.l.b16 %v417
    %v455 = vunpack.c.l.b16 %v418
    %v456 = vpack.c.b16 %v441, %v440
    %v457 = vpack.c.b16 %v443, %v442
    %v458 = vpack.c.b16 %v445, %v444
    %v459 = vpack.c.b16 %v447, %v446
    %v460 = vpack.c.b16 %v449, %v448
    %v461 = vpack.c.b16 %v451, %v450
    %v462 = vpack.c.b16 %v453, %v452
    %v463 = vpack.c.b16 %v455, %v454
    %472 = vmatprep.subr.bf16.mxu0 0
    %473 = vmatpush1.bf16.msra.mxu0 %v456
    %474 = vmatprep.subr.bf16.mxu0 0
    %475 = vmatpush1.bf16.msra.mxu0 %v457
    %476 = vmatprep.subr.bf16.mxu0 0
    %477 = vmatpush1.bf16.msra.mxu0 %v458
    %478 = vmatprep.subr.bf16.mxu0 0
    %479 = vmatpush1.bf16.msra.mxu0 %v459
    %480 = vmatprep.subr.bf16.mxu0 0
    %481 = vmatpush1.bf16.msra.mxu0 %v460
    %482 = vmatprep.subr.bf16.mxu0 0
    %483 = vmatpush1.bf16.msra.mxu0 %v461
    %484 = vmatprep.subr.bf16.mxu0 0
    %485 = vmatpush1.bf16.msra.mxu0 %v462
    %486 = vmatprep.subr.bf16.mxu0 0
    %487 = vmatpush1.bf16.msra.mxu0 %v463
    %488 = vmatprep.subr.bf16.mxu0 0
    %489 = vmatpush1.bf16.msra.mxu0 0
    %490 = vmatprep.subr.bf16.mxu0 0
    %491 = vmatpush1.bf16.msra.mxu0 0
    %492 = vmatprep.subr.bf16.mxu0 0
    %493 = vmatpush1.bf16.msra.mxu0 0
    %494 = vmatprep.subr.bf16.mxu0 0
    %495 = vmatpush1.bf16.msra.mxu0 0
    %496 = vmatprep.subr.bf16.mxu0 0
    %497 = vmatpush1.bf16.msra.mxu0 0
    %498 = vmatprep.subr.bf16.mxu0 0
    %499 = vmatpush1.bf16.msra.mxu0 0
    %500 = vmatprep.subr.bf16.mxu0 0
    %501 = vmatpush1.bf16.msra.mxu0 0
    %502 = vmatprep.subr.bf16.mxu0 0
    %503 = vmatpush1.bf16.msra.mxu0 0
    %504 = vmatprep.mubr.bf16.mxu0 0
    %505 = vmatmul.mubr.bf16.gmra.mrb[0].mxu0 %v401
    %v506 = vpop.f32.mrb[0].mxu0
    %v507 = vadd.f32 %v423, %v506
    %v508 = vpop.f32.mrb[0].mxu0
    %v509 = vpop.f32.mrb[0].mxu0
    %v510 = vpop.f32.mrb[0].mxu0
    %511 = vdwg.mxu0
    %vm512 = vcmp.ge.f32.partialorder %v507, 0.0
    %v513 = vmul.f32 %v507, 0.01
    %v514 = vsel %vm512, %v507, %v513
    %v515 = vpack.c.bf16 %v514, %v514
    %s516 = scalar_lea.vmem [#allocation2], 128
    %v517 = vld [vmem:[%s516] sm:$0xf]
    %v518 = vld [vmem:[%s516 + $0x4] sm:$0xf]
    %v519 = vld [vmem:[%s516 + $0x8] sm:$0xf]
    %v520 = vld [vmem:[%s516 + $0xc] sm:$0xf]
    %v521 = vld [vmem:[%s516 + $0x10] sm:$0xf]
    %v522 = vld [vmem:[%s516 + $0x14] sm:$0xf]
    %v523 = vld [vmem:[%s516 + $0x18] sm:$0xf]
    %v524 = vld [vmem:[%s516 + $0x1c] sm:$0xf]
    %v525 = vld [vmem:[%s516 + $0x20] sm:$0xf]
    %v526 = vld [vmem:[%s516 + $0x24] sm:$0xf]
    %v527 = vld [vmem:[%s516 + $0x28] sm:$0xf]
    %v528 = vld [vmem:[%s516 + $0x2c] sm:$0xf]
    %v529 = vld [vmem:[%s516 + $0x30] sm:$0xf]
    %v530 = vld [vmem:[%s516 + $0x34] sm:$0xf]
    %v531 = vld [vmem:[%s516 + $0x38] sm:$0xf]
    %v532 = vld [vmem:[%s516 + $0x3c] sm:$0xf]
    %v533 = vld [vmem:[#allocation5 + $0x4] sm:$0x1]
    %v534 = vlaneseq
    %v535 = vshrl.u32 %v534, 7
    %v536 = vsub.s32 0, %v535
    %v537 = vrot.slane %v533, %v536
    %v554 = vunpack.c.l.b16 %v517
    %v555 = vunpack.c.l.b16 %v518
    %v556 = vunpack.c.l.b16 %v519
    %v557 = vunpack.c.l.b16 %v520
    %v558 = vunpack.c.l.b16 %v521
    %v559 = vunpack.c.l.b16 %v522
    %v560 = vunpack.c.l.b16 %v523
    %v561 = vunpack.c.l.b16 %v524
    %v562 = vunpack.c.l.b16 %v525
    %v563 = vunpack.c.l.b16 %v526
    %v564 = vunpack.c.l.b16 %v527
    %v565 = vunpack.c.l.b16 %v528
    %v566 = vunpack.c.l.b16 %v529
    %v567 = vunpack.c.l.b16 %v530
    %v568 = vunpack.c.l.b16 %v531
    %v569 = vunpack.c.l.b16 %v532
    %v570 = vpack.c.b16 %v555, %v554
    %v571 = vpack.c.b16 %v557, %v556
    %v572 = vpack.c.b16 %v559, %v558
    %v573 = vpack.c.b16 %v561, %v560
    %v574 = vpack.c.b16 %v563, %v562
    %v575 = vpack.c.b16 %v565, %v564
    %v576 = vpack.c.b16 %v567, %v566
    %v577 = vpack.c.b16 %v569, %v568
    %586 = vmatprep.subr.bf16.mxu0 0
    %587 = vmatpush1.bf16.msra.mxu0 %v570
    %588 = vmatprep.subr.bf16.mxu0 0
    %589 = vmatpush1.bf16.msra.mxu0 %v571
    %590 = vmatprep.subr.bf16.mxu0 0
    %591 = vmatpush1.bf16.msra.mxu0 %v572
    %592 = vmatprep.subr.bf16.mxu0 0
    %593 = vmatpush1.bf16.msra.mxu0 %v573
    %594 = vmatprep.subr.bf16.mxu0 0
    %595 = vmatpush1.bf16.msra.mxu0 %v574
    %596 = vmatprep.subr.bf16.mxu0 0
    %597 = vmatpush1.bf16.msra.mxu0 %v575
    %598 = vmatprep.subr.bf16.mxu0 0
    %599 = vmatpush1.bf16.msra.mxu0 %v576
    %600 = vmatprep.subr.bf16.mxu0 0
    %601 = vmatpush1.bf16.msra.mxu0 %v577
    %602 = vmatprep.subr.bf16.mxu0 0
    %603 = vmatpush1.bf16.msra.mxu0 0
    %604 = vmatprep.subr.bf16.mxu0 0
    %605 = vmatpush1.bf16.msra.mxu0 0
    %606 = vmatprep.subr.bf16.mxu0 0
    %607 = vmatpush1.bf16.msra.mxu0 0
    %608 = vmatprep.subr.bf16.mxu0 0
    %609 = vmatpush1.bf16.msra.mxu0 0
    %610 = vmatprep.subr.bf16.mxu0 0
    %611 = vmatpush1.bf16.msra.mxu0 0
    %612 = vmatprep.subr.bf16.mxu0 0
    %613 = vmatpush1.bf16.msra.mxu0 0
    %614 = vmatprep.subr.bf16.mxu0 0
    %615 = vmatpush1.bf16.msra.mxu0 0
    %616 = vmatprep.subr.bf16.mxu0 0
    %617 = vmatpush1.bf16.msra.mxu0 0
    %618 = vmatprep.mubr.bf16.mxu0 0
    %619 = vmatmul.mubr.bf16.gmra.mrb[0].mxu0 %v515
    %v620 = vpop.f32.mrb[0].mxu0
    %v621 = vadd.f32 %v537, %v620
    %v622 = vpop.f32.mrb[0].mxu0
    %v623 = vpop.f32.mrb[0].mxu0
    %v624 = vpop.f32.mrb[0].mxu0
    %625 = vdwg.mxu0
    %vm626 = vcmp.ge.f32.partialorder %v621, 0.0
    %v627 = vmul.f32 %v621, 0.01
    %v628 = vsel %vm626, %v621, %v627
    %v629 = vpack.c.bf16 %v628, %v628
    %630 = vst [vmem:[#allocation7] sm:$0xff] %v628
    %s631 = scalar_lea.vmem [#allocation2], 320
    %v632 = vld [vmem:[%s631] sm:$0xf]
    %v633 = vld [vmem:[%s631 + $0x4] sm:$0xf]
    %v634 = vld [vmem:[%s631 + $0x8] sm:$0xf]
    %v635 = vld [vmem:[%s631 + $0xc] sm:$0xf]
    %v636 = vld [vmem:[%s631 + $0x10] sm:$0xf]
    %v637 = vld [vmem:[%s631 + $0x14] sm:$0xf]
    %v638 = vld [vmem:[%s631 + $0x18] sm:$0xf]
    %v639 = vld [vmem:[%s631 + $0x1c] sm:$0xf]
    %v640 = vld [vmem:[%s631 + $0x20] sm:$0xf]
    %v641 = vld [vmem:[%s631 + $0x24] sm:$0xf]
    %v642 = vld [vmem:[%s631 + $0x28] sm:$0xf]
    %v643 = vld [vmem:[%s631 + $0x2c] sm:$0xf]
    %v644 = vld [vmem:[%s631 + $0x30] sm:$0xf]
    %v645 = vld [vmem:[%s631 + $0x34] sm:$0xf]
    %v646 = vld [vmem:[%s631 + $0x38] sm:$0xf]
    %v647 = vld [vmem:[%s631 + $0x3c] sm:$0xf]
    %v648 = vld [vmem:[#allocation5 + $0x8] sm:$0x1]
    %v649 = vlaneseq
    %v650 = vshrl.u32 %v649, 7
    %v651 = vsub.s32 0, %v650
    %v652 = vrot.slane %v648, %v651
    %v669 = vunpack.c.l.b16 %v632
    %v670 = vunpack.c.l.b16 %v633
    %v671 = vunpack.c.l.b16 %v634
    %v672 = vunpack.c.l.b16 %v635
    %v673 = vunpack.c.l.b16 %v636
    %v674 = vunpack.c.l.b16 %v637
    %v675 = vunpack.c.l.b16 %v638
    %v676 = vunpack.c.l.b16 %v639
    %v677 = vunpack.c.l.b16 %v640
    %v678 = vunpack.c.l.b16 %v641
    %v679 = vunpack.c.l.b16 %v642
    %v680 = vunpack.c.l.b16 %v643
    %v681 = vunpack.c.l.b16 %v644
    %v682 = vunpack.c.l.b16 %v645
    %v683 = vunpack.c.l.b16 %v646
    %v684 = vunpack.c.l.b16 %v647
    %v685 = vpack.c.b16 %v670, %v669
    %v686 = vpack.c.b16 %v672, %v671
    %v687 = vpack.c.b16 %v674, %v673
    %v688 = vpack.c.b16 %v676, %v675
    %v689 = vpack.c.b16 %v678, %v677
    %v690 = vpack.c.b16 %v680, %v679
    %v691 = vpack.c.b16 %v682, %v681
    %v692 = vpack.c.b16 %v684, %v683
    %701 = vmatprep.subr.bf16.mxu0 0
    %702 = vmatpush1.bf16.msra.mxu0 %v685
    %703 = vmatprep.subr.bf16.mxu0 0
    %704 = vmatpush1.bf16.msra.mxu0 %v686
    %705 = vmatprep.subr.bf16.mxu0 0
    %706 = vmatpush1.bf16.msra.mxu0 %v687
    %707 = vmatprep.subr.bf16.mxu0 0
    %708 = vmatpush1.bf16.msra.mxu0 %v688
    %709 = vmatprep.subr.bf16.mxu0 0
    %710 = vmatpush1.bf16.msra.mxu0 %v689
    %711 = vmatprep.subr.bf16.mxu0 0
    %712 = vmatpush1.bf16.msra.mxu0 %v690
    %713 = vmatprep.subr.bf16.mxu0 0
    %714 = vmatpush1.bf16.msra.mxu0 %v691
    %715 = vmatprep.subr.bf16.mxu0 0
    %716 = vmatpush1.bf16.msra.mxu0 %v692
    %717 = vmatprep.subr.bf16.mxu0 0
    %718 = vmatpush1.bf16.msra.mxu0 0
    %719 = vmatprep.subr.bf16.mxu0 0
    %720 = vmatpush1.bf16.msra.mxu0 0
    %721 = vmatprep.subr.bf16.mxu0 0
    %722 = vmatpush1.bf16.msra.mxu0 0
    %723 = vmatprep.subr.bf16.mxu0 0
    %724 = vmatpush1.bf16.msra.mxu0 0
    %725 = vmatprep.subr.bf16.mxu0 0
    %726 = vmatpush1.bf16.msra.mxu0 0
    %727 = vmatprep.subr.bf16.mxu0 0
    %728 = vmatpush1.bf16.msra.mxu0 0
    %729 = vmatprep.subr.bf16.mxu0 0
    %730 = vmatpush1.bf16.msra.mxu0 0
    %731 = vmatprep.subr.bf16.mxu0 0
    %732 = vmatpush1.bf16.msra.mxu0 0
    %733 = vmatprep.mubr.bf16.mxu0 0
    %734 = vmatmul.mubr.bf16.gmra.mrb[0].mxu0 %v629
    %v735 = vpop.f32.mrb[0].mxu0
    %v736 = vadd.f32 %v652, %v735
    %v737 = vpop.f32.mrb[0].mxu0
    %v738 = vpop.f32.mrb[0].mxu0
    %v739 = vpop.f32.mrb[0].mxu0
    %740 = vdwg.mxu0
    %vm741 = vcmp.ge.f32.partialorder %v736, 0.0
    %v742 = vmul.f32 %v736, 0.01
    %v743 = vsel %vm741, %v736, %v742
    %v744 = vpack.c.bf16 %v743, %v743
    %s745 = scalar_lea.vmem [#allocation2], 384
    %v746 = vld [vmem:[%s745] sm:$0xf]
    %v747 = vld [vmem:[%s745 + $0x4] sm:$0xf]
    %v748 = vld [vmem:[%s745 + $0x8] sm:$0xf]
    %v749 = vld [vmem:[%s745 + $0xc] sm:$0xf]
    %v750 = vld [vmem:[%s745 + $0x10] sm:$0xf]
    %v751 = vld [vmem:[%s745 + $0x14] sm:$0xf]
    %v752 = vld [vmem:[%s745 + $0x18] sm:$0xf]
    %v753 = vld [vmem:[%s745 + $0x1c] sm:$0xf]
    %v754 = vld [vmem:[%s745 + $0x20] sm:$0xf]
    %v755 = vld [vmem:[%s745 + $0x24] sm:$0xf]
    %v756 = vld [vmem:[%s745 + $0x28] sm:$0xf]
    %v757 = vld [vmem:[%s745 + $0x2c] sm:$0xf]
    %v758 = vld [vmem:[%s745 + $0x30] sm:$0xf]
    %v759 = vld [vmem:[%s745 + $0x34] sm:$0xf]
    %v760 = vld [vmem:[%s745 + $0x38] sm:$0xf]
    %v761 = vld [vmem:[%s745 + $0x3c] sm:$0xf]
    %v778 = vunpack.c.l.b16 %v746
    %v779 = vunpack.c.l.b16 %v747
    %v780 = vunpack.c.l.b16 %v748
    %v781 = vunpack.c.l.b16 %v749
    %v782 = vunpack.c.l.b16 %v750
    %v783 = vunpack.c.l.b16 %v751
    %v784 = vunpack.c.l.b16 %v752
    %v785 = vunpack.c.l.b16 %v753
    %v786 = vunpack.c.l.b16 %v754
    %v787 = vunpack.c.l.b16 %v755
    %v788 = vunpack.c.l.b16 %v756
    %v789 = vunpack.c.l.b16 %v757
    %v790 = vunpack.c.l.b16 %v758
    %v791 = vunpack.c.l.b16 %v759
    %v792 = vunpack.c.l.b16 %v760
    %v793 = vunpack.c.l.b16 %v761
    %v794 = vpack.c.b16 %v779, %v778
    %v795 = vpack.c.b16 %v781, %v780
    %v796 = vpack.c.b16 %v783, %v782
    %v797 = vpack.c.b16 %v785, %v784
    %v798 = vpack.c.b16 %v787, %v786
    %v799 = vpack.c.b16 %v789, %v788
    %v800 = vpack.c.b16 %v791, %v790
    %v801 = vpack.c.b16 %v793, %v792
    %810 = vmatprep.subr.bf16.mxu0 0
    %811 = vmatpush1.bf16.msra.mxu0 %v794
    %812 = vmatprep.subr.bf16.mxu0 0
    %813 = vmatpush1.bf16.msra.mxu0 %v795
    %814 = vmatprep.subr.bf16.mxu0 0
    %815 = vmatpush1.bf16.msra.mxu0 %v796
    %816 = vmatprep.subr.bf16.mxu0 0
    %817 = vmatpush1.bf16.msra.mxu0 %v797
    %818 = vmatprep.subr.bf16.mxu0 0
    %819 = vmatpush1.bf16.msra.mxu0 %v798
    %820 = vmatprep.subr.bf16.mxu0 0
    %821 = vmatpush1.bf16.msra.mxu0 %v799
    %822 = vmatprep.subr.bf16.mxu0 0
    %823 = vmatpush1.bf16.msra.mxu0 %v800
    %824 = vmatprep.subr.bf16.mxu0 0
    %825 = vmatpush1.bf16.msra.mxu0 %v801
    %826 = vmatprep.subr.bf16.mxu0 0
    %827 = vmatpush1.bf16.msra.mxu0 0
    %828 = vmatprep.subr.bf16.mxu0 0
    %829 = vmatpush1.bf16.msra.mxu0 0
    %830 = vmatprep.subr.bf16.mxu0 0
    %831 = vmatpush1.bf16.msra.mxu0 0
    %832 = vmatprep.subr.bf16.mxu0 0
    %833 = vmatpush1.bf16.msra.mxu0 0
    %834 = vmatprep.subr.bf16.mxu0 0
    %835 = vmatpush1.bf16.msra.mxu0 0
    %836 = vmatprep.subr.bf16.mxu0 0
    %837 = vmatpush1.bf16.msra.mxu0 0
    %838 = vmatprep.subr.bf16.mxu0 0
    %839 = vmatpush1.bf16.msra.mxu0 0
    %840 = vmatprep.subr.bf16.mxu0 0
    %841 = vmatpush1.bf16.msra.mxu0 0
    %842 = vmatprep.mubr.bf16.mxu0 0
    %843 = vmatmul.mubr.bf16.gmra.mrb[0].mxu0 %v744
    %v844 = vpop.f32.mrb[0].mxu0
    %v845 = vadd.f32 0.0, %v844
    %v846 = vpop.f32.mrb[0].mxu0
    %v847 = vpop.f32.mrb[0].mxu0
    %v848 = vpop.f32.mrb[0].mxu0
    %849 = vdwg.mxu0
    %v850 = vld [vmem:[#allocation5 + $0xa] sm:$0x1]
    %v851 = vlaneseq
    %v852 = vshrl.u32 %v851, 7
    %v853 = vsub.s32 0, %v852
    %v854 = vrot.slane %v850, %v853
    %v855 = vmul.f32 %v743, %v854
    %856 = vadd.xlane.f32.xlu0 %v855
    %v857 = vpop.xlane.xlu0 %856
    %v858 = vsub.f32 -inf, %v857
    %v859 = vmul.f32 %v858, 1.442695
    %v860 = vpow.pop %v859
    %v861 = vsub.f32 %v857, %v857
    %v862 = vmul.f32 %v861, 1.442695
    %v863 = vpow.pop %v862
    %v864 = vmul.f32 %v860, 0.0
    %v865 = vadd.f32 %v864, %v863
    %v866 = vmul.f32 %v863, %v845
    %v867 = vadd.f32 %v864, %v866
    %v868 = vld [vmem:[#allocation2] sm:$0xf]
    %v869 = vld [vmem:[#allocation2 + $0x4] sm:$0xf]
    %v870 = vld [vmem:[#allocation2 + $0x8] sm:$0xf]
    %v871 = vld [vmem:[#allocation2 + $0xc] sm:$0xf]
    %v872 = vld [vmem:[#allocation2 + $0x10] sm:$0xf]
    %v873 = vld [vmem:[#allocation2 + $0x14] sm:$0xf]
    %v874 = vld [vmem:[#allocation2 + $0x18] sm:$0xf]
    %v875 = vld [vmem:[#allocation2 + $0x1c] sm:$0xf]
    %v876 = vld [vmem:[#allocation2 + $0x20] sm:$0xf]
    %v877 = vld [vmem:[#allocation2 + $0x24] sm:$0xf]
    %v878 = vld [vmem:[#allocation2 + $0x28] sm:$0xf]
    %v879 = vld [vmem:[#allocation2 + $0x2c] sm:$0xf]
    %v880 = vld [vmem:[#allocation2 + $0x30] sm:$0xf]
    %v881 = vld [vmem:[#allocation2 + $0x34] sm:$0xf]
    %v882 = vld [vmem:[#allocation2 + $0x38] sm:$0xf]
    %v883 = vld [vmem:[#allocation2 + $0x3c] sm:$0xf]
    %v884 = vld [vmem:[#allocation5 + $0x2] sm:$0x1]
    %v885 = vlaneseq
    %v886 = vshrl.u32 %v885, 7
    %v887 = vsub.s32 0, %v886
    %v888 = vrot.slane %v884, %v887
    %v905 = vunpack.c.l.b16 %v868
    %v906 = vunpack.c.l.b16 %v869
    %v907 = vunpack.c.l.b16 %v870
    %v908 = vunpack.c.l.b16 %v871
    %v909 = vunpack.c.l.b16 %v872
    %v910 = vunpack.c.l.b16 %v873
    %v911 = vunpack.c.l.b16 %v874
    %v912 = vunpack.c.l.b16 %v875
    %v913 = vunpack.c.l.b16 %v876
    %v914 = vunpack.c.l.b16 %v877
    %v915 = vunpack.c.l.b16 %v878
    %v916 = vunpack.c.l.b16 %v879
    %v917 = vunpack.c.l.b16 %v880
    %v918 = vunpack.c.l.b16 %v881
    %v919 = vunpack.c.l.b16 %v882
    %v920 = vunpack.c.l.b16 %v883
    %v921 = vpack.c.b16 %v906, %v905
    %v922 = vpack.c.b16 %v908, %v907
    %v923 = vpack.c.b16 %v910, %v909
    %v924 = vpack.c.b16 %v912, %v911
    %v925 = vpack.c.b16 %v914, %v913
    %v926 = vpack.c.b16 %v916, %v915
    %v927 = vpack.c.b16 %v918, %v917
    %v928 = vpack.c.b16 %v920, %v919
    %937 = vmatprep.subr.bf16.mxu0 0
    %938 = vmatpush1.bf16.msra.mxu0 %v921
    %939 = vmatprep.subr.bf16.mxu0 0
    %940 = vmatpush1.bf16.msra.mxu0 %v922
    %941 = vmatprep.subr.bf16.mxu0 0
    %942 = vmatpush1.bf16.msra.mxu0 %v923
    %943 = vmatprep.subr.bf16.mxu0 0
    %944 = vmatpush1.bf16.msra.mxu0 %v924
    %945 = vmatprep.subr.bf16.mxu0 0
    %946 = vmatpush1.bf16.msra.mxu0 %v925
    %947 = vmatprep.subr.bf16.mxu0 0
    %948 = vmatpush1.bf16.msra.mxu0 %v926
    %949 = vmatprep.subr.bf16.mxu0 0
    %950 = vmatpush1.bf16.msra.mxu0 %v927
    %951 = vmatprep.subr.bf16.mxu0 0
    %952 = vmatpush1.bf16.msra.mxu0 %v928
    %953 = vmatprep.subr.bf16.mxu0 0
    %954 = vmatpush1.bf16.msra.mxu0 0
    %955 = vmatprep.subr.bf16.mxu0 0
    %956 = vmatpush1.bf16.msra.mxu0 0
    %957 = vmatprep.subr.bf16.mxu0 0
    %958 = vmatpush1.bf16.msra.mxu0 0
    %959 = vmatprep.subr.bf16.mxu0 0
    %960 = vmatpush1.bf16.msra.mxu0 0
    %961 = vmatprep.subr.bf16.mxu0 0
    %962 = vmatpush1.bf16.msra.mxu0 0
    %963 = vmatprep.subr.bf16.mxu0 0
    %964 = vmatpush1.bf16.msra.mxu0 0
    %965 = vmatprep.subr.bf16.mxu0 0
    %966 = vmatpush1.bf16.msra.mxu0 0
    %967 = vmatprep.subr.bf16.mxu0 0
    %968 = vmatpush1.bf16.msra.mxu0 0
    %969 = vmatprep.mubr.bf16.mxu0 0
    %970 = vmatmul.mubr.bf16.gmra.mrb[0].mxu0 %v55
    %v971 = vpop.f32.mrb[0].mxu0
    %v972 = vadd.f32 %v888, %v971
    %v973 = vpop.f32.mrb[0].mxu0
    %v974 = vpop.f32.mrb[0].mxu0
    %v975 = vpop.f32.mrb[0].mxu0
    %976 = vdwg.mxu0
    %vm977 = vcmp.ge.f32.partialorder %v972, 0.0
    %v978 = vmul.f32 %v972, 0.01
    %v979 = vsel %vm977, %v972, %v978
    %v980 = vpack.c.bf16 %v979, %v979
    %v981 = vld [vmem:[%s402] sm:$0xf]
    %v982 = vld [vmem:[%s402 + $0x4] sm:$0xf]
    %v983 = vld [vmem:[%s402 + $0x8] sm:$0xf]
    %v984 = vld [vmem:[%s402 + $0xc] sm:$0xf]
    %v985 = vld [vmem:[%s402 + $0x10] sm:$0xf]
    %v986 = vld [vmem:[%s402 + $0x14] sm:$0xf]
    %v987 = vld [vmem:[%s402 + $0x18] sm:$0xf]
    %v988 = vld [vmem:[%s402 + $0x1c] sm:$0xf]
    %v989 = vld [vmem:[%s402 + $0x20] sm:$0xf]
    %v990 = vld [vmem:[%s402 + $0x24] sm:$0xf]
    %v991 = vld [vmem:[%s402 + $0x28] sm:$0xf]
    %v992 = vld [vmem:[%s402 + $0x2c] sm:$0xf]
    %v993 = vld [vmem:[%s402 + $0x30] sm:$0xf]
    %v994 = vld [vmem:[%s402 + $0x34] sm:$0xf]
    %v995 = vld [vmem:[%s402 + $0x38] sm:$0xf]
    %v996 = vld [vmem:[%s402 + $0x3c] sm:$0xf]
    %v997 = vld [vmem:[#allocation5 + $0x3] sm:$0x1]
    %v998 = vlaneseq
    %v999 = vshrl.u32 %v998, 7
    %v1000 = vsub.s32 0, %v999
    %v1001 = vrot.slane %v997, %v1000
    %v1018 = vunpack.c.l.b16 %v981
    %v1019 = vunpack.c.l.b16 %v982
    %v1020 = vunpack.c.l.b16 %v983
    %v1021 = vunpack.c.l.b16 %v984
    %v1022 = vunpack.c.l.b16 %v985
    %v1023 = vunpack.c.l.b16 %v986
    %v1024 = vunpack.c.l.b16 %v987
    %v1025 = vunpack.c.l.b16 %v988
    %v1026 = vunpack.c.l.b16 %v989
    %v1027 = vunpack.c.l.b16 %v990
    %v1028 = vunpack.c.l.b16 %v991
    %v1029 = vunpack.c.l.b16 %v992
    %v1030 = vunpack.c.l.b16 %v993
    %v1031 = vunpack.c.l.b16 %v994
    %v1032 = vunpack.c.l.b16 %v995
    %v1033 = vunpack.c.l.b16 %v996
    %v1034 = vpack.c.b16 %v1019, %v1018
    %v1035 = vpack.c.b16 %v1021, %v1020
    %v1036 = vpack.c.b16 %v1023, %v1022
    %v1037 = vpack.c.b16 %v1025, %v1024
    %v1038 = vpack.c.b16 %v1027, %v1026
    %v1039 = vpack.c.b16 %v1029, %v1028
    %v1040 = vpack.c.b16 %v1031, %v1030
    %v1041 = vpack.c.b16 %v1033, %v1032
    %1050 = vmatprep.subr.bf16.mxu0 0
    %1051 = vmatpush1.bf16.msra.mxu0 %v1034
    %1052 = vmatprep.subr.bf16.mxu0 0
    %1053 = vmatpush1.bf16.msra.mxu0 %v1035
    %1054 = vmatprep.subr.bf16.mxu0 0
    %1055 = vmatpush1.bf16.msra.mxu0 %v1036
    %1056 = vmatprep.subr.bf16.mxu0 0
    %1057 = vmatpush1.bf16.msra.mxu0 %v1037
    %1058 = vmatprep.subr.bf16.mxu0 0
    %1059 = vmatpush1.bf16.msra.mxu0 %v1038
    %1060 = vmatprep.subr.bf16.mxu0 0
    %1061 = vmatpush1.bf16.msra.mxu0 %v1039
    %1062 = vmatprep.subr.bf16.mxu0 0
    %1063 = vmatpush1.bf16.msra.mxu0 %v1040
    %1064 = vmatprep.subr.bf16.mxu0 0
    %1065 = vmatpush1.bf16.msra.mxu0 %v1041
    %1066 = vmatprep.subr.bf16.mxu0 0
    %1067 = vmatpush1.bf16.msra.mxu0 0
    %1068 = vmatprep.subr.bf16.mxu0 0
    %1069 = vmatpush1.bf16.msra.mxu0 0
    %1070 = vmatprep.subr.bf16.mxu0 0
    %1071 = vmatpush1.bf16.msra.mxu0 0
    %1072 = vmatprep.subr.bf16.mxu0 0
    %1073 = vmatpush1.bf16.msra.mxu0 0
    %1074 = vmatprep.subr.bf16.mxu0 0
    %1075 = vmatpush1.bf16.msra.mxu0 0
    %1076 = vmatprep.subr.bf16.mxu0 0
    %1077 = vmatpush1.bf16.msra.mxu0 0
    %1078 = vmatprep.subr.bf16.mxu0 0
    %1079 = vmatpush1.bf16.msra.mxu0 0
    %1080 = vmatprep.subr.bf16.mxu0 0
    %1081 = vmatpush1.bf16.msra.mxu0 0
    %1082 = vmatprep.mubr.bf16.mxu0 0
    %1083 = vmatmul.mubr.bf16.gmra.mrb[0].mxu0 %v980
    %v1084 = vpop.f32.mrb[0].mxu0
    %v1085 = vadd.f32 %v1001, %v1084
    %v1086 = vpop.f32.mrb[0].mxu0
    %v1087 = vpop.f32.mrb[0].mxu0
    %v1088 = vpop.f32.mrb[0].mxu0
    %1089 = vdwg.mxu0
    %vm1090 = vcmp.ge.f32.partialorder %v1085, 0.0
    %v1091 = vmul.f32 %v1085, 0.01
    %v1092 = vsel %vm1090, %v1085, %v1091
    %v1093 = vpack.c.bf16 %v1092, %v1092
    %v1094 = vld [vmem:[%s516] sm:$0xf]
    %v1095 = vld [vmem:[%s516 + $0x4] sm:$0xf]
    %v1096 = vld [vmem:[%s516 + $0x8] sm:$0xf]
    %v1097 = vld [vmem:[%s516 + $0xc] sm:$0xf]
    %v1098 = vld [vmem:[%s516 + $0x10] sm:$0xf]
    %v1099 = vld [vmem:[%s516 + $0x14] sm:$0xf]
    %v1100 = vld [vmem:[%s516 + $0x18] sm:$0xf]
    %v1101 = vld [vmem:[%s516 + $0x1c] sm:$0xf]
    %v1102 = vld [vmem:[%s516 + $0x20] sm:$0xf]
    %v1103 = vld [vmem:[%s516 + $0x24] sm:$0xf]
    %v1104 = vld [vmem:[%s516 + $0x28] sm:$0xf]
    %v1105 = vld [vmem:[%s516 + $0x2c] sm:$0xf]
    %v1106 = vld [vmem:[%s516 + $0x30] sm:$0xf]
    %v1107 = vld [vmem:[%s516 + $0x34] sm:$0xf]
    %v1108 = vld [vmem:[%s516 + $0x38] sm:$0xf]
    %v1109 = vld [vmem:[%s516 + $0x3c] sm:$0xf]
    %v1110 = vld [vmem:[#allocation5 + $0x4] sm:$0x1]
    %v1111 = vlaneseq
    %v1112 = vshrl.u32 %v1111, 7
    %v1113 = vsub.s32 0, %v1112
    %v1114 = vrot.slane %v1110, %v1113
    %v1131 = vunpack.c.l.b16 %v1094
    %v1132 = vunpack.c.l.b16 %v1095
    %v1133 = vunpack.c.l.b16 %v1096
    %v1134 = vunpack.c.l.b16 %v1097
    %v1135 = vunpack.c.l.b16 %v1098
    %v1136 = vunpack.c.l.b16 %v1099
    %v1137 = vunpack.c.l.b16 %v1100
    %v1138 = vunpack.c.l.b16 %v1101
    %v1139 = vunpack.c.l.b16 %v1102
    %v1140 = vunpack.c.l.b16 %v1103
    %v1141 = vunpack.c.l.b16 %v1104
    %v1142 = vunpack.c.l.b16 %v1105
    %v1143 = vunpack.c.l.b16 %v1106
    %v1144 = vunpack.c.l.b16 %v1107
    %v1145 = vunpack.c.l.b16 %v1108
    %v1146 = vunpack.c.l.b16 %v1109
    %v1147 = vpack.c.b16 %v1132, %v1131
    %v1148 = vpack.c.b16 %v1134, %v1133
    %v1149 = vpack.c.b16 %v1136, %v1135
    %v1150 = vpack.c.b16 %v1138, %v1137
    %v1151 = vpack.c.b16 %v1140, %v1139
    %v1152 = vpack.c.b16 %v1142, %v1141
    %v1153 = vpack.c.b16 %v1144, %v1143
    %v1154 = vpack.c.b16 %v1146, %v1145
    %1163 = vmatprep.subr.bf16.mxu0 0
    %1164 = vmatpush1.bf16.msra.mxu0 %v1147
    %1165 = vmatprep.subr.bf16.mxu0 0
    %1166 = vmatpush1.bf16.msra.mxu0 %v1148
    %1167 = vmatprep.subr.bf16.mxu0 0
    %1168 = vmatpush1.bf16.msra.mxu0 %v1149
    %1169 = vmatprep.subr.bf16.mxu0 0
    %1170 = vmatpush1.bf16.msra.mxu0 %v1150
    %1171 = vmatprep.subr.bf16.mxu0 0
    %1172 = vmatpush1.bf16.msra.mxu0 %v1151
    %1173 = vmatprep.subr.bf16.mxu0 0
    %1174 = vmatpush1.bf16.msra.mxu0 %v1152
    %1175 = vmatprep.subr.bf16.mxu0 0
    %1176 = vmatpush1.bf16.msra.mxu0 %v1153
    %1177 = vmatprep.subr.bf16.mxu0 0
    %1178 = vmatpush1.bf16.msra.mxu0 %v1154
    %1179 = vmatprep.subr.bf16.mxu0 0
    %1180 = vmatpush1.bf16.msra.mxu0 0
    %1181 = vmatprep.subr.bf16.mxu0 0
    %1182 = vmatpush1.bf16.msra.mxu0 0
    %1183 = vmatprep.subr.bf16.mxu0 0
    %1184 = vmatpush1.bf16.msra.mxu0 0
    %1185 = vmatprep.subr.bf16.mxu0 0
    %1186 = vmatpush1.bf16.msra.mxu0 0
    %1187 = vmatprep.subr.bf16.mxu0 0
    %1188 = vmatpush1.bf16.msra.mxu0 0
    %1189 = vmatprep.subr.bf16.mxu0 0
    %1190 = vmatpush1.bf16.msra.mxu0 0
    %1191 = vmatprep.subr.bf16.mxu0 0
    %1192 = vmatpush1.bf16.msra.mxu0 0
    %1193 = vmatprep.subr.bf16.mxu0 0
    %1194 = vmatpush1.bf16.msra.mxu0 0
    %1195 = vmatprep.mubr.bf16.mxu0 0
    %1196 = vmatmul.mubr.bf16.gmra.mrb[0].mxu0 %v1093
    %v1197 = vpop.f32.mrb[0].mxu0
    %v1198 = vadd.f32 %v1114, %v1197
    %v1199 = vpop.f32.mrb[0].mxu0
    %v1200 = vpop.f32.mrb[0].mxu0
    %v1201 = vpop.f32.mrb[0].mxu0
    %1202 = vdwg.mxu0
    %vm1203 = vcmp.ge.f32.partialorder %v1198, 0.0
    %v1204 = vmul.f32 %v1198, 0.01
    %v1205 = vsel %vm1203, %v1198, %v1204
    %v1206 = vpack.c.bf16 %v1205, %v1205
    %s1207 = scalar_lea.vmem [#allocation7], 8
    %1208 = vst [vmem:[%s1207] sm:$0xff] %v1205
    %v1209 = vld [vmem:[%s631] sm:$0xf]
    %v1210 = vld [vmem:[%s631 + $0x4] sm:$0xf]
    %v1211 = vld [vmem:[%s631 + $0x8] sm:$0xf]
    %v1212 = vld [vmem:[%s631 + $0xc] sm:$0xf]
    %v1213 = vld [vmem:[%s631 + $0x10] sm:$0xf]
    %v1214 = vld [vmem:[%s631 + $0x14] sm:$0xf]
    %v1215 = vld [vmem:[%s631 + $0x18] sm:$0xf]
    %v1216 = vld [vmem:[%s631 + $0x1c] sm:$0xf]
    %v1217 = vld [vmem:[%s631 + $0x20] sm:$0xf]
    %v1218 = vld [vmem:[%s631 + $0x24] sm:$0xf]
    %v1219 = vld [vmem:[%s631 + $0x28] sm:$0xf]
    %v1220 = vld [vmem:[%s631 + $0x2c] sm:$0xf]
    %v1221 = vld [vmem:[%s631 + $0x30] sm:$0xf]
    %v1222 = vld [vmem:[%s631 + $0x34] sm:$0xf]
    %v1223 = vld [vmem:[%s631 + $0x38] sm:$0xf]
    %v1224 = vld [vmem:[%s631 + $0x3c] sm:$0xf]
    %v1225 = vld [vmem:[#allocation5 + $0x8] sm:$0x1]
    %v1226 = vlaneseq
    %v1227 = vshrl.u32 %v1226, 7
    %v1228 = vsub.s32 0, %v1227
    %v1229 = vrot.slane %v1225, %v1228
    %v1246 = vunpack.c.l.b16 %v1209
    %v1247 = vunpack.c.l.b16 %v1210
    %v1248 = vunpack.c.l.b16 %v1211
    %v1249 = vunpack.c.l.b16 %v1212
    %v1250 = vunpack.c.l.b16 %v1213
    %v1251 = vunpack.c.l.b16 %v1214
    %v1252 = vunpack.c.l.b16 %v1215
    %v1253 = vunpack.c.l.b16 %v1216
    %v1254 = vunpack.c.l.b16 %v1217
    %v1255 = vunpack.c.l.b16 %v1218
    %v1256 = vunpack.c.l.b16 %v1219
    %v1257 = vunpack.c.l.b16 %v1220
    %v1258 = vunpack.c.l.b16 %v1221
    %v1259 = vunpack.c.l.b16 %v1222
    %v1260 = vunpack.c.l.b16 %v1223
    %v1261 = vunpack.c.l.b16 %v1224
    %v1262 = vpack.c.b16 %v1247, %v1246
    %v1263 = vpack.c.b16 %v1249, %v1248
    %v1264 = vpack.c.b16 %v1251, %v1250
    %v1265 = vpack.c.b16 %v1253, %v1252
    %v1266 = vpack.c.b16 %v1255, %v1254
    %v1267 = vpack.c.b16 %v1257, %v1256
    %v1268 = vpack.c.b16 %v1259, %v1258
    %v1269 = vpack.c.b16 %v1261, %v1260
    %1278 = vmatprep.subr.bf16.mxu0 0
    %1279 = vmatpush1.bf16.msra.mxu0 %v1262
    %1280 = vmatprep.subr.bf16.mxu0 0
    %1281 = vmatpush1.bf16.msra.mxu0 %v1263
    %1282 = vmatprep.subr.bf16.mxu0 0
    %1283 = vmatpush1.bf16.msra.mxu0 %v1264
    %1284 = vmatprep.subr.bf16.mxu0 0
    %1285 = vmatpush1.bf16.msra.mxu0 %v1265
    %1286 = vmatprep.subr.bf16.mxu0 0
    %1287 = vmatpush1.bf16.msra.mxu0 %v1266
    %1288 = vmatprep.subr.bf16.mxu0 0
    %1289 = vmatpush1.bf16.msra.mxu0 %v1267
    %1290 = vmatprep.subr.bf16.mxu0 0
    %1291 = vmatpush1.bf16.msra.mxu0 %v1268
    %1292 = vmatprep.subr.bf16.mxu0 0
    %1293 = vmatpush1.bf16.msra.mxu0 %v1269
    %1294 = vmatprep.subr.bf16.mxu0 0
    %1295 = vmatpush1.bf16.msra.mxu0 0
    %1296 = vmatprep.subr.bf16.mxu0 0
    %1297 = vmatpush1.bf16.msra.mxu0 0
    %1298 = vmatprep.subr.bf16.mxu0 0
    %1299 = vmatpush1.bf16.msra.mxu0 0
    %1300 = vmatprep.subr.bf16.mxu0 0
    %1301 = vmatpush1.bf16.msra.mxu0 0
    %1302 = vmatprep.subr.bf16.mxu0 0
    %1303 = vmatpush1.bf16.msra.mxu0 0
    %1304 = vmatprep.subr.bf16.mxu0 0
    %1305 = vmatpush1.bf16.msra.mxu0 0
    %1306 = vmatprep.subr.bf16.mxu0 0
    %1307 = vmatpush1.bf16.msra.mxu0 0
    %1308 = vmatprep.subr.bf16.mxu0 0
    %1309 = vmatpush1.bf16.msra.mxu0 0
    %1310 = vmatprep.mubr.bf16.mxu0 0
    %1311 = vmatmul.mubr.bf16.gmra.mrb[0].mxu0 %v1206
    %v1312 = vpop.f32.mrb[0].mxu0
    %v1313 = vadd.f32 %v1229, %v1312
    %v1314 = vpop.f32.mrb[0].mxu0
    %v1315 = vpop.f32.mrb[0].mxu0
    %v1316 = vpop.f32.mrb[0].mxu0
    %1317 = vdwg.mxu0
    %vm1318 = vcmp.ge.f32.partialorder %v1313, 0.0
    %v1319 = vmul.f32 %v1313, 0.01
    %v1320 = vsel %vm1318, %v1313, %v1319
    %v1321 = vpack.c.bf16 %v1320, %v1320
    %v1322 = vld [vmem:[%s745] sm:$0xf]
    %v1323 = vld [vmem:[%s745 + $0x4] sm:$0xf]
    %v1324 = vld [vmem:[%s745 + $0x8] sm:$0xf]
    %v1325 = vld [vmem:[%s745 + $0xc] sm:$0xf]
    %v1326 = vld [vmem:[%s745 + $0x10] sm:$0xf]
    %v1327 = vld [vmem:[%s745 + $0x14] sm:$0xf]
    %v1328 = vld [vmem:[%s745 + $0x18] sm:$0xf]
    %v1329 = vld [vmem:[%s745 + $0x1c] sm:$0xf]
    %v1330 = vld [vmem:[%s745 + $0x20] sm:$0xf]
    %v1331 = vld [vmem:[%s745 + $0x24] sm:$0xf]
    %v1332 = vld [vmem:[%s745 + $0x28] sm:$0xf]
    %v1333 = vld [vmem:[%s745 + $0x2c] sm:$0xf]
    %v1334 = vld [vmem:[%s745 + $0x30] sm:$0xf]
    %v1335 = vld [vmem:[%s745 + $0x34] sm:$0xf]
    %v1336 = vld [vmem:[%s745 + $0x38] sm:$0xf]
    %v1337 = vld [vmem:[%s745 + $0x3c] sm:$0xf]
    %v1354 = vunpack.c.l.b16 %v1322
    %v1355 = vunpack.c.l.b16 %v1323
    %v1356 = vunpack.c.l.b16 %v1324
    %v1357 = vunpack.c.l.b16 %v1325
    %v1358 = vunpack.c.l.b16 %v1326
    %v1359 = vunpack.c.l.b16 %v1327
    %v1360 = vunpack.c.l.b16 %v1328
    %v1361 = vunpack.c.l.b16 %v1329
    %v1362 = vunpack.c.l.b16 %v1330
    %v1363 = vunpack.c.l.b16 %v1331
    %v1364 = vunpack.c.l.b16 %v1332
    %v1365 = vunpack.c.l.b16 %v1333
    %v1366 = vunpack.c.l.b16 %v1334
    %v1367 = vunpack.c.l.b16 %v1335
    %v1368 = vunpack.c.l.b16 %v1336
    %v1369 = vunpack.c.l.b16 %v1337
    %v1370 = vpack.c.b16 %v1355, %v1354
    %v1371 = vpack.c.b16 %v1357, %v1356
    %v1372 = vpack.c.b16 %v1359, %v1358
    %v1373 = vpack.c.b16 %v1361, %v1360
    %v1374 = vpack.c.b16 %v1363, %v1362
    %v1375 = vpack.c.b16 %v1365, %v1364
    %v1376 = vpack.c.b16 %v1367, %v1366
    %v1377 = vpack.c.b16 %v1369, %v1368
    %1386 = vmatprep.subr.bf16.mxu0 0
    %1387 = vmatpush1.bf16.msra.mxu0 %v1370
    %1388 = vmatprep.subr.bf16.mxu0 0
    %1389 = vmatpush1.bf16.msra.mxu0 %v1371
    %1390 = vmatprep.subr.bf16.mxu0 0
    %1391 = vmatpush1.bf16.msra.mxu0 %v1372
    %1392 = vmatprep.subr.bf16.mxu0 0
    %1393 = vmatpush1.bf16.msra.mxu0 %v1373
    %1394 = vmatprep.subr.bf16.mxu0 0
    %1395 = vmatpush1.bf16.msra.mxu0 %v1374
    %1396 = vmatprep.subr.bf16.mxu0 0
    %1397 = vmatpush1.bf16.msra.mxu0 %v1375
    %1398 = vmatprep.subr.bf16.mxu0 0
    %1399 = vmatpush1.bf16.msra.mxu0 %v1376
    %1400 = vmatprep.subr.bf16.mxu0 0
    %1401 = vmatpush1.bf16.msra.mxu0 %v1377
    %1402 = vmatprep.subr.bf16.mxu0 0
    %1403 = vmatpush1.bf16.msra.mxu0 0
    %1404 = vmatprep.subr.bf16.mxu0 0
    %1405 = vmatpush1.bf16.msra.mxu0 0
    %1406 = vmatprep.subr.bf16.mxu0 0
    %1407 = vmatpush1.bf16.msra.mxu0 0
    %1408 = vmatprep.subr.bf16.mxu0 0
    %1409 = vmatpush1.bf16.msra.mxu0 0
    %1410 = vmatprep.subr.bf16.mxu0 0
    %1411 = vmatpush1.bf16.msra.mxu0 0
    %1412 = vmatprep.subr.bf16.mxu0 0
    %1413 = vmatpush1.bf16.msra.mxu0 0
    %1414 = vmatprep.subr.bf16.mxu0 0
    %1415 = vmatpush1.bf16.msra.mxu0 0
    %1416 = vmatprep.subr.bf16.mxu0 0
    %1417 = vmatpush1.bf16.msra.mxu0 0
    %1418 = vmatprep.mubr.bf16.mxu0 0
    %1419 = vmatmul.mubr.bf16.gmra.mrb[0].mxu0 %v1321
    %v1420 = vpop.f32.mrb[0].mxu0
    %v1421 = vadd.f32 0.0, %v1420
    %v1422 = vpop.f32.mrb[0].mxu0
    %v1423 = vpop.f32.mrb[0].mxu0
    %v1424 = vpop.f32.mrb[0].mxu0
    %1425 = vdwg.mxu0
    %v1426 = vld [vmem:[#allocation5 + $0xa] sm:$0x1]
    %v1427 = vlaneseq
    %v1428 = vshrl.u32 %v1427, 7
    %v1429 = vsub.s32 0, %v1428
    %v1430 = vrot.slane %v1426, %v1429
    %v1431 = vmul.f32 %v1320, %v1430
    %1432 = vadd.xlane.f32.xlu0 %v1431
    %v1433 = vpop.xlane.xlu0 %1432
    %v1434 = vmax.f32 %v857, %v1433
    %v1435 = vsub.f32 %v857, %v1434
    %v1436 = vmul.f32 %v1435, 1.442695
    %v1437 = vpow.pop %v1436
    %v1438 = vsub.f32 %v1433, %v1434
    %v1439 = vmul.f32 %v1438, 1.442695
    %v1440 = vpow.pop %v1439
    %v1441 = vmul.f32 %v1437, %v865
    %v1442 = vadd.f32 %v1441, %v1440
    %v1443 = vmul.f32 %v1437, %v867
    %v1444 = vmul.f32 %v1440, %v1421
    %v1445 = vadd.f32 %v1443, %v1444
    %v1446 = vld [vmem:[#allocation2] sm:$0xf]
    %v1447 = vld [vmem:[#allocation2 + $0x4] sm:$0xf]
    %v1448 = vld [vmem:[#allocation2 + $0x8] sm:$0xf]
    %v1449 = vld [vmem:[#allocation2 + $0xc] sm:$0xf]
    %v1450 = vld [vmem:[#allocation2 + $0x10] sm:$0xf]
    %v1451 = vld [vmem:[#allocation2 + $0x14] sm:$0xf]
    %v1452 = vld [vmem:[#allocation2 + $0x18] sm:$0xf]
    %v1453 = vld [vmem:[#allocation2 + $0x1c] sm:$0xf]
    %v1454 = vld [vmem:[#allocation2 + $0x20] sm:$0xf]
    %v1455 = vld [vmem:[#allocation2 + $0x24] sm:$0xf]
    %v1456 = vld [vmem:[#allocation2 + $0x28] sm:$0xf]
    %v1457 = vld [vmem:[#allocation2 + $0x2c] sm:$0xf]
    %v1458 = vld [vmem:[#allocation2 + $0x30] sm:$0xf]
    %v1459 = vld [vmem:[#allocation2 + $0x34] sm:$0xf]
    %v1460 = vld [vmem:[#allocation2 + $0x38] sm:$0xf]
    %v1461 = vld [vmem:[#allocation2 + $0x3c] sm:$0xf]
    %v1462 = vld [vmem:[#allocation5 + $0x2] sm:$0x1]
    %v1463 = vlaneseq
    %v1464 = vshrl.u32 %v1463, 7
    %v1465 = vsub.s32 0, %v1464
    %v1466 = vrot.slane %v1462, %v1465
    %v1483 = vunpack.c.l.b16 %v1446
    %v1484 = vunpack.c.l.b16 %v1447
    %v1485 = vunpack.c.l.b16 %v1448
    %v1486 = vunpack.c.l.b16 %v1449
    %v1487 = vunpack.c.l.b16 %v1450
    %v1488 = vunpack.c.l.b16 %v1451
    %v1489 = vunpack.c.l.b16 %v1452
    %v1490 = vunpack.c.l.b16 %v1453
    %v1491 = vunpack.c.l.b16 %v1454
    %v1492 = vunpack.c.l.b16 %v1455
    %v1493 = vunpack.c.l.b16 %v1456
    %v1494 = vunpack.c.l.b16 %v1457
    %v1495 = vunpack.c.l.b16 %v1458
    %v1496 = vunpack.c.l.b16 %v1459
    %v1497 = vunpack.c.l.b16 %v1460
    %v1498 = vunpack.c.l.b16 %v1461
    %v1499 = vpack.c.b16 %v1484, %v1483
    %v1500 = vpack.c.b16 %v1486, %v1485
    %v1501 = vpack.c.b16 %v1488, %v1487
    %v1502 = vpack.c.b16 %v1490, %v1489
    %v1503 = vpack.c.b16 %v1492, %v1491
    %v1504 = vpack.c.b16 %v1494, %v1493
    %v1505 = vpack.c.b16 %v1496, %v1495
    %v1506 = vpack.c.b16 %v1498, %v1497
    %1515 = vmatprep.subr.bf16.mxu0 0
    %1516 = vmatpush1.bf16.msra.mxu0 %v1499
    %1517 = vmatprep.subr.bf16.mxu0 0
    %1518 = vmatpush1.bf16.msra.mxu0 %v1500
    %1519 = vmatprep.subr.bf16.mxu0 0
    %1520 = vmatpush1.bf16.msra.mxu0 %v1501
    %1521 = vmatprep.subr.bf16.mxu0 0
    %1522 = vmatpush1.bf16.msra.mxu0 %v1502
    %1523 = vmatprep.subr.bf16.mxu0 0
    %1524 = vmatpush1.bf16.msra.mxu0 %v1503
    %1525 = vmatprep.subr.bf16.mxu0 0
    %1526 = vmatpush1.bf16.msra.mxu0 %v1504
    %1527 = vmatprep.subr.bf16.mxu0 0
    %1528 = vmatpush1.bf16.msra.mxu0 %v1505
    %1529 = vmatprep.subr.bf16.mxu0 0
    %1530 = vmatpush1.bf16.msra.mxu0 %v1506
    %1531 = vmatprep.subr.bf16.mxu0 0
    %1532 = vmatpush1.bf16.msra.mxu0 0
    %1533 = vmatprep.subr.bf16.mxu0 0
    %1534 = vmatpush1.bf16.msra.mxu0 0
    %1535 = vmatprep.subr.bf16.mxu0 0
    %1536 = vmatpush1.bf16.msra.mxu0 0
    %1537 = vmatprep.subr.bf16.mxu0 0
    %1538 = vmatpush1.bf16.msra.mxu0 0
    %1539 = vmatprep.subr.bf16.mxu0 0
    %1540 = vmatpush1.bf16.msra.mxu0 0
    %1541 = vmatprep.subr.bf16.mxu0 0
    %1542 = vmatpush1.bf16.msra.mxu0 0
    %1543 = vmatprep.subr.bf16.mxu0 0
    %1544 = vmatpush1.bf16.msra.mxu0 0
    %1545 = vmatprep.subr.bf16.mxu0 0
    %1546 = vmatpush1.bf16.msra.mxu0 0
    %1547 = vmatprep.mubr.bf16.mxu0 0
    %1548 = vmatmul.mubr.bf16.gmra.mrb[0].mxu0 %v55
    %v1549 = vpop.f32.mrb[0].mxu0
    %v1550 = vadd.f32 %v1466, %v1549
    %v1551 = vpop.f32.mrb[0].mxu0
    %v1552 = vpop.f32.mrb[0].mxu0
    %v1553 = vpop.f32.mrb[0].mxu0
    %1554 = vdwg.mxu0
    %vm1555 = vcmp.ge.f32.partialorder %v1550, 0.0
    %v1556 = vmul.f32 %v1550, 0.01
    %v1557 = vsel %vm1555, %v1550, %v1556
    %v1558 = vpack.c.bf16 %v1557, %v1557
    %v1559 = vld [vmem:[%s402] sm:$0xf]
    %v1560 = vld [vmem:[%s402 + $0x4] sm:$0xf]
    %v1561 = vld [vmem:[%s402 + $0x8] sm:$0xf]
    %v1562 = vld [vmem:[%s402 + $0xc] sm:$0xf]
    %v1563 = vld [vmem:[%s402 + $0x10] sm:$0xf]
    %v1564 = vld [vmem:[%s402 + $0x14] sm:$0xf]
    %v1565 = vld [vmem:[%s402 + $0x18] sm:$0xf]
    %v1566 = vld [vmem:[%s402 + $0x1c] sm:$0xf]
    %v1567 = vld [vmem:[%s402 + $0x20] sm:$0xf]
    %v1568 = vld [vmem:[%s402 + $0x24] sm:$0xf]
    %v1569 = vld [vmem:[%s402 + $0x28] sm:$0xf]
    %v1570 = vld [vmem:[%s402 + $0x2c] sm:$0xf]
    %v1571 = vld [vmem:[%s402 + $0x30] sm:$0xf]
    %v1572 = vld [vmem:[%s402 + $0x34] sm:$0xf]
    %v1573 = vld [vmem:[%s402 + $0x38] sm:$0xf]
    %v1574 = vld [vmem:[%s402 + $0x3c] sm:$0xf]
    %v1575 = vld [vmem:[#allocation5 + $0x3] sm:$0x1]
    %v1576 = vlaneseq
    %v1577 = vshrl.u32 %v1576, 7
    %v1578 = vsub.s32 0, %v1577
    %v1579 = vrot.slane %v1575, %v1578
    %v1596 = vunpack.c.l.b16 %v1559
    %v1597 = vunpack.c.l.b16 %v1560
    %v1598 = vunpack.c.l.b16 %v1561
    %v1599 = vunpack.c.l.b16 %v1562
    %v1600 = vunpack.c.l.b16 %v1563
    %v1601 = vunpack.c.l.b16 %v1564
    %v1602 = vunpack.c.l.b16 %v1565
    %v1603 = vunpack.c.l.b16 %v1566
    %v1604 = vunpack.c.l.b16 %v1567
    %v1605 = vunpack.c.l.b16 %v1568
    %v1606 = vunpack.c.l.b16 %v1569
    %v1607 = vunpack.c.l.b16 %v1570
    %v1608 = vunpack.c.l.b16 %v1571
    %v1609 = vunpack.c.l.b16 %v1572
    %v1610 = vunpack.c.l.b16 %v1573
    %v1611 = vunpack.c.l.b16 %v1574
    %v1612 = vpack.c.b16 %v1597, %v1596
    %v1613 = vpack.c.b16 %v1599, %v1598
    %v1614 = vpack.c.b16 %v1601, %v1600
    %v1615 = vpack.c.b16 %v1603, %v1602
    %v1616 = vpack.c.b16 %v1605, %v1604
    %v1617 = vpack.c.b16 %v1607, %v1606
    %v1618 = vpack.c.b16 %v1609, %v1608
    %v1619 = vpack.c.b16 %v1611, %v1610
    %1628 = vmatprep.subr.bf16.mxu0 0
    %1629 = vmatpush1.bf16.msra.mxu0 %v1612
    %1630 = vmatprep.subr.bf16.mxu0 0
    %1631 = vmatpush1.bf16.msra.mxu0 %v1613
    %1632 = vmatprep.subr.bf16.mxu0 0
    %1633 = vmatpush1.bf16.msra.mxu0 %v1614
    %1634 = vmatprep.subr.bf16.mxu0 0
    %1635 = vmatpush1.bf16.msra.mxu0 %v1615
    %1636 = vmatprep.subr.bf16.mxu0 0
    %1637 = vmatpush1.bf16.msra.mxu0 %v1616
    %1638 = vmatprep.subr.bf16.mxu0 0
    %1639 = vmatpush1.bf16.msra.mxu0 %v1617
    %1640 = vmatprep.subr.bf16.mxu0 0
    %1641 = vmatpush1.bf16.msra.mxu0 %v1618
    %1642 = vmatprep.subr.bf16.mxu0 0
    %1643 = vmatpush1.bf16.msra.mxu0 %v1619
    %1644 = vmatprep.subr.bf16.mxu0 0
    %1645 = vmatpush1.bf16.msra.mxu0 0
    %1646 = vmatprep.subr.bf16.mxu0 0
    %1647 = vmatpush1.bf16.msra.mxu0 0
    %1648 = vmatprep.subr.bf16.mxu0 0
    %1649 = vmatpush1.bf16.msra.mxu0 0
    %1650 = vmatprep.subr.bf16.mxu0 0
    %1651 = vmatpush1.bf16.msra.mxu0 0
    %1652 = vmatprep.subr.bf16.mxu0 0
    %1653 = vmatpush1.bf16.msra.mxu0 0
    %1654 = vmatprep.subr.bf16.mxu0 0
    %1655 = vmatpush1.bf16.msra.mxu0 0
    %1656 = vmatprep.subr.bf16.mxu0 0
    %1657 = vmatpush1.bf16.msra.mxu0 0
    %1658 = vmatprep.subr.bf16.mxu0 0
    %1659 = vmatpush1.bf16.msra.mxu0 0
    %1660 = vmatprep.mubr.bf16.mxu0 0
    %1661 = vmatmul.mubr.bf16.gmra.mrb[0].mxu0 %v1558
    %v1662 = vpop.f32.mrb[0].mxu0
    %v1663 = vadd.f32 %v1579, %v1662
    %v1664 = vpop.f32.mrb[0].mxu0
    %v1665 = vpop.f32.mrb[0].mxu0
    %v1666 = vpop.f32.mrb[0].mxu0
    %1667 = vdwg.mxu0
    %vm1668 = vcmp.ge.f32.partialorder %v1663, 0.0
    %v1669 = vmul.f32 %v1663, 0.01
    %v1670 = vsel %vm1668, %v1663, %v1669
    %v1671 = vpack.c.bf16 %v1670, %v1670
    %v1672 = vld [vmem:[%s516] sm:$0xf]
    %v1673 = vld [vmem:[%s516 + $0x4] sm:$0xf]
    %v1674 = vld [vmem:[%s516 + $0x8] sm:$0xf]
    %v1675 = vld [vmem:[%s516 + $0xc] sm:$0xf]
    %v1676 = vld [vmem:[%s516 + $0x10] sm:$0xf]
    %v1677 = vld [vmem:[%s516 + $0x14] sm:$0xf]
    %v1678 = vld [vmem:[%s516 + $0x18] sm:$0xf]
    %v1679 = vld [vmem:[%s516 + $0x1c] sm:$0xf]
    %v1680 = vld [vmem:[%s516 + $0x20] sm:$0xf]
    %v1681 = vld [vmem:[%s516 + $0x24] sm:$0xf]
    %v1682 = vld [vmem:[%s516 + $0x28] sm:$0xf]
    %v1683 = vld [vmem:[%s516 + $0x2c] sm:$0xf]
    %v1684 = vld [vmem:[%s516 + $0x30] sm:$0xf]
    %v1685 = vld [vmem:[%s516 + $0x34] sm:$0xf]
    %v1686 = vld [vmem:[%s516 + $0x38] sm:$0xf]
    %v1687 = vld [vmem:[%s516 + $0x3c] sm:$0xf]
    %v1688 = vld [vmem:[#allocation5 + $0x4] sm:$0x1]
    %v1689 = vlaneseq
    %v1690 = vshrl.u32 %v1689, 7
    %v1691 = vsub.s32 0, %v1690
    %v1692 = vrot.slane %v1688, %v1691
    %v1709 = vunpack.c.l.b16 %v1672
    %v1710 = vunpack.c.l.b16 %v1673
    %v1711 = vunpack.c.l.b16 %v1674
    %v1712 = vunpack.c.l.b16 %v1675
    %v1713 = vunpack.c.l.b16 %v1676
    %v1714 = vunpack.c.l.b16 %v1677
    %v1715 = vunpack.c.l.b16 %v1678
    %v1716 = vunpack.c.l.b16 %v1679
    %v1717 = vunpack.c.l.b16 %v1680
    %v1718 = vunpack.c.l.b16 %v1681
    %v1719 = vunpack.c.l.b16 %v1682
    %v1720 = vunpack.c.l.b16 %v1683
    %v1721 = vunpack.c.l.b16 %v1684
    %v1722 = vunpack.c.l.b16 %v1685
    %v1723 = vunpack.c.l.b16 %v1686
    %v1724 = vunpack.c.l.b16 %v1687
    %v1725 = vpack.c.b16 %v1710, %v1709
    %v1726 = vpack.c.b16 %v1712, %v1711
    %v1727 = vpack.c.b16 %v1714, %v1713
    %v1728 = vpack.c.b16 %v1716, %v1715
    %v1729 = vpack.c.b16 %v1718, %v1717
    %v1730 = vpack.c.b16 %v1720, %v1719
    %v1731 = vpack.c.b16 %v1722, %v1721
    %v1732 = vpack.c.b16 %v1724, %v1723
    %1741 = vmatprep.subr.bf16.mxu0 0
    %1742 = vmatpush1.bf16.msra.mxu0 %v1725
    %1743 = vmatprep.subr.bf16.mxu0 0
    %1744 = vmatpush1.bf16.msra.mxu0 %v1726
    %1745 = vmatprep.subr.bf16.mxu0 0
    %1746 = vmatpush1.bf16.msra.mxu0 %v1727
    %1747 = vmatprep.subr.bf16.mxu0 0
    %1748 = vmatpush1.bf16.msra.mxu0 %v1728
    %1749 = vmatprep.subr.bf16.mxu0 0
    %1750 = vmatpush1.bf16.msra.mxu0 %v1729
    %1751 = vmatprep.subr.bf16.mxu0 0
    %1752 = vmatpush1.bf16.msra.mxu0 %v1730
    %1753 = vmatprep.subr.bf16.mxu0 0
    %1754 = vmatpush1.bf16.msra.mxu0 %v1731
    %1755 = vmatprep.subr.bf16.mxu0 0
    %1756 = vmatpush1.bf16.msra.mxu0 %v1732
    %1757 = vmatprep.subr.bf16.mxu0 0
    %1758 = vmatpush1.bf16.msra.mxu0 0
    %1759 = vmatprep.subr.bf16.mxu0 0
    %1760 = vmatpush1.bf16.msra.mxu0 0
    %1761 = vmatprep.subr.bf16.mxu0 0
    %1762 = vmatpush1.bf16.msra.mxu0 0
    %1763 = vmatprep.subr.bf16.mxu0 0
    %1764 = vmatpush1.bf16.msra.mxu0 0
    %1765 = vmatprep.subr.bf16.mxu0 0
    %1766 = vmatpush1.bf16.msra.mxu0 0
    %1767 = vmatprep.subr.bf16.mxu0 0
    %1768 = vmatpush1.bf16.msra.mxu0 0
    %1769 = vmatprep.subr.bf16.mxu0 0
    %1770 = vmatpush1.bf16.msra.mxu0 0
    %1771 = vmatprep.subr.bf16.mxu0 0
    %1772 = vmatpush1.bf16.msra.mxu0 0
    %1773 = vmatprep.mubr.bf16.mxu0 0
    %1774 = vmatmul.mubr.bf16.gmra.mrb[0].mxu0 %v1671
    %v1775 = vpop.f32.mrb[0].mxu0
    %v1776 = vadd.f32 %v1692, %v1775
    %v1777 = vpop.f32.mrb[0].mxu0
    %v1778 = vpop.f32.mrb[0].mxu0
    %v1779 = vpop.f32.mrb[0].mxu0
    %1780 = vdwg.mxu0
    %vm1781 = vcmp.ge.f32.partialorder %v1776, 0.0
    %v1782 = vmul.f32 %v1776, 0.01
    %v1783 = vsel %vm1781, %v1776, %v1782
    %v1784 = vpack.c.bf16 %v1783, %v1783
    %s1785 = scalar_lea.vmem [#allocation7], 16
    %1786 = vst [vmem:[%s1785] sm:$0xff] %v1783
    %v1787 = vld [vmem:[%s631] sm:$0xf]
    %v1788 = vld [vmem:[%s631 + $0x4] sm:$0xf]
    %v1789 = vld [vmem:[%s631 + $0x8] sm:$0xf]
    %v1790 = vld [vmem:[%s631 + $0xc] sm:$0xf]
    %v1791 = vld [vmem:[%s631 + $0x10] sm:$0xf]
    %v1792 = vld [vmem:[%s631 + $0x14] sm:$0xf]
    %v1793 = vld [vmem:[%s631 + $0x18] sm:$0xf]
    %v1794 = vld [vmem:[%s631 + $0x1c] sm:$0xf]
    %v1795 = vld [vmem:[%s631 + $0x20] sm:$0xf]
    %v1796 = vld [vmem:[%s631 + $0x24] sm:$0xf]
    %v1797 = vld [vmem:[%s631 + $0x28] sm:$0xf]
    %v1798 = vld [vmem:[%s631 + $0x2c] sm:$0xf]
    %v1799 = vld [vmem:[%s631 + $0x30] sm:$0xf]
    %v1800 = vld [vmem:[%s631 + $0x34] sm:$0xf]
    %v1801 = vld [vmem:[%s631 + $0x38] sm:$0xf]
    %v1802 = vld [vmem:[%s631 + $0x3c] sm:$0xf]
    %v1803 = vld [vmem:[#allocation5 + $0x8] sm:$0x1]
    %v1804 = vlaneseq
    %v1805 = vshrl.u32 %v1804, 7
    %v1806 = vsub.s32 0, %v1805
    %v1807 = vrot.slane %v1803, %v1806
    %v1824 = vunpack.c.l.b16 %v1787
    %v1825 = vunpack.c.l.b16 %v1788
    %v1826 = vunpack.c.l.b16 %v1789
    %v1827 = vunpack.c.l.b16 %v1790
    %v1828 = vunpack.c.l.b16 %v1791
    %v1829 = vunpack.c.l.b16 %v1792
    %v1830 = vunpack.c.l.b16 %v1793
    %v1831 = vunpack.c.l.b16 %v1794
    %v1832 = vunpack.c.l.b16 %v1795
    %v1833 = vunpack.c.l.b16 %v1796
    %v1834 = vunpack.c.l.b16 %v1797
    %v1835 = vunpack.c.l.b16 %v1798
    %v1836 = vunpack.c.l.b16 %v1799
    %v1837 = vunpack.c.l.b16 %v1800
    %v1838 = vunpack.c.l.b16 %v1801
    %v1839 = vunpack.c.l.b16 %v1802
    %v1840 = vpack.c.b16 %v1825, %v1824
    %v1841 = vpack.c.b16 %v1827, %v1826
    %v1842 = vpack.c.b16 %v1829, %v1828
    %v1843 = vpack.c.b16 %v1831, %v1830
    %v1844 = vpack.c.b16 %v1833, %v1832
    %v1845 = vpack.c.b16 %v1835, %v1834
    %v1846 = vpack.c.b16 %v1837, %v1836
    %v1847 = vpack.c.b16 %v1839, %v1838
    %1856 = vmatprep.subr.bf16.mxu0 0
    %1857 = vmatpush1.bf16.msra.mxu0 %v1840
    %1858 = vmatprep.subr.bf16.mxu0 0
    %1859 = vmatpush1.bf16.msra.mxu0 %v1841
    %1860 = vmatprep.subr.bf16.mxu0 0
    %1861 = vmatpush1.bf16.msra.mxu0 %v1842
    %1862 = vmatprep.subr.bf16.mxu0 0
    %1863 = vmatpush1.bf16.msra.mxu0 %v1843
    %1864 = vmatprep.subr.bf16.mxu0 0
    %1865 = vmatpush1.bf16.msra.mxu0 %v1844
    %1866 = vmatprep.subr.bf16.mxu0 0
    %1867 = vmatpush1.bf16.msra.mxu0 %v1845
    %1868 = vmatprep.subr.bf16.mxu0 0
    %1869 = vmatpush1.bf16.msra.mxu0 %v1846
    %1870 = vmatprep.subr.bf16.mxu0 0
    %1871 = vmatpush1.bf16.msra.mxu0 %v1847
    %1872 = vmatprep.subr.bf16.mxu0 0
    %1873 = vmatpush1.bf16.msra.mxu0 0
    %1874 = vmatprep.subr.bf16.mxu0 0
    %1875 = vmatpush1.bf16.msra.mxu0 0
    %1876 = vmatprep.subr.bf16.mxu0 0
    %1877 = vmatpush1.bf16.msra.mxu0 0
    %1878 = vmatprep.subr.bf16.mxu0 0
    %1879 = vmatpush1.bf16.msra.mxu0 0
    %1880 = vmatprep.subr.bf16.mxu0 0
    %1881 = vmatpush1.bf16.msra.mxu0 0
    %1882 = vmatprep.subr.bf16.mxu0 0
    %1883 = vmatpush1.bf16.msra.mxu0 0
    %1884 = vmatprep.subr.bf16.mxu0 0
    %1885 = vmatpush1.bf16.msra.mxu0 0
    %1886 = vmatprep.subr.bf16.mxu0 0
    %1887 = vmatpush1.bf16.msra.mxu0 0
    %1888 = vmatprep.mubr.bf16.mxu0 0
    %1889 = vmatmul.mubr.bf16.gmra.mrb[0].mxu0 %v1784
    %v1890 = vpop.f32.mrb[0].mxu0
    %v1891 = vadd.f32 %v1807, %v1890
    %v1892 = vpop.f32.mrb[0].mxu0
    %v1893 = vpop.f32.mrb[0].mxu0
    %v1894 = vpop.f32.mrb[0].mxu0
    %1895 = vdwg.mxu0
    %vm1896 = vcmp.ge.f32.partialorder %v1891, 0.0
    %v1897 = vmul.f32 %v1891, 0.01
    %v1898 = vsel %vm1896, %v1891, %v1897
    %v1899 = vpack.c.bf16 %v1898, %v1898
    %v1900 = vld [vmem:[%s745] sm:$0xf]
    %v1901 = vld [vmem:[%s745 + $0x4] sm:$0xf]
    %v1902 = vld [vmem:[%s745 + $0x8] sm:$0xf]
    %v1903 = vld [vmem:[%s745 + $0xc] sm:$0xf]
    %v1904 = vld [vmem:[%s745 + $0x10] sm:$0xf]
    %v1905 = vld [vmem:[%s745 + $0x14] sm:$0xf]
    %v1906 = vld [vmem:[%s745 + $0x18] sm:$0xf]
    %v1907 = vld [vmem:[%s745 + $0x1c] sm:$0xf]
    %v1908 = vld [vmem:[%s745 + $0x20] sm:$0xf]
    %v1909 = vld [vmem:[%s745 + $0x24] sm:$0xf]
    %v1910 = vld [vmem:[%s745 + $0x28] sm:$0xf]
    %v1911 = vld [vmem:[%s745 + $0x2c] sm:$0xf]
    %v1912 = vld [vmem:[%s745 + $0x30] sm:$0xf]
    %v1913 = vld [vmem:[%s745 + $0x34] sm:$0xf]
    %v1914 = vld [vmem:[%s745 + $0x38] sm:$0xf]
    %v1915 = vld [vmem:[%s745 + $0x3c] sm:$0xf]
    %v1932 = vunpack.c.l.b16 %v1900
    %v1933 = vunpack.c.l.b16 %v1901
    %v1934 = vunpack.c.l.b16 %v1902
    %v1935 = vunpack.c.l.b16 %v1903
    %v1936 = vunpack.c.l.b16 %v1904
    %v1937 = vunpack.c.l.b16 %v1905
    %v1938 = vunpack.c.l.b16 %v1906
    %v1939 = vunpack.c.l.b16 %v1907
    %v1940 = vunpack.c.l.b16 %v1908
    %v1941 = vunpack.c.l.b16 %v1909
    %v1942 = vunpack.c.l.b16 %v1910
    %v1943 = vunpack.c.l.b16 %v1911
    %v1944 = vunpack.c.l.b16 %v1912
    %v1945 = vunpack.c.l.b16 %v1913
    %v1946 = vunpack.c.l.b16 %v1914
    %v1947 = vunpack.c.l.b16 %v1915
    %v1948 = vpack.c.b16 %v1933, %v1932
    %v1949 = vpack.c.b16 %v1935, %v1934
    %v1950 = vpack.c.b16 %v1937, %v1936
    %v1951 = vpack.c.b16 %v1939, %v1938
    %v1952 = vpack.c.b16 %v1941, %v1940
    %v1953 = vpack.c.b16 %v1943, %v1942
    %v1954 = vpack.c.b16 %v1945, %v1944
    %v1955 = vpack.c.b16 %v1947, %v1946
    %1964 = vmatprep.subr.bf16.mxu0 0
    %1965 = vmatpush1.bf16.msra.mxu0 %v1948
    %1966 = vmatprep.subr.bf16.mxu0 0
    %1967 = vmatpush1.bf16.msra.mxu0 %v1949
    %1968 = vmatprep.subr.bf16.mxu0 0
    %1969 = vmatpush1.bf16.msra.mxu0 %v1950
    %1970 = vmatprep.subr.bf16.mxu0 0
    %1971 = vmatpush1.bf16.msra.mxu0 %v1951
    %1972 = vmatprep.subr.bf16.mxu0 0
    %1973 = vmatpush1.bf16.msra.mxu0 %v1952
    %1974 = vmatprep.subr.bf16.mxu0 0
    %1975 = vmatpush1.bf16.msra.mxu0 %v1953
    %1976 = vmatprep.subr.bf16.mxu0 0
    %1977 = vmatpush1.bf16.msra.mxu0 %v1954
    %1978 = vmatprep.subr.bf16.mxu0 0
    %1979 = vmatpush1.bf16.msra.mxu0 %v1955
    %1980 = vmatprep.subr.bf16.mxu0 0
    %1981 = vmatpush1.bf16.msra.mxu0 0
    %1982 = vmatprep.subr.bf16.mxu0 0
    %1983 = vmatpush1.bf16.msra.mxu0 0
    %1984 = vmatprep.subr.bf16.mxu0 0
    %1985 = vmatpush1.bf16.msra.mxu0 0
    %1986 = vmatprep.subr.bf16.mxu0 0
    %1987 = vmatpush1.bf16.msra.mxu0 0
    %1988 = vmatprep.subr.bf16.mxu0 0
    %1989 = vmatpush1.bf16.msra.mxu0 0
    %1990 = vmatprep.subr.bf16.mxu0 0
    %1991 = vmatpush1.bf16.msra.mxu0 0
    %1992 = vmatprep.subr.bf16.mxu0 0
    %1993 = vmatpush1.bf16.msra.mxu0 0
    %1994 = vmatprep.subr.bf16.mxu0 0
    %1995 = vmatpush1.bf16.msra.mxu0 0
    %1996 = vmatprep.mubr.bf16.mxu0 0
    %1997 = vmatmul.mubr.bf16.gmra.mrb[0].mxu0 %v1899
    %v1998 = vpop.f32.mrb[0].mxu0
    %v1999 = vadd.f32 0.0, %v1998
    %v2000 = vpop.f32.mrb[0].mxu0
    %v2001 = vpop.f32.mrb[0].mxu0
    %v2002 = vpop.f32.mrb[0].mxu0
    %2003 = vdwg.mxu0
    %v2004 = vld [vmem:[#allocation5 + $0xa] sm:$0x1]
    %v2005 = vlaneseq
    %v2006 = vshrl.u32 %v2005, 7
    %v2007 = vsub.s32 0, %v2006
    %v2008 = vrot.slane %v2004, %v2007
    %v2009 = vmul.f32 %v1898, %v2008
    %2010 = vadd.xlane.f32.xlu0 %v2009
    %v2011 = vpop.xlane.xlu0 %2010
    %v2012 = vmax.f32 %v1434, %v2011
    %v2013 = vsub.f32 %v1434, %v2012
    %v2014 = vmul.f32 %v2013, 1.442695
    %v2015 = vpow.pop %v2014
    %v2016 = vsub.f32 %v2011, %v2012
    %v2017 = vmul.f32 %v2016, 1.442695
    %v2018 = vpow.pop %v2017
    %v2019 = vmul.f32 %v2015, %v1442
    %v2020 = vadd.f32 %v2019, %v2018
    %v2021 = vmul.f32 %v2015, %v1445
    %v2022 = vmul.f32 %v2018, %v1999
    %v2023 = vadd.f32 %v2021, %v2022
    %v2024 = vld [vmem:[#allocation2] sm:$0xf]
    %v2025 = vld [vmem:[#allocation2 + $0x4] sm:$0xf]
    %v2026 = vld [vmem:[#allocation2 + $0x8] sm:$0xf]
    %v2027 = vld [vmem:[#allocation2 + $0xc] sm:$0xf]
    %v2028 = vld [vmem:[#allocation2 + $0x10] sm:$0xf]
    %v2029 = vld [vmem:[#allocation2 + $0x14] sm:$0xf]
    %v2030 = vld [vmem:[#allocation2 + $0x18] sm:$0xf]
    %v2031 = vld [vmem:[#allocation2 + $0x1c] sm:$0xf]
    %v2032 = vld [vmem:[#allocation2 + $0x20] sm:$0xf]
    %v2033 = vld [vmem:[#allocation2 + $0x24] sm:$0xf]
    %v2034 = vld [vmem:[#allocation2 + $0x28] sm:$0xf]
    %v2035 = vld [vmem:[#allocation2 + $0x2c] sm:$0xf]
    %v2036 = vld [vmem:[#allocation2 + $0x30] sm:$0xf]
    %v2037 = vld [vmem:[#allocation2 + $0x34] sm:$0xf]
    %v2038 = vld [vmem:[#allocation2 + $0x38] sm:$0xf]
    %v2039 = vld [vmem:[#allocation2 + $0x3c] sm:$0xf]
    %v2040 = vld [vmem:[#allocation5 + $0x2] sm:$0x1]
    %v2041 = vlaneseq
    %v2042 = vshrl.u32 %v2041, 7
    %v2043 = vsub.s32 0, %v2042
    %v2044 = vrot.slane %v2040, %v2043
    %v2061 = vunpack.c.l.b16 %v2024
    %v2062 = vunpack.c.l.b16 %v2025
    %v2063 = vunpack.c.l.b16 %v2026
    %v2064 = vunpack.c.l.b16 %v2027
    %v2065 = vunpack.c.l.b16 %v2028
    %v2066 = vunpack.c.l.b16 %v2029
    %v2067 = vunpack.c.l.b16 %v2030
    %v2068 = vunpack.c.l.b16 %v2031
    %v2069 = vunpack.c.l.b16 %v2032
    %v2070 = vunpack.c.l.b16 %v2033
    %v2071 = vunpack.c.l.b16 %v2034
    %v2072 = vunpack.c.l.b16 %v2035
    %v2073 = vunpack.c.l.b16 %v2036
    %v2074 = vunpack.c.l.b16 %v2037
    %v2075 = vunpack.c.l.b16 %v2038
    %v2076 = vunpack.c.l.b16 %v2039
    %v2077 = vpack.c.b16 %v2062, %v2061
    %v2078 = vpack.c.b16 %v2064, %v2063
    %v2079 = vpack.c.b16 %v2066, %v2065
    %v2080 = vpack.c.b16 %v2068, %v2067
    %v2081 = vpack.c.b16 %v2070, %v2069
    %v2082 = vpack.c.b16 %v2072, %v2071
    %v2083 = vpack.c.b16 %v2074, %v2073
    %v2084 = vpack.c.b16 %v2076, %v2075
    %2093 = vmatprep.subr.bf16.mxu0 0
    %2094 = vmatpush1.bf16.msra.mxu0 %v2077
    %2095 = vmatprep.subr.bf16.mxu0 0
    %2096 = vmatpush1.bf16.msra.mxu0 %v2078
    %2097 = vmatprep.subr.bf16.mxu0 0
    %2098 = vmatpush1.bf16.msra.mxu0 %v2079
    %2099 = vmatprep.subr.bf16.mxu0 0
    %2100 = vmatpush1.bf16.msra.mxu0 %v2080
    %2101 = vmatprep.subr.bf16.mxu0 0
    %2102 = vmatpush1.bf16.msra.mxu0 %v2081
    %2103 = vmatprep.subr.bf16.mxu0 0
    %2104 = vmatpush1.bf16.msra.mxu0 %v2082
    %2105 = vmatprep.subr.bf16.mxu0 0
    %2106 = vmatpush1.bf16.msra.mxu0 %v2083
    %2107 = vmatprep.subr.bf16.mxu0 0
    %2108 = vmatpush1.bf16.msra.mxu0 %v2084
    %2109 = vmatprep.subr.bf16.mxu0 0
    %2110 = vmatpush1.bf16.msra.mxu0 0
    %2111 = vmatprep.subr.bf16.mxu0 0
    %2112 = vmatpush1.bf16.msra.mxu0 0
    %2113 = vmatprep.subr.bf16.mxu0 0
    %2114 = vmatpush1.bf16.msra.mxu0 0
    %2115 = vmatprep.subr.bf16.mxu0 0
    %2116 = vmatpush1.bf16.msra.mxu0 0
    %2117 = vmatprep.subr.bf16.mxu0 0
    %2118 = vmatpush1.bf16.msra.mxu0 0
    %2119 = vmatprep.subr.bf16.mxu0 0
    %2120 = vmatpush1.bf16.msra.mxu0 0
    %2121 = vmatprep.subr.bf16.mxu0 0
    %2122 = vmatpush1.bf16.msra.mxu0 0
    %2123 = vmatprep.subr.bf16.mxu0 0
    %2124 = vmatpush1.bf16.msra.mxu0 0
    %2125 = vmatprep.mubr.bf16.mxu0 0
    %2126 = vmatmul.mubr.bf16.gmra.mrb[0].mxu0 %v55
    %v2127 = vpop.f32.mrb[0].mxu0
    %v2128 = vadd.f32 %v2044, %v2127
    %v2129 = vpop.f32.mrb[0].mxu0
    %v2130 = vpop.f32.mrb[0].mxu0
    %v2131 = vpop.f32.mrb[0].mxu0
    %2132 = vdwg.mxu0
    %vm2133 = vcmp.ge.f32.partialorder %v2128, 0.0
    %v2134 = vmul.f32 %v2128, 0.01
    %v2135 = vsel %vm2133, %v2128, %v2134
    %v2136 = vpack.c.bf16 %v2135, %v2135
    %v2137 = vld [vmem:[%s402] sm:$0xf]
    %v2138 = vld [vmem:[%s402 + $0x4] sm:$0xf]
    %v2139 = vld [vmem:[%s402 + $0x8] sm:$0xf]
    %v2140 = vld [vmem:[%s402 + $0xc] sm:$0xf]
    %v2141 = vld [vmem:[%s402 + $0x10] sm:$0xf]
    %v2142 = vld [vmem:[%s402 + $0x14] sm:$0xf]
    %v2143 = vld [vmem:[%s402 + $0x18] sm:$0xf]
    %v2144 = vld [vmem:[%s402 + $0x1c] sm:$0xf]
    %v2145 = vld [vmem:[%s402 + $0x20] sm:$0xf]
    %v2146 = vld [vmem:[%s402 + $0x24] sm:$0xf]
    %v2147 = vld [vmem:[%s402 + $0x28] sm:$0xf]
    %v2148 = vld [vmem:[%s402 + $0x2c] sm:$0xf]
    %v2149 = vld [vmem:[%s402 + $0x30] sm:$0xf]
    %v2150 = vld [vmem:[%s402 + $0x34] sm:$0xf]
    %v2151 = vld [vmem:[%s402 + $0x38] sm:$0xf]
    %v2152 = vld [vmem:[%s402 + $0x3c] sm:$0xf]
    %v2153 = vld [vmem:[#allocation5 + $0x3] sm:$0x1]
    %v2154 = vlaneseq
    %v2155 = vshrl.u32 %v2154, 7
    %v2156 = vsub.s32 0, %v2155
    %v2157 = vrot.slane %v2153, %v2156
    %v2174 = vunpack.c.l.b16 %v2137
    %v2175 = vunpack.c.l.b16 %v2138
    %v2176 = vunpack.c.l.b16 %v2139
    %v2177 = vunpack.c.l.b16 %v2140
    %v2178 = vunpack.c.l.b16 %v2141
    %v2179 = vunpack.c.l.b16 %v2142
    %v2180 = vunpack.c.l.b16 %v2143
    %v2181 = vunpack.c.l.b16 %v2144
    %v2182 = vunpack.c.l.b16 %v2145
    %v2183 = vunpack.c.l.b16 %v2146
    %v2184 = vunpack.c.l.b16 %v2147
    %v2185 = vunpack.c.l.b16 %v2148
    %v2186 = vunpack.c.l.b16 %v2149
    %v2187 = vunpack.c.l.b16 %v2150
    %v2188 = vunpack.c.l.b16 %v2151
    %v2189 = vunpack.c.l.b16 %v2152
    %v2190 = vpack.c.b16 %v2175, %v2174
    %v2191 = vpack.c.b16 %v2177, %v2176
    %v2192 = vpack.c.b16 %v2179, %v2178
    %v2193 = vpack.c.b16 %v2181, %v2180
    %v2194 = vpack.c.b16 %v2183, %v2182
    %v2195 = vpack.c.b16 %v2185, %v2184
    %v2196 = vpack.c.b16 %v2187, %v2186
    %v2197 = vpack.c.b16 %v2189, %v2188
    %2206 = vmatprep.subr.bf16.mxu0 0
    %2207 = vmatpush1.bf16.msra.mxu0 %v2190
    %2208 = vmatprep.subr.bf16.mxu0 0
    %2209 = vmatpush1.bf16.msra.mxu0 %v2191
    %2210 = vmatprep.subr.bf16.mxu0 0
    %2211 = vmatpush1.bf16.msra.mxu0 %v2192
    %2212 = vmatprep.subr.bf16.mxu0 0
    %2213 = vmatpush1.bf16.msra.mxu0 %v2193
    %2214 = vmatprep.subr.bf16.mxu0 0
    %2215 = vmatpush1.bf16.msra.mxu0 %v2194
    %2216 = vmatprep.subr.bf16.mxu0 0
    %2217 = vmatpush1.bf16.msra.mxu0 %v2195
    %2218 = vmatprep.subr.bf16.mxu0 0
    %2219 = vmatpush1.bf16.msra.mxu0 %v2196
    %2220 = vmatprep.subr.bf16.mxu0 0
    %2221 = vmatpush1.bf16.msra.mxu0 %v2197
    %2222 = vmatprep.subr.bf16.mxu0 0
    %2223 = vmatpush1.bf16.msra.mxu0 0
    %2224 = vmatprep.subr.bf16.mxu0 0
    %2225 = vmatpush1.bf16.msra.mxu0 0
    %2226 = vmatprep.subr.bf16.mxu0 0
    %2227 = vmatpush1.bf16.msra.mxu0 0
    %2228 = vmatprep.subr.bf16.mxu0 0
    %2229 = vmatpush1.bf16.msra.mxu0 0
    %2230 = vmatprep.subr.bf16.mxu0 0
    %2231 = vmatpush1.bf16.msra.mxu0 0
    %2232 = vmatprep.subr.bf16.mxu0 0
    %2233 = vmatpush1.bf16.msra.mxu0 0
    %2234 = vmatprep.subr.bf16.mxu0 0
    %2235 = vmatpush1.bf16.msra.mxu0 0
    %2236 = vmatprep.subr.bf16.mxu0 0
    %2237 = vmatpush1.bf16.msra.mxu0 0
    %2238 = vmatprep.mubr.bf16.mxu0 0
    %2239 = vmatmul.mubr.bf16.gmra.mrb[0].mxu0 %v2136
    %v2240 = vpop.f32.mrb[0].mxu0
    %v2241 = vadd.f32 %v2157, %v2240
    %v2242 = vpop.f32.mrb[0].mxu0
    %v2243 = vpop.f32.mrb[0].mxu0
    %v2244 = vpop.f32.mrb[0].mxu0
    %2245 = vdwg.mxu0
    %vm2246 = vcmp.ge.f32.partialorder %v2241, 0.0
    %v2247 = vmul.f32 %v2241, 0.01
    %v2248 = vsel %vm2246, %v2241, %v2247
    %v2249 = vpack.c.bf16 %v2248, %v2248
    %v2250 = vld [vmem:[%s516] sm:$0xf]
    %v2251 = vld [vmem:[%s516 + $0x4] sm:$0xf]
    %v2252 = vld [vmem:[%s516 + $0x8] sm:$0xf]
    %v2253 = vld [vmem:[%s516 + $0xc] sm:$0xf]
    %v2254 = vld [vmem:[%s516 + $0x10] sm:$0xf]
    %v2255 = vld [vmem:[%s516 + $0x14] sm:$0xf]
    %v2256 = vld [vmem:[%s516 + $0x18] sm:$0xf]
    %v2257 = vld [vmem:[%s516 + $0x1c] sm:$0xf]
    %v2258 = vld [vmem:[%s516 + $0x20] sm:$0xf]
    %v2259 = vld [vmem:[%s516 + $0x24] sm:$0xf]
    %v2260 = vld [vmem:[%s516 + $0x28] sm:$0xf]
    %v2261 = vld [vmem:[%s516 + $0x2c] sm:$0xf]
    %v2262 = vld [vmem:[%s516 + $0x30] sm:$0xf]
    %v2263 = vld [vmem:[%s516 + $0x34] sm:$0xf]
    %v2264 = vld [vmem:[%s516 + $0x38] sm:$0xf]
    %v2265 = vld [vmem:[%s516 + $0x3c] sm:$0xf]
    %v2266 = vld [vmem:[#allocation5 + $0x4] sm:$0x1]
    %v2267 = vlaneseq
    %v2268 = vshrl.u32 %v2267, 7
    %v2269 = vsub.s32 0, %v2268
    %v2270 = vrot.slane %v2266, %v2269
    %v2287 = vunpack.c.l.b16 %v2250
    %v2288 = vunpack.c.l.b16 %v2251
    %v2289 = vunpack.c.l.b16 %v2252
    %v2290 = vunpack.c.l.b16 %v2253
    %v2291 = vunpack.c.l.b16 %v2254
    %v2292 = vunpack.c.l.b16 %v2255
    %v2293 = vunpack.c.l.b16 %v2256
    %v2294 = vunpack.c.l.b16 %v2257
    %v2295 = vunpack.c.l.b16 %v2258
    %v2296 = vunpack.c.l.b16 %v2259
    %v2297 = vunpack.c.l.b16 %v2260
    %v2298 = vunpack.c.l.b16 %v2261
    %v2299 = vunpack.c.l.b16 %v2262
    %v2300 = vunpack.c.l.b16 %v2263
    %v2301 = vunpack.c.l.b16 %v2264
    %v2302 = vunpack.c.l.b16 %v2265
    %v2303 = vpack.c.b16 %v2288, %v2287
    %v2304 = vpack.c.b16 %v2290, %v2289
    %v2305 = vpack.c.b16 %v2292, %v2291
    %v2306 = vpack.c.b16 %v2294, %v2293
    %v2307 = vpack.c.b16 %v2296, %v2295
    %v2308 = vpack.c.b16 %v2298, %v2297
    %v2309 = vpack.c.b16 %v2300, %v2299
    %v2310 = vpack.c.b16 %v2302, %v2301
    %2319 = vmatprep.subr.bf16.mxu0 0
    %2320 = vmatpush1.bf16.msra.mxu0 %v2303
    %2321 = vmatprep.subr.bf16.mxu0 0
    %2322 = vmatpush1.bf16.msra.mxu0 %v2304
    %2323 = vmatprep.subr.bf16.mxu0 0
    %2324 = vmatpush1.bf16.msra.mxu0 %v2305
    %2325 = vmatprep.subr.bf16.mxu0 0
    %2326 = vmatpush1.bf16.msra.mxu0 %v2306
    %2327 = vmatprep.subr.bf16.mxu0 0
    %2328 = vmatpush1.bf16.msra.mxu0 %v2307
    %2329 = vmatprep.subr.bf16.mxu0 0
    %2330 = vmatpush1.bf16.msra.mxu0 %v2308
    %2331 = vmatprep.subr.bf16.mxu0 0
    %2332 = vmatpush1.bf16.msra.mxu0 %v2309
    %2333 = vmatprep.subr.bf16.mxu0 0
    %2334 = vmatpush1.bf16.msra.mxu0 %v2310
    %2335 = vmatprep.subr.bf16.mxu0 0
    %2336 = vmatpush1.bf16.msra.mxu0 0
    %2337 = vmatprep.subr.bf16.mxu0 0
    %2338 = vmatpush1.bf16.msra.mxu0 0
    %2339 = vmatprep.subr.bf16.mxu0 0
    %2340 = vmatpush1.bf16.msra.mxu0 0
    %2341 = vmatprep.subr.bf16.mxu0 0
    %2342 = vmatpush1.bf16.msra.mxu0 0
    %2343 = vmatprep.subr.bf16.mxu0 0
    %2344 = vmatpush1.bf16.msra.mxu0 0
    %2345 = vmatprep.subr.bf16.mxu0 0
    %2346 = vmatpush1.bf16.msra.mxu0 0
    %2347 = vmatprep.subr.bf16.mxu0 0
    %2348 = vmatpush1.bf16.msra.mxu0 0
    %2349 = vmatprep.subr.bf16.mxu0 0
    %2350 = vmatpush1.bf16.msra.mxu0 0
    %2351 = vmatprep.mubr.bf16.mxu0 0
    %2352 = vmatmul.mubr.bf16.gmra.mrb[0].mxu0 %v2249
    %v2353 = vpop.f32.mrb[0].mxu0
    %v2354 = vadd.f32 %v2270, %v2353
    %v2355 = vpop.f32.mrb[0].mxu0
    %v2356 = vpop.f32.mrb[0].mxu0
    %v2357 = vpop.f32.mrb[0].mxu0
    %2358 = vdwg.mxu0
    %vm2359 = vcmp.ge.f32.partialorder %v2354, 0.0
    %v2360 = vmul.f32 %v2354, 0.01
    %v2361 = vsel %vm2359, %v2354, %v2360
    %v2362 = vpack.c.bf16 %v2361, %v2361
    %s2363 = scalar_lea.vmem [#allocation7], 24
    %2364 = vst [vmem:[%s2363] sm:$0xff] %v2361
    %v2365 = vld [vmem:[%s631] sm:$0xf]
    %v2366 = vld [vmem:[%s631 + $0x4] sm:$0xf]
    %v2367 = vld [vmem:[%s631 + $0x8] sm:$0xf]
    %v2368 = vld [vmem:[%s631 + $0xc] sm:$0xf]
    %v2369 = vld [vmem:[%s631 + $0x10] sm:$0xf]
    %v2370 = vld [vmem:[%s631 + $0x14] sm:$0xf]
    %v2371 = vld [vmem:[%s631 + $0x18] sm:$0xf]
    %v2372 = vld [vmem:[%s631 + $0x1c] sm:$0xf]
    %v2373 = vld [vmem:[%s631 + $0x20] sm:$0xf]
    %v2374 = vld [vmem:[%s631 + $0x24] sm:$0xf]
    %v2375 = vld [vmem:[%s631 + $0x28] sm:$0xf]
    %v2376 = vld [vmem:[%s631 + $0x2c] sm:$0xf]
    %v2377 = vld [vmem:[%s631 + $0x30] sm:$0xf]
    %v2378 = vld [vmem:[%s631 + $0x34] sm:$0xf]
    %v2379 = vld [vmem:[%s631 + $0x38] sm:$0xf]
    %v2380 = vld [vmem:[%s631 + $0x3c] sm:$0xf]
    %v2381 = vld [vmem:[#allocation5 + $0x8] sm:$0x1]
    %v2382 = vlaneseq
    %v2383 = vshrl.u32 %v2382, 7
    %v2384 = vsub.s32 0, %v2383
    %v2385 = vrot.slane %v2381, %v2384
    %v2402 = vunpack.c.l.b16 %v2365
    %v2403 = vunpack.c.l.b16 %v2366
    %v2404 = vunpack.c.l.b16 %v2367
    %v2405 = vunpack.c.l.b16 %v2368
    %v2406 = vunpack.c.l.b16 %v2369
    %v2407 = vunpack.c.l.b16 %v2370
    %v2408 = vunpack.c.l.b16 %v2371
    %v2409 = vunpack.c.l.b16 %v2372
    %v2410 = vunpack.c.l.b16 %v2373
    %v2411 = vunpack.c.l.b16 %v2374
    %v2412 = vunpack.c.l.b16 %v2375
    %v2413 = vunpack.c.l.b16 %v2376
    %v2414 = vunpack.c.l.b16 %v2377
    %v2415 = vunpack.c.l.b16 %v2378
    %v2416 = vunpack.c.l.b16 %v2379
    %v2417 = vunpack.c.l.b16 %v2380
    %v2418 = vpack.c.b16 %v2403, %v2402
    %v2419 = vpack.c.b16 %v2405, %v2404
    %v2420 = vpack.c.b16 %v2407, %v2406
    %v2421 = vpack.c.b16 %v2409, %v2408
    %v2422 = vpack.c.b16 %v2411, %v2410
    %v2423 = vpack.c.b16 %v2413, %v2412
    %v2424 = vpack.c.b16 %v2415, %v2414
    %v2425 = vpack.c.b16 %v2417, %v2416
    %2434 = vmatprep.subr.bf16.mxu0 0
    %2435 = vmatpush1.bf16.msra.mxu0 %v2418
    %2436 = vmatprep.subr.bf16.mxu0 0
    %2437 = vmatpush1.bf16.msra.mxu0 %v2419
    %2438 = vmatprep.subr.bf16.mxu0 0
    %2439 = vmatpush1.bf16.msra.mxu0 %v2420
    %2440 = vmatprep.subr.bf16.mxu0 0
    %2441 = vmatpush1.bf16.msra.mxu0 %v2421
    %2442 = vmatprep.subr.bf16.mxu0 0
    %2443 = vmatpush1.bf16.msra.mxu0 %v2422
    %2444 = vmatprep.subr.bf16.mxu0 0
    %2445 = vmatpush1.bf16.msra.mxu0 %v2423
    %2446 = vmatprep.subr.bf16.mxu0 0
    %2447 = vmatpush1.bf16.msra.mxu0 %v2424
    %2448 = vmatprep.subr.bf16.mxu0 0
    %2449 = vmatpush1.bf16.msra.mxu0 %v2425
    %2450 = vmatprep.subr.bf16.mxu0 0
    %2451 = vmatpush1.bf16.msra.mxu0 0
    %2452 = vmatprep.subr.bf16.mxu0 0
    %2453 = vmatpush1.bf16.msra.mxu0 0
    %2454 = vmatprep.subr.bf16.mxu0 0
    %2455 = vmatpush1.bf16.msra.mxu0 0
    %2456 = vmatprep.subr.bf16.mxu0 0
    %2457 = vmatpush1.bf16.msra.mxu0 0
    %2458 = vmatprep.subr.bf16.mxu0 0
    %2459 = vmatpush1.bf16.msra.mxu0 0
    %2460 = vmatprep.subr.bf16.mxu0 0
    %2461 = vmatpush1.bf16.msra.mxu0 0
    %2462 = vmatprep.subr.bf16.mxu0 0
    %2463 = vmatpush1.bf16.msra.mxu0 0
    %2464 = vmatprep.subr.bf16.mxu0 0
    %2465 = vmatpush1.bf16.msra.mxu0 0
    %2466 = vmatprep.mubr.bf16.mxu0 0
    %2467 = vmatmul.mubr.bf16.gmra.mrb[0].mxu0 %v2362
    %v2468 = vpop.f32.mrb[0].mxu0
    %v2469 = vadd.f32 %v2385, %v2468
    %v2470 = vpop.f32.mrb[0].mxu0
    %v2471 = vpop.f32.mrb[0].mxu0
    %v2472 = vpop.f32.mrb[0].mxu0
    %2473 = vdwg.mxu0
    %vm2474 = vcmp.ge.f32.partialorder %v2469, 0.0
    %v2475 = vmul.f32 %v2469, 0.01
    %v2476 = vsel %vm2474, %v2469, %v2475
    %v2477 = vpack.c.bf16 %v2476, %v2476
    %v2478 = vld [vmem:[%s745] sm:$0xf]
    %v2479 = vld [vmem:[%s745 + $0x4] sm:$0xf]
    %v2480 = vld [vmem:[%s745 + $0x8] sm:$0xf]
    %v2481 = vld [vmem:[%s745 + $0xc] sm:$0xf]
    %v2482 = vld [vmem:[%s745 + $0x10] sm:$0xf]
    %v2483 = vld [vmem:[%s745 + $0x14] sm:$0xf]
    %v2484 = vld [vmem:[%s745 + $0x18] sm:$0xf]
    %v2485 = vld [vmem:[%s745 + $0x1c] sm:$0xf]
    %v2486 = vld [vmem:[%s745 + $0x20] sm:$0xf]
    %v2487 = vld [vmem:[%s745 + $0x24] sm:$0xf]
    %v2488 = vld [vmem:[%s745 + $0x28] sm:$0xf]
    %v2489 = vld [vmem:[%s745 + $0x2c] sm:$0xf]
    %v2490 = vld [vmem:[%s745 + $0x30] sm:$0xf]
    %v2491 = vld [vmem:[%s745 + $0x34] sm:$0xf]
    %v2492 = vld [vmem:[%s745 + $0x38] sm:$0xf]
    %v2493 = vld [vmem:[%s745 + $0x3c] sm:$0xf]
    %v2510 = vunpack.c.l.b16 %v2478
    %v2511 = vunpack.c.l.b16 %v2479
    %v2512 = vunpack.c.l.b16 %v2480
    %v2513 = vunpack.c.l.b16 %v2481
    %v2514 = vunpack.c.l.b16 %v2482
    %v2515 = vunpack.c.l.b16 %v2483
    %v2516 = vunpack.c.l.b16 %v2484
    %v2517 = vunpack.c.l.b16 %v2485
    %v2518 = vunpack.c.l.b16 %v2486
    %v2519 = vunpack.c.l.b16 %v2487
    %v2520 = vunpack.c.l.b16 %v2488
    %v2521 = vunpack.c.l.b16 %v2489
    %v2522 = vunpack.c.l.b16 %v2490
    %v2523 = vunpack.c.l.b16 %v2491
    %v2524 = vunpack.c.l.b16 %v2492
    %v2525 = vunpack.c.l.b16 %v2493
    %v2526 = vpack.c.b16 %v2511, %v2510
    %v2527 = vpack.c.b16 %v2513, %v2512
    %v2528 = vpack.c.b16 %v2515, %v2514
    %v2529 = vpack.c.b16 %v2517, %v2516
    %v2530 = vpack.c.b16 %v2519, %v2518
    %v2531 = vpack.c.b16 %v2521, %v2520
    %v2532 = vpack.c.b16 %v2523, %v2522
    %v2533 = vpack.c.b16 %v2525, %v2524
    %2542 = vmatprep.subr.bf16.mxu0 0
    %2543 = vmatpush1.bf16.msra.mxu0 %v2526
    %2544 = vmatprep.subr.bf16.mxu0 0
    %2545 = vmatpush1.bf16.msra.mxu0 %v2527
    %2546 = vmatprep.subr.bf16.mxu0 0
    %2547 = vmatpush1.bf16.msra.mxu0 %v2528
    %2548 = vmatprep.subr.bf16.mxu0 0
    %2549 = vmatpush1.bf16.msra.mxu0 %v2529
    %2550 = vmatprep.subr.bf16.mxu0 0
    %2551 = vmatpush1.bf16.msra.mxu0 %v2530
    %2552 = vmatprep.subr.bf16.mxu0 0
    %2553 = vmatpush1.bf16.msra.mxu0 %v2531
    %2554 = vmatprep.subr.bf16.mxu0 0
    %2555 = vmatpush1.bf16.msra.mxu0 %v2532
    %2556 = vmatprep.subr.bf16.mxu0 0
    %2557 = vmatpush1.bf16.msra.mxu0 %v2533
    %2558 = vmatprep.subr.bf16.mxu0 0
    %2559 = vmatpush1.bf16.msra.mxu0 0
    %2560 = vmatprep.subr.bf16.mxu0 0
    %2561 = vmatpush1.bf16.msra.mxu0 0
    %2562 = vmatprep.subr.bf16.mxu0 0
    %2563 = vmatpush1.bf16.msra.mxu0 0
    %2564 = vmatprep.subr.bf16.mxu0 0
    %2565 = vmatpush1.bf16.msra.mxu0 0
    %2566 = vmatprep.subr.bf16.mxu0 0
    %2567 = vmatpush1.bf16.msra.mxu0 0
    %2568 = vmatprep.subr.bf16.mxu0 0
    %2569 = vmatpush1.bf16.msra.mxu0 0
    %2570 = vmatprep.subr.bf16.mxu0 0
    %2571 = vmatpush1.bf16.msra.mxu0 0
    %2572 = vmatprep.subr.bf16.mxu0 0
    %2573 = vmatpush1.bf16.msra.mxu0 0
    %2574 = vmatprep.mubr.bf16.mxu0 0
    %2575 = vmatmul.mubr.bf16.gmra.mrb[0].mxu0 %v2477
    %v2576 = vpop.f32.mrb[0].mxu0
    %v2577 = vadd.f32 0.0, %v2576
    %v2578 = vpop.f32.mrb[0].mxu0
    %v2579 = vpop.f32.mrb[0].mxu0
    %v2580 = vpop.f32.mrb[0].mxu0
    %2581 = vdwg.mxu0
    %v2582 = vld [vmem:[#allocation5 + $0xa] sm:$0x1]
    %v2583 = vlaneseq
    %v2584 = vshrl.u32 %v2583, 7
    %v2585 = vsub.s32 0, %v2584
    %v2586 = vrot.slane %v2582, %v2585
    %v2587 = vmul.f32 %v2476, %v2586
    %2588 = vadd.xlane.f32.xlu0 %v2587
    %v2589 = vpop.xlane.xlu0 %2588
    %v2590 = vmax.f32 %v2012, %v2589
    %v2591 = vsub.f32 %v2012, %v2590
    %v2592 = vmul.f32 %v2591, 1.442695
    %v2593 = vpow.pop %v2592
    %v2594 = vsub.f32 %v2589, %v2590
    %v2595 = vmul.f32 %v2594, 1.442695
    %v2596 = vpow.pop %v2595
    %v2597 = vmul.f32 %v2593, %v2020
    %v2598 = vadd.f32 %v2597, %v2596
    %v2599 = vmul.f32 %v2593, %v2023
    %v2600 = vmul.f32 %v2596, %v2577
    %v2601 = vadd.f32 %v2599, %v2600
    %v2602 = vrcp.pop %v2598
    %v2603 = vmul.f32 %v2601, %v2602
    %v2604 = vld [vmem:[#allocation5 + $0x9] sm:$0x1]
    %v2605 = vlaneseq
    %v2606 = vshrl.u32 %v2605, 7
    %v2607 = vsub.s32 0, %v2606
    %v2608 = vrot.slane %v2604, %v2607
    %v2609 = vadd.f32 %v2603, %v2608
    %2610 = vst [vmem:[#allocation10] sm:$0xff] %v2609
    // Predicated region
    $region18: #{tpu_custom_call.1} parent=1 // pred_check
      _
    $region19: #{tpu_custom_call.1} parent=1 // pred_check_branch
      %2612 = sbr.rel (0) target = $region21
    $region20: #{tpu_custom_call.1} parent=1 // pred_region
      %s2614 = ssub.s32 512, 512
      %2615 = vsyncadd [#allocation4], %s2614
      %s2616 = sshll.u32 [#allocation7], 4
      %s2617 = int_to_ptr.vmem [resolvable:$true] %s2616
      %2622 = dma.vmem_to_hbm [thread:$0]  %s2617, 512, %s2, [#allocation4], 128, 128, 8
    $region21: #{tpu_custom_call.1} parent=1 // pred_fallthru
      _
    // Predicated region
    $region22: #{tpu_custom_call.1} parent=1 // pred_check
      _
    $region23: #{tpu_custom_call.1} parent=1 // pred_check_branch
      %2624 = sbr.rel (0) target = $region25
    $region24: #{tpu_custom_call.1} parent=1 // pred_region
      %s2626 = ssub.s32 1024, 1024
      %2627 = vsyncadd [#allocation9], %s2626
      %s2628 = sshll.u32 [#allocation8], 4
      %s2629 = int_to_ptr.vmem [resolvable:$true] %s2628
      %2634 = dma.vmem_to_hbm [thread:$0]  %s2629, 1024, %s3, [#allocation9], 128, 128, 8
    $region25: #{tpu_custom_call.1} parent=1 // pred_fallthru
      _
    // Predicated region
    $region26: #{tpu_custom_call.1} parent=1 // pred_check
      _
    $region27: #{tpu_custom_call.1} parent=1 // pred_check_branch
      %2636 = sbr.rel (0) target = $region29
    $region28: #{tpu_custom_call.1} parent=1 // pred_region
      %s2638 = ssub.s32 128, 128
      %2639 = vsyncadd [#allocation9], %s2638
      %s2641 = sshll.u32 [#allocation10], 4
      %s2642 = int_to_ptr.vmem [resolvable:$true] %s2641
      %2644 = dma.vmem_to_hbm [thread:$0]  %s2642, 128, %s4, [#allocation9]
    $region29: #{tpu_custom_call.1} parent=1 // pred_fallthru
      _
    // Predicated region
    $region30: #{tpu_custom_call.1} parent=1 // pred_check
      _
    $region31: #{tpu_custom_call.1} parent=1 // pred_check_branch
      %2646 = sbr.rel (0) target = $region33
    $region32: #{tpu_custom_call.1} parent=1 // pred_region
      %2647 = dma.done [#allocation4], 512
    $region33: #{tpu_custom_call.1} parent=1 // pred_fallthru
      _
    // Predicated region
    $region34: #{tpu_custom_call.1} parent=1 // pred_check
      _
    $region35: #{tpu_custom_call.1} parent=1 // pred_check_branch
      %2649 = sbr.rel (0) target = $region37
    $region36: #{tpu_custom_call.1} parent=1 // pred_region
      %2650 = dma.done [#allocation9], 1024
    $region37: #{tpu_custom_call.1} parent=1 // pred_fallthru
      _
    // Predicated region
    $region38: #{tpu_custom_call.1} parent=1 // pred_check
      _
    $region39: #{tpu_custom_call.1} parent=1 // pred_check_branch
      %2652 = sbr.rel (0) target = $region41
    $region40: #{tpu_custom_call.1} parent=1 // pred_region
      %2653 = dma.done [#allocation9], 128
    $region41: #{tpu_custom_call.1} parent=1 // pred_fallthru
      _
    %2654 = vsyncpa [#allocation3], 1
    %2655 = vsyncpa [#allocation6], 1
    %2656 = vsyncpa [#allocation4], 1
    %2657 = vsyncpa [#allocation9], 1

</llo_original>
